<compile_context>
chip_gen: v7x
topology: tpu7x:2x2x1
jax: 0.10.0
libtpu: 0.0.40
codegen_flags: <defaults>
</compile_context>

<pallas_src>
import jax
import jax.numpy as jnp
from jax import lax
from jax.experimental import pallas as pl
from jax.experimental.pallas import tpu as pltpu

N_ACTIONS = 5
N_STATES = 100 * 100   # 10000
HIDDEN = 50


def mlp_kernel(x_ref, w1_ref, b1_ref, w2_ref, b2_ref, o_ref):
    # fc1: contract x [TB, K] (cast to bf16) with W1 [H, K] (bf16) over K on the
    # MXU with f32 accumulation -> [TB, H].
    x_bf16 = x_ref[...].astype(jnp.bfloat16)
    h = lax.dot_general(
        x_bf16, w1_ref[...],
        dimension_numbers=(((1,), (1,)), ((), ())),   # x.K  contracted with  W1.K
        preferred_element_type=jnp.float32)
    h = jnp.maximum(h + b1_ref[...], 0.0)             # bias broadcast + ReLU (VPU)
    # out: [TB, H] @ [H, A] -> [TB, A] (tiny; f32 accumulate).
    y = jnp.dot(h, w2_ref[...], preferred_element_type=jnp.float32)
    o_ref[...] = (y + b2_ref[...]).astype(o_ref.dtype)


def net_forward(x, w1, b1, w2, b2, *, tile_b=64):
    """x: [B, N_STATES] f32; w1: [HIDDEN, N_STATES] bf16 (PyTorch layout);
    b1: [1, HIDDEN] f32; w2: [HIDDEN, N_ACTIONS] f32; b2: [1, N_ACTIONS] f32.
    Returns [B, N_ACTIONS] f32 Q-values."""
    B = x.shape[0]
    tb = B if B <= tile_b else tile_b
    pad = (-B) % tb
    if pad:
        x = jnp.pad(x, ((0, pad), (0, 0)))
    Bp = B + pad
    grid = (Bp // tb,)

    cost = pl.CostEstimate(
        flops=2 * Bp * N_STATES * HIDDEN + 2 * Bp * HIDDEN * N_ACTIONS,
        transcendentals=0,
        bytes_accessed=(w1.size * w1.dtype.itemsize
                        + x.size * x.dtype.itemsize
                        + Bp * N_ACTIONS * 4),
    )

    out = pl.pallas_call(
        mlp_kernel,
        out_shape=jax.ShapeDtypeStruct((Bp, N_ACTIONS), jnp.float32),
        grid_spec=pltpu.PrefetchScalarGridSpec(
            num_scalar_prefetch=0,
            grid=grid,
            in_specs=[
                pl.BlockSpec((tb, N_STATES), lambda i: (i, 0)),       # x: streamed per tile
                pl.BlockSpec((HIDDEN, N_STATES), lambda i: (0, 0)),   # W1: resident (bf16)
                pl.BlockSpec((1, HIDDEN), lambda i: (0, 0)),          # b1: resident
                pl.BlockSpec((HIDDEN, N_ACTIONS), lambda i: (0, 0)),  # W2: resident
                pl.BlockSpec((1, N_ACTIONS), lambda i: (0, 0)),       # b2: resident
            ],
            out_specs=pl.BlockSpec((tb, N_ACTIONS), lambda i: (i, 0)),
        ),
        compiler_params=pltpu.CompilerParams(
            dimension_semantics=("parallel",),        # shards over TCs on v7x
            vmem_limit_bytes=32 * 1024 * 1024,        # safe on v5e/v6e/v7x at these sizes
        ),
        cost_estimate=cost,
    )(x, w1, b1, w2, b2)

    if pad:
        out = out[:B]
    return out


def init_params(key):
    """Deterministic init mirroring the PyTorch module's shapes/layout.

    fc1.weight [50, 10000] ~ N(0, 0.1)  (kept in native [out, in] layout, bf16),
    out.weight [5, 50]     ~ N(0, 0.1)  (stored transposed [50, 5], f32),
    biases at nn.Linear default uniform(+-1/sqrt(fan_in)), f32.
    """
    k1, k2, k3, k4 = jax.random.split(key, 4)
    w1 = (0.1 * jax.random.normal(k1, (HIDDEN, N_STATES))).astype(jnp.bfloat16)
    b1 = jax.random.uniform(
        k2, (1, HIDDEN), minval=-1.0 / jnp.sqrt(N_STATES),
        maxval=1.0 / jnp.sqrt(N_STATES)).astype(jnp.float32)
    w2 = (0.1 * jax.random.normal(k3, (HIDDEN, N_ACTIONS))).astype(jnp.float32)
    b2 = jax.random.uniform(
        k4, (1, N_ACTIONS), minval=-1.0 / jnp.sqrt(HIDDEN),
        maxval=1.0 / jnp.sqrt(HIDDEN)).astype(jnp.float32)
    return w1, b1, w2, b2


if __name__ == "__main__":
    key = jax.random.PRNGKey(0)
    k_params, k_x = jax.random.split(key)

    w1, b1, w2, b2 = init_params(k_params)

    # Small batch of flattened 100x100 states.
    B = 2
    x = jax.random.normal(k_x, (B, N_STATES), dtype=jnp.float32)

    out = net_forward(x, w1, b1, w2, b2)
    out = jax.block_until_ready(out)

    # Pure-JAX reference performing the same bf16-weight / f32-accumulate math.
    ref_h = jnp.maximum(
        jnp.dot(x.astype(jnp.bfloat16), w1.T,
                preferred_element_type=jnp.float32) + b1, 0.0)
    ref = jnp.dot(ref_h, w2, preferred_element_type=jnp.float32) + b2

    assert out.shape == (B, N_ACTIONS)
    assert jnp.allclose(out, ref, atol=1e-2, rtol=1e-2)

    print("KERNEL_OK")
</pallas_src>

<mosaic_0001>
module attributes {stable_mosaic.version = 11 : i64} {
  func.func @mlp_kernel(%arg0: i32, %arg1: memref<2x10000xf32, #tpu.memory_space<vmem>>, %arg2: memref<50x10000xbf16, #tpu.memory_space<vmem>>, %arg3: memref<1x50xf32, #tpu.memory_space<vmem>>, %arg4: memref<50x5xf32, #tpu.memory_space<vmem>>, %arg5: memref<1x5xf32, #tpu.memory_space<vmem>>, %arg6: memref<2x5xf32, #tpu.memory_space<vmem>>) attributes {dimension_semantics = [#tpu.dimension_semantics<parallel>], iteration_bounds = array<i64: 1>, scalar_prefetch = 0 : i64, scratch_operands = 0 : i64, tpu.core_type = #tpu.core_type<tc>, window_params = [{transform_indices = @transform_0, window_bounds = array<i64: 2, 10000>}, {pipeline_mode = #tpu.pipeline_mode<synchronous>, transform_indices = @transform_1, window_bounds = array<i64: 50, 10000>}, {pipeline_mode = #tpu.pipeline_mode<synchronous>, transform_indices = @transform_2, window_bounds = array<i64: 1, 50>}, {pipeline_mode = #tpu.pipeline_mode<synchronous>, transform_indices = @transform_3, window_bounds = array<i64: 50, 5>}, {pipeline_mode = #tpu.pipeline_mode<synchronous>, transform_indices = @transform_4, window_bounds = array<i64: 1, 5>}, {transform_indices = @transform_5, window_bounds = array<i64: 2, 5>}]} {
    %c0 = arith.constant 0 : index
    %c0_0 = arith.constant 0 : index
    %0 = vector.load %arg1[%c0, %c0_0] : memref<2x10000xf32, #tpu.memory_space<vmem>>, vector<2x10000xf32>
    %1 = arith.truncf %0 : vector<2x10000xf32> to vector<2x10000xbf16>
    %c0_1 = arith.constant 0 : index
    %c0_2 = arith.constant 0 : index
    %2 = vector.load %arg2[%c0_1, %c0_2] : memref<50x10000xbf16, #tpu.memory_space<vmem>>, vector<50x10000xbf16>
    %cst = arith.constant dense<0.000000e+00> : vector<2x50xf32>
    %3 = tpu.matmul %1, %2, %cst {dimension_numbers = #tpu.dot_dimension_numbers<[1], [1], [0], [0], [0, 0, 1, 0], [], []>} : vector<2x10000xbf16>, vector<50x10000xbf16>, vector<2x50xf32> -> vector<2x50xf32>
    %c0_3 = arith.constant 0 : index
    %c0_4 = arith.constant 0 : index
    %4 = vector.load %arg3[%c0_3, %c0_4] : memref<1x50xf32, #tpu.memory_space<vmem>>, vector<1x50xf32>
    %5 = vector.broadcast %4 : vector<1x50xf32> to vector<2x50xf32>
    %6 = arith.addf %3, %5 : vector<2x50xf32>
    %cst_5 = arith.constant 0.000000e+00 : f32
    %7 = vector.broadcast %cst_5 : f32 to vector<2x50xf32>
    %8 = arith.maximumf %6, %7 : vector<2x50xf32>
    %c0_6 = arith.constant 0 : index
    %c0_7 = arith.constant 0 : index
    %9 = vector.load %arg4[%c0_6, %c0_7] : memref<50x5xf32, #tpu.memory_space<vmem>>, vector<50x5xf32>
    %cst_8 = arith.constant dense<0.000000e+00> : vector<2x5xf32>
    %10 = tpu.matmul %8, %9, %cst_8 {dimension_numbers = #tpu.dot_dimension_numbers<[1], [0], [0], [1], [0, 0, 1, 1], [], []>} : vector<2x50xf32>, vector<50x5xf32>, vector<2x5xf32> -> vector<2x5xf32>
    %c0_9 = arith.constant 0 : index
    %c0_10 = arith.constant 0 : index
    %11 = vector.load %arg5[%c0_9, %c0_10] : memref<1x5xf32, #tpu.memory_space<vmem>>, vector<1x5xf32>
    %12 = vector.broadcast %11 : vector<1x5xf32> to vector<2x5xf32>
    %13 = arith.addf %10, %12 : vector<2x5xf32>
    %c0_11 = arith.constant 0 : index
    %c0_12 = arith.constant 0 : index
    %14 = vector.load %arg6[%c0_11, %c0_12] : memref<2x5xf32, #tpu.memory_space<vmem>>, vector<2x5xf32>
    tpu.vector_store %arg6[%c0_11, %c0_12], %13 {strides = array<i32>} : memref<2x5xf32, #tpu.memory_space<vmem>>, vector<2x5xf32>,
    return
  }
  func.func @transform_0(%arg0: i32) -> (i32, i32) {
    %c0_i32 = arith.constant 0 : i32
    %c0_i32_0 = arith.constant 0 : i32
    return %arg0, %c0_i32 : i32, i32
  }
  func.func @transform_1(%arg0: i32) -> (i32, i32) {
    %c0_i32 = arith.constant 0 : i32
    %c0_i32_0 = arith.constant 0 : i32
    %c0_i32_1 = arith.constant 0 : i32
    return %c0_i32, %c0_i32_0 : i32, i32
  }
  func.func @transform_2(%arg0: i32) -> (i32, i32) {
    %c0_i32 = arith.constant 0 : i32
    %c0_i32_0 = arith.constant 0 : i32
    %c0_i32_1 = arith.constant 0 : i32
    return %c0_i32, %c0_i32_0 : i32, i32
  }
  func.func @transform_3(%arg0: i32) -> (i32, i32) {
    %c0_i32 = arith.constant 0 : i32
    %c0_i32_0 = arith.constant 0 : i32
    %c0_i32_1 = arith.constant 0 : i32
    return %c0_i32, %c0_i32_0 : i32, i32
  }
  func.func @transform_4(%arg0: i32) -> (i32, i32) {
    %c0_i32 = arith.constant 0 : i32
    %c0_i32_0 = arith.constant 0 : i32
    %c0_i32_1 = arith.constant 0 : i32
    return %c0_i32, %c0_i32_0 : i32, i32
  }
  func.func @transform_5(%arg0: i32) -> (i32, i32) {
    %c0_i32 = arith.constant 0 : i32
    %c0_i32_0 = arith.constant 0 : i32
    return %arg0, %c0_i32 : i32, i32
  }
}

</mosaic_0001>

<llo_original>
// kernel: tpu_custom_call.1
$region0: #{tpu_custom_call.1}
  #allocation0 [shape = 'u32[]', space=smem, size = 0x4, offset = 0x4, fixed_abs, tag = 'smem constant byte address 0x4 - core index']
  #allocation1 [shape = 'u32[144,128]{1,0:T(1,128)}', space=vmem, size = 0x12000, scoped, tag = 'internal scratch']
  %s0 = inlined_call_operand.hbm [shape: f32[2,10000], index: 0, kind: input, shape index: {}]
  %s1 = inlined_call_operand.hbm [shape: bf16[50,10000], index: 1, kind: input, shape index: {}]
  %s2 = inlined_call_operand.hbm [shape: f32[1,50], index: 2, kind: input, shape index: {}]
  %s3 = inlined_call_operand.vmem [shape: f32[50,5], index: 3, kind: input, shape index: {}]
  %s4 = inlined_call_operand.hbm [shape: f32[1,5], index: 4, kind: input, shape index: {}]
  %s5 = inlined_call_operand.hbm [shape: f32[2,5], index: 5, kind: output, shape index: {}]
  %s6 = sld [smem:[#allocation0]]
  $region46: #{tpu_custom_call.1} parent=0
    _
  %s8 = ssub.s32 1, %s6
  %s9 = scalar_select 0, %s8, %s6
  $region1: #{tpu_custom_call.1} parent=0
    #allocation2 [shape = 'u8[80896]{0}', space=vmem, size = 0x13c00, scoped, tag = 'input window, operand 0, single buffered']
    #allocation3 [shape = 's32[1]{0}', space=sflag, size = 0x4, scoped, tag = 'scoped memory for tpu_custom_call.1']
    #allocation4 [shape = 's32[1]{0}', space=sflag, size = 0x4, scoped, tag = 'scoped memory for tpu_custom_call.1']
    #allocation5 [shape = 'u8[1132544]{0}', space=vmem, size = 0x114800, scoped, tag = 'input window, operand 1, single buffered']
    #allocation6 [shape = 's32[1]{0}', space=sflag, size = 0x4, scoped, tag = 'scoped memory for tpu_custom_call.1']
    #allocation7 [shape = 'u8[512]{0}', space=vmem, size = 0x400, scoped, tag = 'input window, operand 2, single buffered']
    #allocation8 [shape = 'u8[512]{0}', space=vmem, size = 0x400, scoped, tag = 'input window, operand 4, single buffered']
    #allocation9 [shape = 's32[1]{0}', space=sflag, size = 0x4, scoped, tag = 'scoped memory for tpu_custom_call.1']
    #allocation10 [shape = 'u8[1024]{0}', space=vmem, size = 0x400, scoped, tag = 'output window, operand 0, single buffered']
    %10 = vsyncpa [#allocation3], 0
    %11 = vsyncpa [#allocation6], 0
    %12 = vsyncpa [#allocation9], 0
    %13 = vsyncpa [#allocation4], 0
    // Predicated region
    $region2: #{tpu_custom_call.1} parent=1 // pred_check
      _
    $region3: #{tpu_custom_call.1} parent=1 // pred_check_branch
      %15 = sbr.rel (0) target = $region5
    $region4: #{tpu_custom_call.1} parent=1 // pred_region
      %s17 = ssub.s32 2528, 2528
      %18 = vsyncadd [#allocation3], %s17
      %s20 = sshll.u32 [#allocation2], 4
      %s21 = int_to_ptr.vmem [resolvable:$true] %s20
      %23 = dma.hbm_to_vmem [thread:$0]  %s0, 2528, %s21, [#allocation3]
    $region5: #{tpu_custom_call.1} parent=1 // pred_fallthru
      _
    // Predicated region
    $region6: #{tpu_custom_call.1} parent=1 // pred_check
      _
    $region7: #{tpu_custom_call.1} parent=1 // pred_check_branch
      %25 = sbr.rel (0) target = $region9
    $region8: #{tpu_custom_call.1} parent=1 // pred_region
      %s27 = ssub.s32 35392, 35392
      %28 = vsyncadd [#allocation6], %s27
      %s29 = sshll.u32 [#allocation5], 4
      %s30 = int_to_ptr.vmem [resolvable:$true] %s29
      %35 = dma.hbm_to_vmem [thread:$0]  %s1, 35392, %s30, [#allocation6], 5056, 5056, 316
    $region9: #{tpu_custom_call.1} parent=1 // pred_fallthru
      _
    // Predicated region
    $region10: #{tpu_custom_call.1} parent=1 // pred_check
      _
    $region11: #{tpu_custom_call.1} parent=1 // pred_check_branch
      %37 = sbr.rel (0) target = $region13
    $region12: #{tpu_custom_call.1} parent=1 // pred_region
      %s39 = ssub.s32 16, 16
      %40 = vsyncadd [#allocation6], %s39
      %s42 = sshll.u32 [#allocation7], 4
      %s43 = int_to_ptr.vmem [resolvable:$true] %s42
      %45 = dma.hbm_to_vmem [thread:$0]  %s2, 16, %s43, [#allocation6]
    $region13: #{tpu_custom_call.1} parent=1 // pred_fallthru
      _
    // Predicated region
    $region14: #{tpu_custom_call.1} parent=1 // pred_check
      _
    $region15: #{tpu_custom_call.1} parent=1 // pred_check_branch
      %47 = sbr.rel (0) target = $region17
    $region16: #{tpu_custom_call.1} parent=1 // pred_region
      _
    $region17: #{tpu_custom_call.1} parent=1 // pred_fallthru
      _
    // Predicated region
    $region18: #{tpu_custom_call.1} parent=1 // pred_check
      _
    $region19: #{tpu_custom_call.1} parent=1 // pred_check_branch
      %49 = sbr.rel (0) target = $region21
    $region20: #{tpu_custom_call.1} parent=1 // pred_region
      %s51 = ssub.s32 16, 16
      %52 = vsyncadd [#allocation9], %s51
      %s54 = sshll.u32 [#allocation8], 4
      %s55 = int_to_ptr.vmem [resolvable:$true] %s54
      %57 = dma.hbm_to_vmem [thread:$0]  %s4, 16, %s55, [#allocation9]
    $region21: #{tpu_custom_call.1} parent=1 // pred_fallthru
      _
    // Predicated region
    $region22: #{tpu_custom_call.1} parent=1 // pred_check
      _
    $region23: #{tpu_custom_call.1} parent=1 // pred_check_branch
      %59 = sbr.rel (0) target = $region25
    $region24: #{tpu_custom_call.1} parent=1 // pred_region
      %60 = dma.done [#allocation3], 2528
    $region25: #{tpu_custom_call.1} parent=1 // pred_fallthru
      _
    // Predicated region
    $region26: #{tpu_custom_call.1} parent=1 // pred_check
      _
    $region27: #{tpu_custom_call.1} parent=1 // pred_check_branch
      %62 = sbr.rel (0) target = $region29
    $region28: #{tpu_custom_call.1} parent=1 // pred_region
      %63 = dma.done [#allocation6], 35392
    $region29: #{tpu_custom_call.1} parent=1 // pred_fallthru
      _
    // Predicated region
    $region30: #{tpu_custom_call.1} parent=1 // pred_check
      _
    $region31: #{tpu_custom_call.1} parent=1 // pred_check_branch
      %65 = sbr.rel (0) target = $region33
    $region32: #{tpu_custom_call.1} parent=1 // pred_region
      %66 = dma.done [#allocation6], 16
    $region33: #{tpu_custom_call.1} parent=1 // pred_fallthru
      _
    // Predicated region
    $region34: #{tpu_custom_call.1} parent=1 // pred_check
      _
    $region35: #{tpu_custom_call.1} parent=1 // pred_check_branch
      %68 = sbr.rel (0) target = $region37
    $region36: #{tpu_custom_call.1} parent=1 // pred_region
      %69 = dma.done [#allocation9], 16
    $region37: #{tpu_custom_call.1} parent=1 // pred_fallthru
      _
    %v71 = vld [vmem:[#allocation2] sm:$0xff]
    %v72 = vld [vmem:[#allocation2 + $0x8] sm:$0xff]
    %v73 = vld [vmem:[#allocation2 + $0x10] sm:$0xff]
    %v74 = vld [vmem:[#allocation2 + $0x18] sm:$0xff]
    %v75 = vld [vmem:[#allocation2 + $0x20] sm:$0xff]
    %v76 = vld [vmem:[#allocation2 + $0x28] sm:$0xff]
    %v77 = vld [vmem:[#allocation2 + $0x30] sm:$0xff]
    %v78 = vld [vmem:[#allocation2 + $0x38] sm:$0xff]
    %v79 = vld [vmem:[#allocation2 + $0x40] sm:$0xff]
    %v80 = vld [vmem:[#allocation2 + $0x48] sm:$0xff]
    %v81 = vld [vmem:[#allocation2 + $0x50] sm:$0xff]
    %v82 = vld [vmem:[#allocation2 + $0x58] sm:$0xff]
    %v83 = vld [vmem:[#allocation2 + $0x60] sm:$0xff]
    %v84 = vld [vmem:[#allocation2 + $0x68] sm:$0xff]
    %v85 = vld [vmem:[#allocation2 + $0x70] sm:$0xff]
    %v86 = vld [vmem:[#allocation2 + $0x78] sm:$0xff]
    %v87 = vld [vmem:[#allocation2 + $0x80] sm:$0xff]
    %v88 = vld [vmem:[#allocation2 + $0x88] sm:$0xff]
    %v89 = vld [vmem:[#allocation2 + $0x90] sm:$0xff]
    %v90 = vld [vmem:[#allocation2 + $0x98] sm:$0x3f]
    %v111 = vcombine.high %v71, %v71
    %v113 = vunpack.c.l.s4 1983009808
    %v114 = vunpack.c.0.s8 %v113
    %v115 = vlaneseq
    %v116 = vshrl.u32 %v115, 7
    %v117 = vsub.s32 %v114, %v116
    %v118 = vrot.slane %v71, %v117
    %v120 = vunpack.c.l.s4 1983009808
    %v121 = vunpack.c.0.s8 %v120
    %v122 = vlaneseq
    %v123 = vshrl.u32 %v122, 7
    %v124 = vsub.s32 %v121, %v123
    %v125 = vrot.slane %v111, %v124
    %v126 = vcombine.high %v118, %v118
    %v127 = vcombine.high %v125, %v125
    %v128 = vcombine.high %v72, %v72
    %v130 = vunpack.c.l.s4 1983009808
    %v131 = vunpack.c.0.s8 %v130
    %v132 = vlaneseq
    %v133 = vshrl.u32 %v132, 7
    %v134 = vsub.s32 %v131, %v133
    %v135 = vrot.slane %v72, %v134
    %v137 = vunpack.c.l.s4 1983009808
    %v138 = vunpack.c.0.s8 %v137
    %v139 = vlaneseq
    %v140 = vshrl.u32 %v139, 7
    %v141 = vsub.s32 %v138, %v140
    %v142 = vrot.slane %v128, %v141
    %v143 = vcombine.high %v135, %v135
    %v144 = vcombine.high %v142, %v142
    %v145 = vcombine.high %v73, %v73
    %v147 = vunpack.c.l.s4 1983009808
    %v148 = vunpack.c.0.s8 %v147
    %v149 = vlaneseq
    %v150 = vshrl.u32 %v149, 7
    %v151 = vsub.s32 %v148, %v150
    %v152 = vrot.slane %v73, %v151
    %v154 = vunpack.c.l.s4 1983009808
    %v155 = vunpack.c.0.s8 %v154
    %v156 = vlaneseq
    %v157 = vshrl.u32 %v156, 7
    %v158 = vsub.s32 %v155, %v157
    %v159 = vrot.slane %v145, %v158
    %v160 = vcombine.high %v152, %v152
    %v161 = vcombine.high %v159, %v159
    %v162 = vcombine.high %v74, %v74
    %v164 = vunpack.c.l.s4 1983009808
    %v165 = vunpack.c.0.s8 %v164
    %v166 = vlaneseq
    %v167 = vshrl.u32 %v166, 7
    %v168 = vsub.s32 %v165, %v167
    %v169 = vrot.slane %v74, %v168
    %v171 = vunpack.c.l.s4 1983009808
    %v172 = vunpack.c.0.s8 %v171
    %v173 = vlaneseq
    %v174 = vshrl.u32 %v173, 7
    %v175 = vsub.s32 %v172, %v174
    %v176 = vrot.slane %v162, %v175
    %v177 = vcombine.high %v169, %v169
    %v178 = vcombine.high %v176, %v176
    %v179 = vcombine.high %v75, %v75
    %v181 = vunpack.c.l.s4 1983009808
    %v182 = vunpack.c.0.s8 %v181
    %v183 = vlaneseq
    %v184 = vshrl.u32 %v183, 7
    %v185 = vsub.s32 %v182, %v184
    %v186 = vrot.slane %v75, %v185
    %v188 = vunpack.c.l.s4 1983009808
    %v189 = vunpack.c.0.s8 %v188
    %v190 = vlaneseq
    %v191 = vshrl.u32 %v190, 7
    %v192 = vsub.s32 %v189, %v191
    %v193 = vrot.slane %v179, %v192
    %v194 = vcombine.high %v186, %v186
    %v195 = vcombine.high %v193, %v193
    %v196 = vcombine.high %v76, %v76
    %v198 = vunpack.c.l.s4 1983009808
    %v199 = vunpack.c.0.s8 %v198
    %v200 = vlaneseq
    %v201 = vshrl.u32 %v200, 7
    %v202 = vsub.s32 %v199, %v201
    %v203 = vrot.slane %v76, %v202
    %v205 = vunpack.c.l.s4 1983009808
    %v206 = vunpack.c.0.s8 %v205
    %v207 = vlaneseq
    %v208 = vshrl.u32 %v207, 7
    %v209 = vsub.s32 %v206, %v208
    %v210 = vrot.slane %v196, %v209
    %v211 = vcombine.high %v203, %v203
    %v212 = vcombine.high %v210, %v210
    %v213 = vcombine.high %v77, %v77
    %v215 = vunpack.c.l.s4 1983009808
    %v216 = vunpack.c.0.s8 %v215
    %v217 = vlaneseq
    %v218 = vshrl.u32 %v217, 7
    %v219 = vsub.s32 %v216, %v218
    %v220 = vrot.slane %v77, %v219
    %v222 = vunpack.c.l.s4 1983009808
    %v223 = vunpack.c.0.s8 %v222
    %v224 = vlaneseq
    %v225 = vshrl.u32 %v224, 7
    %v226 = vsub.s32 %v223, %v225
    %v227 = vrot.slane %v213, %v226
    %v228 = vcombine.high %v220, %v220
    %v229 = vcombine.high %v227, %v227
    %v230 = vcombine.high %v78, %v78
    %v232 = vunpack.c.l.s4 1983009808
    %v233 = vunpack.c.0.s8 %v232
    %v234 = vlaneseq
    %v235 = vshrl.u32 %v234, 7
    %v236 = vsub.s32 %v233, %v235
    %v237 = vrot.slane %v78, %v236
    %v239 = vunpack.c.l.s4 1983009808
    %v240 = vunpack.c.0.s8 %v239
    %v241 = vlaneseq
    %v242 = vshrl.u32 %v241, 7
    %v243 = vsub.s32 %v240, %v242
    %v244 = vrot.slane %v230, %v243
    %v245 = vcombine.high %v237, %v237
    %v246 = vcombine.high %v244, %v244
    %v247 = vcombine.high %v79, %v79
    %v249 = vunpack.c.l.s4 1983009808
    %v250 = vunpack.c.0.s8 %v249
    %v251 = vlaneseq
    %v252 = vshrl.u32 %v251, 7
    %v253 = vsub.s32 %v250, %v252
    %v254 = vrot.slane %v79, %v253
    %v256 = vunpack.c.l.s4 1983009808
    %v257 = vunpack.c.0.s8 %v256
    %v258 = vlaneseq
    %v259 = vshrl.u32 %v258, 7
    %v260 = vsub.s32 %v257, %v259
    %v261 = vrot.slane %v247, %v260
    %v262 = vcombine.high %v254, %v254
    %v263 = vcombine.high %v261, %v261
    %v264 = vcombine.high %v80, %v80
    %v266 = vunpack.c.l.s4 1983009808
    %v267 = vunpack.c.0.s8 %v266
    %v268 = vlaneseq
    %v269 = vshrl.u32 %v268, 7
    %v270 = vsub.s32 %v267, %v269
    %v271 = vrot.slane %v80, %v270
    %v273 = vunpack.c.l.s4 1983009808
    %v274 = vunpack.c.0.s8 %v273
    %v275 = vlaneseq
    %v276 = vshrl.u32 %v275, 7
    %v277 = vsub.s32 %v274, %v276
    %v278 = vrot.slane %v264, %v277
    %v279 = vcombine.high %v271, %v271
    %v280 = vcombine.high %v278, %v278
    %v281 = vcombine.high %v81, %v81
    %v283 = vunpack.c.l.s4 1983009808
    %v284 = vunpack.c.0.s8 %v283
    %v285 = vlaneseq
    %v286 = vshrl.u32 %v285, 7
    %v287 = vsub.s32 %v284, %v286
    %v288 = vrot.slane %v81, %v287
    %v290 = vunpack.c.l.s4 1983009808
    %v291 = vunpack.c.0.s8 %v290
    %v292 = vlaneseq
    %v293 = vshrl.u32 %v292, 7
    %v294 = vsub.s32 %v291, %v293
    %v295 = vrot.slane %v281, %v294
    %v296 = vcombine.high %v288, %v288
    %v297 = vcombine.high %v295, %v295
    %v298 = vcombine.high %v82, %v82
    %v300 = vunpack.c.l.s4 1983009808
    %v301 = vunpack.c.0.s8 %v300
    %v302 = vlaneseq
    %v303 = vshrl.u32 %v302, 7
    %v304 = vsub.s32 %v301, %v303
    %v305 = vrot.slane %v82, %v304
    %v307 = vunpack.c.l.s4 1983009808
    %v308 = vunpack.c.0.s8 %v307
    %v309 = vlaneseq
    %v310 = vshrl.u32 %v309, 7
    %v311 = vsub.s32 %v308, %v310
    %v312 = vrot.slane %v298, %v311
    %v313 = vcombine.high %v305, %v305
    %v314 = vcombine.high %v312, %v312
    %v315 = vcombine.high %v83, %v83
    %v317 = vunpack.c.l.s4 1983009808
    %v318 = vunpack.c.0.s8 %v317
    %v319 = vlaneseq
    %v320 = vshrl.u32 %v319, 7
    %v321 = vsub.s32 %v318, %v320
    %v322 = vrot.slane %v83, %v321
    %v324 = vunpack.c.l.s4 1983009808
    %v325 = vunpack.c.0.s8 %v324
    %v326 = vlaneseq
    %v327 = vshrl.u32 %v326, 7
    %v328 = vsub.s32 %v325, %v327
    %v329 = vrot.slane %v315, %v328
    %v330 = vcombine.high %v322, %v322
    %v331 = vcombine.high %v329, %v329
    %v332 = vcombine.high %v84, %v84
    %v334 = vunpack.c.l.s4 1983009808
    %v335 = vunpack.c.0.s8 %v334
    %v336 = vlaneseq
    %v337 = vshrl.u32 %v336, 7
    %v338 = vsub.s32 %v335, %v337
    %v339 = vrot.slane %v84, %v338
    %v341 = vunpack.c.l.s4 1983009808
    %v342 = vunpack.c.0.s8 %v341
    %v343 = vlaneseq
    %v344 = vshrl.u32 %v343, 7
    %v345 = vsub.s32 %v342, %v344
    %v346 = vrot.slane %v332, %v345
    %v347 = vcombine.high %v339, %v339
    %v348 = vcombine.high %v346, %v346
    %v349 = vcombine.high %v85, %v85
    %v351 = vunpack.c.l.s4 1983009808
    %v352 = vunpack.c.0.s8 %v351
    %v353 = vlaneseq
    %v354 = vshrl.u32 %v353, 7
    %v355 = vsub.s32 %v352, %v354
    %v356 = vrot.slane %v85, %v355
    %v358 = vunpack.c.l.s4 1983009808
    %v359 = vunpack.c.0.s8 %v358
    %v360 = vlaneseq
    %v361 = vshrl.u32 %v360, 7
    %v362 = vsub.s32 %v359, %v361
    %v363 = vrot.slane %v349, %v362
    %v364 = vcombine.high %v356, %v356
    %v365 = vcombine.high %v363, %v363
    %v366 = vcombine.high %v86, %v86
    %v368 = vunpack.c.l.s4 1983009808
    %v369 = vunpack.c.0.s8 %v368
    %v370 = vlaneseq
    %v371 = vshrl.u32 %v370, 7
    %v372 = vsub.s32 %v369, %v371
    %v373 = vrot.slane %v86, %v372
    %v375 = vunpack.c.l.s4 1983009808
    %v376 = vunpack.c.0.s8 %v375
    %v377 = vlaneseq
    %v378 = vshrl.u32 %v377, 7
    %v379 = vsub.s32 %v376, %v378
    %v380 = vrot.slane %v366, %v379
    %v381 = vcombine.high %v373, %v373
    %v382 = vcombine.high %v380, %v380
    %v383 = vcombine.high %v87, %v87
    %v385 = vunpack.c.l.s4 1983009808
    %v386 = vunpack.c.0.s8 %v385
    %v387 = vlaneseq
    %v388 = vshrl.u32 %v387, 7
    %v389 = vsub.s32 %v386, %v388
    %v390 = vrot.slane %v87, %v389
    %v392 = vunpack.c.l.s4 1983009808
    %v393 = vunpack.c.0.s8 %v392
    %v394 = vlaneseq
    %v395 = vshrl.u32 %v394, 7
    %v396 = vsub.s32 %v393, %v395
    %v397 = vrot.slane %v383, %v396
    %v398 = vcombine.high %v390, %v390
    %v399 = vcombine.high %v397, %v397
    %v400 = vcombine.high %v88, %v88
    %v402 = vunpack.c.l.s4 1983009808
    %v403 = vunpack.c.0.s8 %v402
    %v404 = vlaneseq
    %v405 = vshrl.u32 %v404, 7
    %v406 = vsub.s32 %v403, %v405
    %v407 = vrot.slane %v88, %v406
    %v409 = vunpack.c.l.s4 1983009808
    %v410 = vunpack.c.0.s8 %v409
    %v411 = vlaneseq
    %v412 = vshrl.u32 %v411, 7
    %v413 = vsub.s32 %v410, %v412
    %v414 = vrot.slane %v400, %v413
    %v415 = vcombine.high %v407, %v407
    %v416 = vcombine.high %v414, %v414
    %v417 = vcombine.high %v89, %v89
    %v419 = vunpack.c.l.s4 1983009808
    %v420 = vunpack.c.0.s8 %v419
    %v421 = vlaneseq
    %v422 = vshrl.u32 %v421, 7
    %v423 = vsub.s32 %v420, %v422
    %v424 = vrot.slane %v89, %v423
    %v426 = vunpack.c.l.s4 1983009808
    %v427 = vunpack.c.0.s8 %v426
    %v428 = vlaneseq
    %v429 = vshrl.u32 %v428, 7
    %v430 = vsub.s32 %v427, %v429
    %v431 = vrot.slane %v417, %v430
    %v432 = vcombine.high %v424, %v424
    %v433 = vcombine.high %v431, %v431
    %v434 = vcombine.high %v90, %v90
    %v436 = vunpack.c.l.s4 1983009808
    %v437 = vunpack.c.0.s8 %v436
    %v438 = vlaneseq
    %v439 = vshrl.u32 %v438, 7
    %v440 = vsub.s32 %v437, %v439
    %v441 = vrot.slane %v90, %v440
    %v443 = vunpack.c.l.s4 1983009808
    %v444 = vunpack.c.0.s8 %v443
    %v445 = vlaneseq
    %v446 = vshrl.u32 %v445, 7
    %v447 = vsub.s32 %v444, %v446
    %v448 = vrot.slane %v434, %v447
    %v449 = vcombine.high %v441, %v441
    %v529 = vpack.c.bf16 %v118, %v118
    %v530 = vpack.c.bf16 %v126, %v126
    %v531 = vpack.c.bf16 %v125, %v125
    %v532 = vpack.c.bf16 %v127, %v127
    %v533 = vpack.c.bf16 %v135, %v135
    %v534 = vpack.c.bf16 %v143, %v143
    %v535 = vpack.c.bf16 %v142, %v142
    %v536 = vpack.c.bf16 %v144, %v144
    %v537 = vpack.c.bf16 %v152, %v152
    %v538 = vpack.c.bf16 %v160, %v160
    %v539 = vpack.c.bf16 %v159, %v159
    %v540 = vpack.c.bf16 %v161, %v161
    %v541 = vpack.c.bf16 %v169, %v169
    %v542 = vpack.c.bf16 %v177, %v177
    %v543 = vpack.c.bf16 %v176, %v176
    %v544 = vpack.c.bf16 %v178, %v178
    %v545 = vpack.c.bf16 %v186, %v186
    %v546 = vpack.c.bf16 %v194, %v194
    %v547 = vpack.c.bf16 %v193, %v193
    %v548 = vpack.c.bf16 %v195, %v195
    %v549 = vpack.c.bf16 %v203, %v203
    %v550 = vpack.c.bf16 %v211, %v211
    %v551 = vpack.c.bf16 %v210, %v210
    %v552 = vpack.c.bf16 %v212, %v212
    %v553 = vpack.c.bf16 %v220, %v220
    %v554 = vpack.c.bf16 %v228, %v228
    %v555 = vpack.c.bf16 %v227, %v227
    %v556 = vpack.c.bf16 %v229, %v229
    %v557 = vpack.c.bf16 %v237, %v237
    %v558 = vpack.c.bf16 %v245, %v245
    %v559 = vpack.c.bf16 %v244, %v244
    %v560 = vpack.c.bf16 %v246, %v246
    %v561 = vpack.c.bf16 %v254, %v254
    %v562 = vpack.c.bf16 %v262, %v262
    %v563 = vpack.c.bf16 %v261, %v261
    %v564 = vpack.c.bf16 %v263, %v263
    %v565 = vpack.c.bf16 %v271, %v271
    %v566 = vpack.c.bf16 %v279, %v279
    %v567 = vpack.c.bf16 %v278, %v278
    %v568 = vpack.c.bf16 %v280, %v280
    %v569 = vpack.c.bf16 %v288, %v288
    %v570 = vpack.c.bf16 %v296, %v296
    %v571 = vpack.c.bf16 %v295, %v295
    %v572 = vpack.c.bf16 %v297, %v297
    %v573 = vpack.c.bf16 %v305, %v305
    %v574 = vpack.c.bf16 %v313, %v313
    %v575 = vpack.c.bf16 %v312, %v312
    %v576 = vpack.c.bf16 %v314, %v314
    %v577 = vpack.c.bf16 %v322, %v322
    %v578 = vpack.c.bf16 %v330, %v330
    %v579 = vpack.c.bf16 %v329, %v329
    %v580 = vpack.c.bf16 %v331, %v331
    %v581 = vpack.c.bf16 %v339, %v339
    %v582 = vpack.c.bf16 %v347, %v347
    %v583 = vpack.c.bf16 %v346, %v346
    %v584 = vpack.c.bf16 %v348, %v348
    %v585 = vpack.c.bf16 %v356, %v356
    %v586 = vpack.c.bf16 %v364, %v364
    %v587 = vpack.c.bf16 %v363, %v363
    %v588 = vpack.c.bf16 %v365, %v365
    %v589 = vpack.c.bf16 %v373, %v373
    %v590 = vpack.c.bf16 %v381, %v381
    %v591 = vpack.c.bf16 %v380, %v380
    %v592 = vpack.c.bf16 %v382, %v382
    %v593 = vpack.c.bf16 %v390, %v390
    %v594 = vpack.c.bf16 %v398, %v398
    %v595 = vpack.c.bf16 %v397, %v397
    %v596 = vpack.c.bf16 %v399, %v399
    %v597 = vpack.c.bf16 %v407, %v407
    %v598 = vpack.c.bf16 %v415, %v415
    %v599 = vpack.c.bf16 %v414, %v414
    %v600 = vpack.c.bf16 %v416, %v416
    %v601 = vpack.c.bf16 %v424, %v424
    %v602 = vpack.c.bf16 %v432, %v432
    %v603 = vpack.c.bf16 %v431, %v431
    %v604 = vpack.c.bf16 %v433, %v433
    %v605 = vpack.c.bf16 %v441, %v441
    %v606 = vpack.c.bf16 %v449, %v449
    %v607 = vpack.c.bf16 %v448, %v448
    %v608 = vld [vmem:[#allocation5] sm:$0xff]
    %v609 = vld [vmem:[#allocation5 + $0x8] sm:$0xff]
    %v610 = vld [vmem:[#allocation5 + $0x10] sm:$0xff]
    %v611 = vld [vmem:[#allocation5 + $0x18] sm:$0xff]
    %v612 = vld [vmem:[#allocation5 + $0x20] sm:$0xff]
    %v613 = vld [vmem:[#allocation5 + $0x28] sm:$0xff]
    %v614 = vld [vmem:[#allocation5 + $0x30] sm:$0xff]
    %v615 = vld [vmem:[#allocation5 + $0x38] sm:$0xff]
    %v616 = vld [vmem:[#allocation5 + $0x40] sm:$0xff]
    %v617 = vld [vmem:[#allocation5 + $0x48] sm:$0xff]
    %v618 = vld [vmem:[#allocation5 + $0x50] sm:$0xff]
    %v619 = vld [vmem:[#allocation5 + $0x58] sm:$0xff]
    %v620 = vld [vmem:[#allocation5 + $0x60] sm:$0xff]
    %v621 = vld [vmem:[#allocation5 + $0x68] sm:$0xff]
    %v622 = vld [vmem:[#allocation5 + $0x70] sm:$0xff]
    %v623 = vld [vmem:[#allocation5 + $0x78] sm:$0xff]
    %v624 = vld [vmem:[#allocation5 + $0x80] sm:$0xff]
    %v625 = vld [vmem:[#allocation5 + $0x88] sm:$0xff]
    %v626 = vld [vmem:[#allocation5 + $0x90] sm:$0xff]
    %v627 = vld [vmem:[#allocation5 + $0x98] sm:$0xff]
    %v628 = vld [vmem:[#allocation5 + $0xa0] sm:$0xff]
    %v629 = vld [vmem:[#allocation5 + $0xa8] sm:$0xff]
    %v630 = vld [vmem:[#allocation5 + $0xb0] sm:$0xff]
    %v631 = vld [vmem:[#allocation5 + $0xb8] sm:$0xff]
    %v632 = vld [vmem:[#allocation5 + $0xc0] sm:$0xff]
    %v633 = vld [vmem:[#allocation5 + $0xc8] sm:$0xff]
    %v634 = vld [vmem:[#allocation5 + $0xd0] sm:$0xff]
    %v635 = vld [vmem:[#allocation5 + $0xd8] sm:$0xff]
    %v636 = vld [vmem:[#allocation5 + $0xe0] sm:$0xff]
    %v637 = vld [vmem:[#allocation5 + $0xe8] sm:$0xff]
    %v638 = vld [vmem:[#allocation5 + $0xf0] sm:$0xff]
    %v639 = vld [vmem:[#allocation5 + $0xf8] sm:$0xff]
    %v640 = vld [vmem:[#allocation5 + $0x100] sm:$0xff]
    %v641 = vld [vmem:[#allocation5 + $0x108] sm:$0xff]
    %v642 = vld [vmem:[#allocation5 + $0x110] sm:$0xff]
    %v643 = vld [vmem:[#allocation5 + $0x118] sm:$0xff]
    %v644 = vld [vmem:[#allocation5 + $0x120] sm:$0xff]
    %v645 = vld [vmem:[#allocation5 + $0x128] sm:$0xff]
    %v646 = vld [vmem:[#allocation5 + $0x130] sm:$0xff]
    %v647 = vld [vmem:[#allocation5 + $0x138] sm:$0xf]
    %v648 = vld [vmem:[#allocation5 + $0x13c] sm:$0xff]
    %v649 = vld [vmem:[#allocation5 + $0x144] sm:$0xff]
    %v650 = vld [vmem:[#allocation5 + $0x14c] sm:$0xff]
    %v651 = vld [vmem:[#allocation5 + $0x154] sm:$0xff]
    %v652 = vld [vmem:[#allocation5 + $0x15c] sm:$0xff]
    %v653 = vld [vmem:[#allocation5 + $0x164] sm:$0xff]
    %v654 = vld [vmem:[#allocation5 + $0x16c] sm:$0xff]
    %v655 = vld [vmem:[#allocation5 + $0x174] sm:$0xff]
    %v656 = vld [vmem:[#allocation5 + $0x17c] sm:$0xff]
    %v657 = vld [vmem:[#allocation5 + $0x184] sm:$0xff]
    %v658 = vld [vmem:[#allocation5 + $0x18c] sm:$0xff]
    %v659 = vld [vmem:[#allocation5 + $0x194] sm:$0xff]
    %v660 = vld [vmem:[#allocation5 + $0x19c] sm:$0xff]
    %v661 = vld [vmem:[#allocation5 + $0x1a4] sm:$0xff]
    %v662 = vld [vmem:[#allocation5 + $0x1ac] sm:$0xff]
    %v663 = vld [vmem:[#allocation5 + $0x1b4] sm:$0xff]
    %v664 = vld [vmem:[#allocation5 + $0x1bc] sm:$0xff]
    %v665 = vld [vmem:[#allocation5 + $0x1c4] sm:$0xff]
    %v666 = vld [vmem:[#allocation5 + $0x1cc] sm:$0xff]
    %v667 = vld [vmem:[#allocation5 + $0x1d4] sm:$0xff]
    %v668 = vld [vmem:[#allocation5 + $0x1dc] sm:$0xff]
    %v669 = vld [vmem:[#allocation5 + $0x1e4] sm:$0xff]
    %v670 = vld [vmem:[#allocation5 + $0x1ec] sm:$0xff]
    %v671 = vld [vmem:[#allocation5 + $0x1f4] sm:$0xff]
    %v672 = vld [vmem:[#allocation5 + $0x1fc] sm:$0xff]
    %v673 = vld [vmem:[#allocation5 + $0x204] sm:$0xff]
    %v674 = vld [vmem:[#allocation5 + $0x20c] sm:$0xff]
    %v675 = vld [vmem:[#allocation5 + $0x214] sm:$0xff]
    %v676 = vld [vmem:[#allocation5 + $0x21c] sm:$0xff]
    %v677 = vld [vmem:[#allocation5 + $0x224] sm:$0xff]
    %v678 = vld [vmem:[#allocation5 + $0x22c] sm:$0xff]
    %v679 = vld [vmem:[#allocation5 + $0x234] sm:$0xff]
    %v680 = vld [vmem:[#allocation5 + $0x23c] sm:$0xff]
    %v681 = vld [vmem:[#allocation5 + $0x244] sm:$0xff]
    %v682 = vld [vmem:[#allocation5 + $0x24c] sm:$0xff]
    %v683 = vld [vmem:[#allocation5 + $0x254] sm:$0xff]
    %v684 = vld [vmem:[#allocation5 + $0x25c] sm:$0xff]
    %v685 = vld [vmem:[#allocation5 + $0x264] sm:$0xff]
    %v686 = vld [vmem:[#allocation5 + $0x26c] sm:$0xff]
    %v687 = vld [vmem:[#allocation5 + $0x274] sm:$0xf]
    %v688 = vld [vmem:[#allocation5 + $0x278] sm:$0xff]
    %v689 = vld [vmem:[#allocation5 + $0x280] sm:$0xff]
    %v690 = vld [vmem:[#allocation5 + $0x288] sm:$0xff]
    %v691 = vld [vmem:[#allocation5 + $0x290] sm:$0xff]
    %v692 = vld [vmem:[#allocation5 + $0x298] sm:$0xff]
    %v693 = vld [vmem:[#allocation5 + $0x2a0] sm:$0xff]
    %v694 = vld [vmem:[#allocation5 + $0x2a8] sm:$0xff]
    %v695 = vld [vmem:[#allocation5 + $0x2b0] sm:$0xff]
    %v696 = vld [vmem:[#allocation5 + $0x2b8] sm:$0xff]
    %v697 = vld [vmem:[#allocation5 + $0x2c0] sm:$0xff]
    %v698 = vld [vmem:[#allocation5 + $0x2c8] sm:$0xff]
    %v699 = vld [vmem:[#allocation5 + $0x2d0] sm:$0xff]
    %v700 = vld [vmem:[#allocation5 + $0x2d8] sm:$0xff]
    %v701 = vld [vmem:[#allocation5 + $0x2e0] sm:$0xff]
    %v702 = vld [vmem:[#allocation5 + $0x2e8] sm:$0xff]
    %v703 = vld [vmem:[#allocation5 + $0x2f0] sm:$0xff]
    %v704 = vld [vmem:[#allocation5 + $0x2f8] sm:$0xff]
    %v705 = vld [vmem:[#allocation5 + $0x300] sm:$0xff]
    %v706 = vld [vmem:[#allocation5 + $0x308] sm:$0xff]
    %v707 = vld [vmem:[#allocation5 + $0x310] sm:$0xff]
    %v708 = vld [vmem:[#allocation5 + $0x318] sm:$0xff]
    %v709 = vld [vmem:[#allocation5 + $0x320] sm:$0xff]
    %v710 = vld [vmem:[#allocation5 + $0x328] sm:$0xff]
    %v711 = vld [vmem:[#allocation5 + $0x330] sm:$0xff]
    %v712 = vld [vmem:[#allocation5 + $0x338] sm:$0xff]
    %v713 = vld [vmem:[#allocation5 + $0x340] sm:$0xff]
    %v714 = vld [vmem:[#allocation5 + $0x348] sm:$0xff]
    %v715 = vld [vmem:[#allocation5 + $0x350] sm:$0xff]
    %v716 = vld [vmem:[#allocation5 + $0x358] sm:$0xff]
    %v717 = vld [vmem:[#allocation5 + $0x360] sm:$0xff]
    %v718 = vld [vmem:[#allocation5 + $0x368] sm:$0xff]
    %v719 = vld [vmem:[#allocation5 + $0x370] sm:$0xff]
    %v720 = vld [vmem:[#allocation5 + $0x378] sm:$0xff]
    %v721 = vld [vmem:[#allocation5 + $0x380] sm:$0xff]
    %v722 = vld [vmem:[#allocation5 + $0x388] sm:$0xff]
    %v723 = vld [vmem:[#allocation5 + $0x390] sm:$0xff]
    %v724 = vld [vmem:[#allocation5 + $0x398] sm:$0xff]
    %v725 = vld [vmem:[#allocation5 + $0x3a0] sm:$0xff]
    %v726 = vld [vmem:[#allocation5 + $0x3a8] sm:$0xff]
    %v727 = vld [vmem:[#allocation5 + $0x3b0] sm:$0xf]
    %v728 = vld [vmem:[#allocation5 + $0x3b4] sm:$0xff]
    %v729 = vld [vmem:[#allocation5 + $0x3bc] sm:$0xff]
    %v730 = vld [vmem:[#allocation5 + $0x3c4] sm:$0xff]
    %v731 = vld [vmem:[#allocation5 + $0x3cc] sm:$0xff]
    %v732 = vld [vmem:[#allocation5 + $0x3d4] sm:$0xff]
    %v733 = vld [vmem:[#allocation5 + $0x3dc] sm:$0xff]
    %v734 = vld [vmem:[#allocation5 + $0x3e4] sm:$0xff]
    %v735 = vld [vmem:[#allocation5 + $0x3ec] sm:$0xff]
    %v736 = vld [vmem:[#allocation5 + $0x3f4] sm:$0xff]
    %v737 = vld [vmem:[#allocation5 + $0x3fc] sm:$0xff]
    %v738 = vld [vmem:[#allocation5 + $0x404] sm:$0xff]
    %v739 = vld [vmem:[#allocation5 + $0x40c] sm:$0xff]
    %v740 = vld [vmem:[#allocation5 + $0x414] sm:$0xff]
    %v741 = vld [vmem:[#allocation5 + $0x41c] sm:$0xff]
    %v742 = vld [vmem:[#allocation5 + $0x424] sm:$0xff]
    %v743 = vld [vmem:[#allocation5 + $0x42c] sm:$0xff]
    %v744 = vld [vmem:[#allocation5 + $0x434] sm:$0xff]
    %v745 = vld [vmem:[#allocation5 + $0x43c] sm:$0xff]
    %v746 = vld [vmem:[#allocation5 + $0x444] sm:$0xff]
    %v747 = vld [vmem:[#allocation5 + $0x44c] sm:$0xff]
    %v748 = vld [vmem:[#allocation5 + $0x454] sm:$0xff]
    %v749 = vld [vmem:[#allocation5 + $0x45c] sm:$0xff]
    %v750 = vld [vmem:[#allocation5 + $0x464] sm:$0xff]
    %v751 = vld [vmem:[#allocation5 + $0x46c] sm:$0xff]
    %v752 = vld [vmem:[#allocation5 + $0x474] sm:$0xff]
    %v753 = vld [vmem:[#allocation5 + $0x47c] sm:$0xff]
    %v754 = vld [vmem:[#allocation5 + $0x484] sm:$0xff]
    %v755 = vld [vmem:[#allocation5 + $0x48c] sm:$0xff]
    %v756 = vld [vmem:[#allocation5 + $0x494] sm:$0xff]
    %v757 = vld [vmem:[#allocation5 + $0x49c] sm:$0xff]
    %v758 = vld [vmem:[#allocation5 + $0x4a4] sm:$0xff]
    %v759 = vld [vmem:[#allocation5 + $0x4ac] sm:$0xff]
    %v760 = vld [vmem:[#allocation5 + $0x4b4] sm:$0xff]
    %v761 = vld [vmem:[#allocation5 + $0x4bc] sm:$0xff]
    %v762 = vld [vmem:[#allocation5 + $0x4c4] sm:$0xff]
    %v763 = vld [vmem:[#allocation5 + $0x4cc] sm:$0xff]
    %v764 = vld [vmem:[#allocation5 + $0x4d4] sm:$0xff]
    %v765 = vld [vmem:[#allocation5 + $0x4dc] sm:$0xff]
    %v766 = vld [vmem:[#allocation5 + $0x4e4] sm:$0xff]
    %v767 = vld [vmem:[#allocation5 + $0x4ec] sm:$0xf]
    %v768 = vld [vmem:[#allocation5 + $0x4f0] sm:$0xff]
    %v769 = vld [vmem:[#allocation5 + $0x4f8] sm:$0xff]
    %v770 = vld [vmem:[#allocation5 + $0x500] sm:$0xff]
    %v771 = vld [vmem:[#allocation5 + $0x508] sm:$0xff]
    %v772 = vld [vmem:[#allocation5 + $0x510] sm:$0xff]
    %v773 = vld [vmem:[#allocation5 + $0x518] sm:$0xff]
    %v774 = vld [vmem:[#allocation5 + $0x520] sm:$0xff]
    %v775 = vld [vmem:[#allocation5 + $0x528] sm:$0xff]
    %v776 = vld [vmem:[#allocation5 + $0x530] sm:$0xff]
    %v777 = vld [vmem:[#allocation5 + $0x538] sm:$0xff]
    %v778 = vld [vmem:[#allocation5 + $0x540] sm:$0xff]
    %v779 = vld [vmem:[#allocation5 + $0x548] sm:$0xff]
    %v780 = vld [vmem:[#allocation5 + $0x550] sm:$0xff]
    %v781 = vld [vmem:[#allocation5 + $0x558] sm:$0xff]
    %v782 = vld [vmem:[#allocation5 + $0x560] sm:$0xff]
    %v783 = vld [vmem:[#allocation5 + $0x568] sm:$0xff]
    %v784 = vld [vmem:[#allocation5 + $0x570] sm:$0xff]
    %v785 = vld [vmem:[#allocation5 + $0x578] sm:$0xff]
    %v786 = vld [vmem:[#allocation5 + $0x580] sm:$0xff]
    %v787 = vld [vmem:[#allocation5 + $0x588] sm:$0xff]
    %v788 = vld [vmem:[#allocation5 + $0x590] sm:$0xff]
    %v789 = vld [vmem:[#allocation5 + $0x598] sm:$0xff]
    %v790 = vld [vmem:[#allocation5 + $0x5a0] sm:$0xff]
    %v791 = vld [vmem:[#allocation5 + $0x5a8] sm:$0xff]
    %v792 = vld [vmem:[#allocation5 + $0x5b0] sm:$0xff]
    %v793 = vld [vmem:[#allocation5 + $0x5b8] sm:$0xff]
    %v794 = vld [vmem:[#allocation5 + $0x5c0] sm:$0xff]
    %v795 = vld [vmem:[#allocation5 + $0x5c8] sm:$0xff]
    %v796 = vld [vmem:[#allocation5 + $0x5d0] sm:$0xff]
    %v797 = vld [vmem:[#allocation5 + $0x5d8] sm:$0xff]
    %v798 = vld [vmem:[#allocation5 + $0x5e0] sm:$0xff]
    %v799 = vld [vmem:[#allocation5 + $0x5e8] sm:$0xff]
    %v800 = vld [vmem:[#allocation5 + $0x5f0] sm:$0xff]
    %v801 = vld [vmem:[#allocation5 + $0x5f8] sm:$0xff]
    %v802 = vld [vmem:[#allocation5 + $0x600] sm:$0xff]
    %v803 = vld [vmem:[#allocation5 + $0x608] sm:$0xff]
    %v804 = vld [vmem:[#allocation5 + $0x610] sm:$0xff]
    %v805 = vld [vmem:[#allocation5 + $0x618] sm:$0xff]
    %v806 = vld [vmem:[#allocation5 + $0x620] sm:$0xff]
    %v807 = vld [vmem:[#allocation5 + $0x628] sm:$0xf]
    %v808 = vld [vmem:[#allocation5 + $0x62c] sm:$0xff]
    %v809 = vld [vmem:[#allocation5 + $0x634] sm:$0xff]
    %v810 = vld [vmem:[#allocation5 + $0x63c] sm:$0xff]
    %v811 = vld [vmem:[#allocation5 + $0x644] sm:$0xff]
    %v812 = vld [vmem:[#allocation5 + $0x64c] sm:$0xff]
    %v813 = vld [vmem:[#allocation5 + $0x654] sm:$0xff]
    %v814 = vld [vmem:[#allocation5 + $0x65c] sm:$0xff]
    %v815 = vld [vmem:[#allocation5 + $0x664] sm:$0xff]
    %v816 = vld [vmem:[#allocation5 + $0x66c] sm:$0xff]
    %v817 = vld [vmem:[#allocation5 + $0x674] sm:$0xff]
    %v818 = vld [vmem:[#allocation5 + $0x67c] sm:$0xff]
    %v819 = vld [vmem:[#allocation5 + $0x684] sm:$0xff]
    %v820 = vld [vmem:[#allocation5 + $0x68c] sm:$0xff]
    %v821 = vld [vmem:[#allocation5 + $0x694] sm:$0xff]
    %v822 = vld [vmem:[#allocation5 + $0x69c] sm:$0xff]
    %v823 = vld [vmem:[#allocation5 + $0x6a4] sm:$0xff]
    %v824 = vld [vmem:[#allocation5 + $0x6ac] sm:$0xff]
    %v825 = vld [vmem:[#allocation5 + $0x6b4] sm:$0xff]
    %v826 = vld [vmem:[#allocation5 + $0x6bc] sm:$0xff]
    %v827 = vld [vmem:[#allocation5 + $0x6c4] sm:$0xff]
    %v828 = vld [vmem:[#allocation5 + $0x6cc] sm:$0xff]
    %v829 = vld [vmem:[#allocation5 + $0x6d4] sm:$0xff]
    %v830 = vld [vmem:[#allocation5 + $0x6dc] sm:$0xff]
    %v831 = vld [vmem:[#allocation5 + $0x6e4] sm:$0xff]
    %v832 = vld [vmem:[#allocation5 + $0x6ec] sm:$0xff]
    %v833 = vld [vmem:[#allocation5 + $0x6f4] sm:$0xff]
    %v834 = vld [vmem:[#allocation5 + $0x6fc] sm:$0xff]
    %v835 = vld [vmem:[#allocation5 + $0x704] sm:$0xff]
    %v836 = vld [vmem:[#allocation5 + $0x70c] sm:$0xff]
    %v837 = vld [vmem:[#allocation5 + $0x714] sm:$0xff]
    %v838 = vld [vmem:[#allocation5 + $0x71c] sm:$0xff]
    %v839 = vld [vmem:[#allocation5 + $0x724] sm:$0xff]
    %v840 = vld [vmem:[#allocation5 + $0x72c] sm:$0xff]
    %v841 = vld [vmem:[#allocation5 + $0x734] sm:$0xff]
    %v842 = vld [vmem:[#allocation5 + $0x73c] sm:$0xff]
    %v843 = vld [vmem:[#allocation5 + $0x744] sm:$0xff]
    %v844 = vld [vmem:[#allocation5 + $0x74c] sm:$0xff]
    %v845 = vld [vmem:[#allocation5 + $0x754] sm:$0xff]
    %v846 = vld [vmem:[#allocation5 + $0x75c] sm:$0xff]
    %v847 = vld [vmem:[#allocation5 + $0x764] sm:$0xf]
    %v848 = vld [vmem:[#allocation5 + $0x768] sm:$0x11]
    %v849 = vld [vmem:[#allocation5 + $0x770] sm:$0x11]
    %v850 = vld [vmem:[#allocation5 + $0x778] sm:$0x11]
    %v851 = vld [vmem:[#allocation5 + $0x780] sm:$0x11]
    %v852 = vld [vmem:[#allocation5 + $0x788] sm:$0x11]
    %v853 = vld [vmem:[#allocation5 + $0x790] sm:$0x11]
    %v854 = vld [vmem:[#allocation5 + $0x798] sm:$0x11]
    %v855 = vld [vmem:[#allocation5 + $0x7a0] sm:$0x11]
    %v856 = vld [vmem:[#allocation5 + $0x7a8] sm:$0x11]
    %v857 = vld [vmem:[#allocation5 + $0x7b0] sm:$0x11]
    %v858 = vld [vmem:[#allocation5 + $0x7b8] sm:$0x11]
    %v859 = vld [vmem:[#allocation5 + $0x7c0] sm:$0x11]
    %v860 = vld [vmem:[#allocation5 + $0x7c8] sm:$0x11]
    %v861 = vld [vmem:[#allocation5 + $0x7d0] sm:$0x11]
    %v862 = vld [vmem:[#allocation5 + $0x7d8] sm:$0x11]
    %v863 = vld [vmem:[#allocation5 + $0x7e0] sm:$0x11]
    %v864 = vld [vmem:[#allocation5 + $0x7e8] sm:$0x11]
    %v865 = vld [vmem:[#allocation5 + $0x7f0] sm:$0x11]
    %v866 = vld [vmem:[#allocation5 + $0x7f8] sm:$0x11]
    %v867 = vld [vmem:[#allocation5 + $0x800] sm:$0x11]
    %v868 = vld [vmem:[#allocation5 + $0x808] sm:$0x11]
    %v869 = vld [vmem:[#allocation5 + $0x810] sm:$0x11]
    %v870 = vld [vmem:[#allocation5 + $0x818] sm:$0x11]
    %v871 = vld [vmem:[#allocation5 + $0x820] sm:$0x11]
    %v872 = vld [vmem:[#allocation5 + $0x828] sm:$0x11]
    %v873 = vld [vmem:[#allocation5 + $0x830] sm:$0x11]
    %v874 = vld [vmem:[#allocation5 + $0x838] sm:$0x11]
    %v875 = vld [vmem:[#allocation5 + $0x840] sm:$0x11]
    %v876 = vld [vmem:[#allocation5 + $0x848] sm:$0x11]
    %v877 = vld [vmem:[#allocation5 + $0x850] sm:$0x11]
    %v878 = vld [vmem:[#allocation5 + $0x858] sm:$0x11]
    %v879 = vld [vmem:[#allocation5 + $0x860] sm:$0x11]
    %v880 = vld [vmem:[#allocation5 + $0x868] sm:$0x11]
    %v881 = vld [vmem:[#allocation5 + $0x870] sm:$0x11]
    %v882 = vld [vmem:[#allocation5 + $0x878] sm:$0x11]
    %v883 = vld [vmem:[#allocation5 + $0x880] sm:$0x11]
    %v884 = vld [vmem:[#allocation5 + $0x888] sm:$0x11]
    %v885 = vld [vmem:[#allocation5 + $0x890] sm:$0x11]
    %v886 = vld [vmem:[#allocation5 + $0x898] sm:$0x11]
    %v887 = vld [vmem:[#allocation5 + $0x8a0] sm:$0x1]
    %v888 = vld [vmem:[#allocation7] sm:$0x1]
    %v890 = vlaneseq
    %v891 = vshrl.u32 %v890, 7
    %v892 = vsub.s32 0, %v891
    %v893 = vrot.slane %v888, %v892
    %v1175 = vunpack.c.l.b16 %v608
    %v1176 = vunpack.c.h.b16 %v608
    %v1177 = vunpack.c.l.b16 %v609
    %v1178 = vunpack.c.h.b16 %v609
    %v1179 = vunpack.c.l.b16 %v610
    %v1180 = vunpack.c.h.b16 %v610
    %v1181 = vunpack.c.l.b16 %v611
    %v1182 = vunpack.c.h.b16 %v611
    %v1183 = vunpack.c.l.b16 %v612
    %v1184 = vunpack.c.h.b16 %v612
    %v1185 = vunpack.c.l.b16 %v613
    %v1186 = vunpack.c.h.b16 %v613
    %v1187 = vunpack.c.l.b16 %v614
    %v1188 = vunpack.c.h.b16 %v614
    %v1189 = vunpack.c.l.b16 %v615
    %v1190 = vunpack.c.h.b16 %v615
    %v1191 = vunpack.c.l.b16 %v616
    %v1192 = vunpack.c.h.b16 %v616
    %v1193 = vunpack.c.l.b16 %v617
    %v1194 = vunpack.c.h.b16 %v617
    %v1195 = vunpack.c.l.b16 %v618
    %v1196 = vunpack.c.h.b16 %v618
    %v1197 = vunpack.c.l.b16 %v619
    %v1198 = vunpack.c.h.b16 %v619
    %v1199 = vunpack.c.l.b16 %v620
    %v1200 = vunpack.c.h.b16 %v620
    %v1201 = vunpack.c.l.b16 %v621
    %v1202 = vunpack.c.h.b16 %v621
    %v1203 = vunpack.c.l.b16 %v622
    %v1204 = vunpack.c.h.b16 %v622
    %v1205 = vunpack.c.l.b16 %v623
    %v1206 = vunpack.c.h.b16 %v623
    %v1207 = vunpack.c.l.b16 %v624
    %v1208 = vunpack.c.h.b16 %v624
    %v1209 = vunpack.c.l.b16 %v625
    %v1210 = vunpack.c.h.b16 %v625
    %v1211 = vunpack.c.l.b16 %v626
    %v1212 = vunpack.c.h.b16 %v626
    %v1213 = vunpack.c.l.b16 %v627
    %v1214 = vunpack.c.h.b16 %v627
    %v1215 = vunpack.c.l.b16 %v628
    %v1216 = vunpack.c.h.b16 %v628
    %v1217 = vunpack.c.l.b16 %v629
    %v1218 = vunpack.c.h.b16 %v629
    %v1219 = vunpack.c.l.b16 %v630
    %v1220 = vunpack.c.h.b16 %v630
    %v1221 = vunpack.c.l.b16 %v631
    %v1222 = vunpack.c.h.b16 %v631
    %v1223 = vunpack.c.l.b16 %v632
    %v1224 = vunpack.c.h.b16 %v632
    %v1225 = vunpack.c.l.b16 %v633
    %v1226 = vunpack.c.h.b16 %v633
    %v1227 = vunpack.c.l.b16 %v634
    %v1228 = vunpack.c.h.b16 %v634
    %v1229 = vunpack.c.l.b16 %v635
    %v1230 = vunpack.c.h.b16 %v635
    %v1231 = vunpack.c.l.b16 %v636
    %v1232 = vunpack.c.h.b16 %v636
    %v1233 = vunpack.c.l.b16 %v637
    %v1234 = vunpack.c.h.b16 %v637
    %v1235 = vunpack.c.l.b16 %v638
    %v1236 = vunpack.c.h.b16 %v638
    %v1237 = vunpack.c.l.b16 %v639
    %v1238 = vunpack.c.h.b16 %v639
    %v1239 = vunpack.c.l.b16 %v640
    %v1240 = vunpack.c.h.b16 %v640
    %v1241 = vunpack.c.l.b16 %v641
    %v1242 = vunpack.c.h.b16 %v641
    %v1243 = vunpack.c.l.b16 %v642
    %v1244 = vunpack.c.h.b16 %v642
    %v1245 = vunpack.c.l.b16 %v643
    %v1246 = vunpack.c.h.b16 %v643
    %v1247 = vunpack.c.l.b16 %v644
    %v1248 = vunpack.c.h.b16 %v644
    %v1249 = vunpack.c.l.b16 %v645
    %v1250 = vunpack.c.h.b16 %v645
    %v1251 = vunpack.c.l.b16 %v646
    %v1252 = vunpack.c.h.b16 %v646
    %v1253 = vunpack.c.l.b16 %v647
    %v1254 = vunpack.c.l.b16 %v648
    %v1255 = vunpack.c.h.b16 %v648
    %v1256 = vunpack.c.l.b16 %v649
    %v1257 = vunpack.c.h.b16 %v649
    %v1258 = vunpack.c.l.b16 %v650
    %v1259 = vunpack.c.h.b16 %v650
    %v1260 = vunpack.c.l.b16 %v651
    %v1261 = vunpack.c.h.b16 %v651
    %v1262 = vunpack.c.l.b16 %v652
    %v1263 = vunpack.c.h.b16 %v652
    %v1264 = vunpack.c.l.b16 %v653
    %v1265 = vunpack.c.h.b16 %v653
    %v1266 = vunpack.c.l.b16 %v654
    %v1267 = vunpack.c.h.b16 %v654
    %v1268 = vunpack.c.l.b16 %v655
    %v1269 = vunpack.c.h.b16 %v655
    %v1270 = vunpack.c.l.b16 %v656
    %v1271 = vunpack.c.h.b16 %v656
    %v1272 = vunpack.c.l.b16 %v657
    %v1273 = vunpack.c.h.b16 %v657
    %v1274 = vunpack.c.l.b16 %v658
    %v1275 = vunpack.c.h.b16 %v658
    %v1276 = vunpack.c.l.b16 %v659
    %v1277 = vunpack.c.h.b16 %v659
    %v1278 = vunpack.c.l.b16 %v660
    %v1279 = vunpack.c.h.b16 %v660
    %v1280 = vunpack.c.l.b16 %v661
    %v1281 = vunpack.c.h.b16 %v661
    %v1282 = vunpack.c.l.b16 %v662
    %v1283 = vunpack.c.h.b16 %v662
    %v1284 = vunpack.c.l.b16 %v663
    %v1285 = vunpack.c.h.b16 %v663
    %v1286 = vunpack.c.l.b16 %v664
    %v1287 = vunpack.c.h.b16 %v664
    %v1288 = vunpack.c.l.b16 %v665
    %v1289 = vunpack.c.h.b16 %v665
    %v1290 = vunpack.c.l.b16 %v666
    %v1291 = vunpack.c.h.b16 %v666
    %v1292 = vunpack.c.l.b16 %v667
    %v1293 = vunpack.c.h.b16 %v667
    %v1294 = vunpack.c.l.b16 %v668
    %v1295 = vunpack.c.h.b16 %v668
    %v1296 = vunpack.c.l.b16 %v669
    %v1297 = vunpack.c.h.b16 %v669
    %v1298 = vunpack.c.l.b16 %v670
    %v1299 = vunpack.c.h.b16 %v670
    %v1300 = vunpack.c.l.b16 %v671
    %v1301 = vunpack.c.h.b16 %v671
    %v1302 = vunpack.c.l.b16 %v672
    %v1303 = vunpack.c.h.b16 %v672
    %v1304 = vunpack.c.l.b16 %v673
    %v1305 = vunpack.c.h.b16 %v673
    %v1306 = vunpack.c.l.b16 %v674
    %v1307 = vunpack.c.h.b16 %v674
    %v1308 = vunpack.c.l.b16 %v675
    %v1309 = vunpack.c.h.b16 %v675
    %v1310 = vunpack.c.l.b16 %v676
    %v1311 = vunpack.c.h.b16 %v676
    %v1312 = vunpack.c.l.b16 %v677
    %v1313 = vunpack.c.h.b16 %v677
    %v1314 = vunpack.c.l.b16 %v678
    %v1315 = vunpack.c.h.b16 %v678
    %v1316 = vunpack.c.l.b16 %v679
    %v1317 = vunpack.c.h.b16 %v679
    %v1318 = vunpack.c.l.b16 %v680
    %v1319 = vunpack.c.h.b16 %v680
    %v1320 = vunpack.c.l.b16 %v681
    %v1321 = vunpack.c.h.b16 %v681
    %v1322 = vunpack.c.l.b16 %v682
    %v1323 = vunpack.c.h.b16 %v682
    %v1324 = vunpack.c.l.b16 %v683
    %v1325 = vunpack.c.h.b16 %v683
    %v1326 = vunpack.c.l.b16 %v684
    %v1327 = vunpack.c.h.b16 %v684
    %v1328 = vunpack.c.l.b16 %v685
    %v1329 = vunpack.c.h.b16 %v685
    %v1330 = vunpack.c.l.b16 %v686
    %v1331 = vunpack.c.h.b16 %v686
    %v1332 = vunpack.c.l.b16 %v687
    %v1333 = vunpack.c.l.b16 %v688
    %v1334 = vunpack.c.h.b16 %v688
    %v1335 = vunpack.c.l.b16 %v689
    %v1336 = vunpack.c.h.b16 %v689
    %v1337 = vunpack.c.l.b16 %v690
    %v1338 = vunpack.c.h.b16 %v690
    %v1339 = vunpack.c.l.b16 %v691
    %v1340 = vunpack.c.h.b16 %v691
    %v1341 = vunpack.c.l.b16 %v692
    %v1342 = vunpack.c.h.b16 %v692
    %v1343 = vunpack.c.l.b16 %v693
    %v1344 = vunpack.c.h.b16 %v693
    %v1345 = vunpack.c.l.b16 %v694
    %v1346 = vunpack.c.h.b16 %v694
    %v1347 = vunpack.c.l.b16 %v695
    %v1348 = vunpack.c.h.b16 %v695
    %v1349 = vunpack.c.l.b16 %v696
    %v1350 = vunpack.c.h.b16 %v696
    %v1351 = vunpack.c.l.b16 %v697
    %v1352 = vunpack.c.h.b16 %v697
    %v1353 = vunpack.c.l.b16 %v698
    %v1354 = vunpack.c.h.b16 %v698
    %v1355 = vunpack.c.l.b16 %v699
    %v1356 = vunpack.c.h.b16 %v699
    %v1357 = vunpack.c.l.b16 %v700
    %v1358 = vunpack.c.h.b16 %v700
    %v1359 = vunpack.c.l.b16 %v701
    %v1360 = vunpack.c.h.b16 %v701
    %v1361 = vunpack.c.l.b16 %v702
    %v1362 = vunpack.c.h.b16 %v702
    %v1363 = vunpack.c.l.b16 %v703
    %v1364 = vunpack.c.h.b16 %v703
    %v1365 = vunpack.c.l.b16 %v704
    %v1366 = vunpack.c.h.b16 %v704
    %v1367 = vunpack.c.l.b16 %v705
    %v1368 = vunpack.c.h.b16 %v705
    %v1369 = vunpack.c.l.b16 %v706
    %v1370 = vunpack.c.h.b16 %v706
    %v1371 = vunpack.c.l.b16 %v707
    %v1372 = vunpack.c.h.b16 %v707
    %v1373 = vunpack.c.l.b16 %v708
    %v1374 = vunpack.c.h.b16 %v708
    %v1375 = vunpack.c.l.b16 %v709
    %v1376 = vunpack.c.h.b16 %v709
    %v1377 = vunpack.c.l.b16 %v710
    %v1378 = vunpack.c.h.b16 %v710
    %v1379 = vunpack.c.l.b16 %v711
    %v1380 = vunpack.c.h.b16 %v711
    %v1381 = vunpack.c.l.b16 %v712
    %v1382 = vunpack.c.h.b16 %v712
    %v1383 = vunpack.c.l.b16 %v713
    %v1384 = vunpack.c.h.b16 %v713
    %v1385 = vunpack.c.l.b16 %v714
    %v1386 = vunpack.c.h.b16 %v714
    %v1387 = vunpack.c.l.b16 %v715
    %v1388 = vunpack.c.h.b16 %v715
    %v1389 = vunpack.c.l.b16 %v716
    %v1390 = vunpack.c.h.b16 %v716
    %v1391 = vunpack.c.l.b16 %v717
    %v1392 = vunpack.c.h.b16 %v717
    %v1393 = vunpack.c.l.b16 %v718
    %v1394 = vunpack.c.h.b16 %v718
    %v1395 = vunpack.c.l.b16 %v719
    %v1396 = vunpack.c.h.b16 %v719
    %v1397 = vunpack.c.l.b16 %v720
    %v1398 = vunpack.c.h.b16 %v720
    %v1399 = vunpack.c.l.b16 %v721
    %v1400 = vunpack.c.h.b16 %v721
    %v1401 = vunpack.c.l.b16 %v722
    %v1402 = vunpack.c.h.b16 %v722
    %v1403 = vunpack.c.l.b16 %v723
    %v1404 = vunpack.c.h.b16 %v723
    %v1405 = vunpack.c.l.b16 %v724
    %v1406 = vunpack.c.h.b16 %v724
    %v1407 = vunpack.c.l.b16 %v725
    %v1408 = vunpack.c.h.b16 %v725
    %v1409 = vunpack.c.l.b16 %v726
    %v1410 = vunpack.c.h.b16 %v726
    %v1411 = vunpack.c.l.b16 %v727
    %v1412 = vunpack.c.l.b16 %v728
    %v1413 = vunpack.c.h.b16 %v728
    %v1414 = vunpack.c.l.b16 %v729
    %v1415 = vunpack.c.h.b16 %v729
    %v1416 = vunpack.c.l.b16 %v730
    %v1417 = vunpack.c.h.b16 %v730
    %v1418 = vunpack.c.l.b16 %v731
    %v1419 = vunpack.c.h.b16 %v731
    %v1420 = vunpack.c.l.b16 %v732
    %v1421 = vunpack.c.h.b16 %v732
    %v1422 = vunpack.c.l.b16 %v733
    %v1423 = vunpack.c.h.b16 %v733
    %v1424 = vunpack.c.l.b16 %v734
    %v1425 = vunpack.c.h.b16 %v734
    %v1426 = vunpack.c.l.b16 %v735
    %v1427 = vunpack.c.h.b16 %v735
    %v1428 = vunpack.c.l.b16 %v736
    %v1429 = vunpack.c.h.b16 %v736
    %v1430 = vunpack.c.l.b16 %v737
    %v1431 = vunpack.c.h.b16 %v737
    %v1432 = vunpack.c.l.b16 %v738
    %v1433 = vunpack.c.h.b16 %v738
    %v1434 = vunpack.c.l.b16 %v739
    %v1435 = vunpack.c.h.b16 %v739
    %v1436 = vunpack.c.l.b16 %v740
    %v1437 = vunpack.c.h.b16 %v740
    %v1438 = vunpack.c.l.b16 %v741
    %v1439 = vunpack.c.h.b16 %v741
    %v1440 = vunpack.c.l.b16 %v742
    %v1441 = vunpack.c.h.b16 %v742
    %v1442 = vunpack.c.l.b16 %v743
    %v1443 = vunpack.c.h.b16 %v743
    %v1444 = vunpack.c.l.b16 %v744
    %v1445 = vunpack.c.h.b16 %v744
    %v1446 = vunpack.c.l.b16 %v745
    %v1447 = vunpack.c.h.b16 %v745
    %v1448 = vunpack.c.l.b16 %v746
    %v1449 = vunpack.c.h.b16 %v746
    %v1450 = vunpack.c.l.b16 %v747
    %v1451 = vunpack.c.h.b16 %v747
    %v1452 = vunpack.c.l.b16 %v748
    %v1453 = vunpack.c.h.b16 %v748
    %v1454 = vunpack.c.l.b16 %v749
    %v1455 = vunpack.c.h.b16 %v749
    %v1456 = vunpack.c.l.b16 %v750
    %v1457 = vunpack.c.h.b16 %v750
    %v1458 = vunpack.c.l.b16 %v751
    %v1459 = vunpack.c.h.b16 %v751
    %v1460 = vunpack.c.l.b16 %v752
    %v1461 = vunpack.c.h.b16 %v752
    %v1462 = vunpack.c.l.b16 %v753
    %v1463 = vunpack.c.h.b16 %v753
    %v1464 = vunpack.c.l.b16 %v754
    %v1465 = vunpack.c.h.b16 %v754
    %v1466 = vunpack.c.l.b16 %v755
    %v1467 = vunpack.c.h.b16 %v755
    %v1468 = vunpack.c.l.b16 %v756
    %v1469 = vunpack.c.h.b16 %v756
    %v1470 = vunpack.c.l.b16 %v757
    %v1471 = vunpack.c.h.b16 %v757
    %v1472 = vunpack.c.l.b16 %v758
    %v1473 = vunpack.c.h.b16 %v758
    %v1474 = vunpack.c.l.b16 %v759
    %v1475 = vunpack.c.h.b16 %v759
    %v1476 = vunpack.c.l.b16 %v760
    %v1477 = vunpack.c.h.b16 %v760
    %v1478 = vunpack.c.l.b16 %v761
    %v1479 = vunpack.c.h.b16 %v761
    %v1480 = vunpack.c.l.b16 %v762
    %v1481 = vunpack.c.h.b16 %v762
    %v1482 = vunpack.c.l.b16 %v763
    %v1483 = vunpack.c.h.b16 %v763
    %v1484 = vunpack.c.l.b16 %v764
    %v1485 = vunpack.c.h.b16 %v764
    %v1486 = vunpack.c.l.b16 %v765
    %v1487 = vunpack.c.h.b16 %v765
    %v1488 = vunpack.c.l.b16 %v766
    %v1489 = vunpack.c.h.b16 %v766
    %v1490 = vunpack.c.l.b16 %v767
    %v1491 = vunpack.c.l.b16 %v768
    %v1492 = vunpack.c.h.b16 %v768
    %v1493 = vunpack.c.l.b16 %v769
    %v1494 = vunpack.c.h.b16 %v769
    %v1495 = vunpack.c.l.b16 %v770
    %v1496 = vunpack.c.h.b16 %v770
    %v1497 = vunpack.c.l.b16 %v771
    %v1498 = vunpack.c.h.b16 %v771
    %v1499 = vunpack.c.l.b16 %v772
    %v1500 = vunpack.c.h.b16 %v772
    %v1501 = vunpack.c.l.b16 %v773
    %v1502 = vunpack.c.h.b16 %v773
    %v1503 = vunpack.c.l.b16 %v774
    %v1504 = vunpack.c.h.b16 %v774
    %v1505 = vunpack.c.l.b16 %v775
    %v1506 = vunpack.c.h.b16 %v775
    %v1507 = vunpack.c.l.b16 %v776
    %v1508 = vunpack.c.h.b16 %v776
    %v1509 = vunpack.c.l.b16 %v777
    %v1510 = vunpack.c.h.b16 %v777
    %v1511 = vunpack.c.l.b16 %v778
    %v1512 = vunpack.c.h.b16 %v778
    %v1513 = vunpack.c.l.b16 %v779
    %v1514 = vunpack.c.h.b16 %v779
    %v1515 = vunpack.c.l.b16 %v780
    %v1516 = vunpack.c.h.b16 %v780
    %v1517 = vunpack.c.l.b16 %v781
    %v1518 = vunpack.c.h.b16 %v781
    %v1519 = vunpack.c.l.b16 %v782
    %v1520 = vunpack.c.h.b16 %v782
    %v1521 = vunpack.c.l.b16 %v783
    %v1522 = vunpack.c.h.b16 %v783
    %v1523 = vunpack.c.l.b16 %v784
    %v1524 = vunpack.c.h.b16 %v784
    %v1525 = vunpack.c.l.b16 %v785
    %v1526 = vunpack.c.h.b16 %v785
    %v1527 = vunpack.c.l.b16 %v786
    %v1528 = vunpack.c.h.b16 %v786
    %v1529 = vunpack.c.l.b16 %v787
    %v1530 = vunpack.c.h.b16 %v787
    %v1531 = vunpack.c.l.b16 %v788
    %v1532 = vunpack.c.h.b16 %v788
    %v1533 = vunpack.c.l.b16 %v789
    %v1534 = vunpack.c.h.b16 %v789
    %v1535 = vunpack.c.l.b16 %v790
    %v1536 = vunpack.c.h.b16 %v790
    %v1537 = vunpack.c.l.b16 %v791
    %v1538 = vunpack.c.h.b16 %v791
    %v1539 = vunpack.c.l.b16 %v792
    %v1540 = vunpack.c.h.b16 %v792
    %v1541 = vunpack.c.l.b16 %v793
    %v1542 = vunpack.c.h.b16 %v793
    %v1543 = vunpack.c.l.b16 %v794
    %v1544 = vunpack.c.h.b16 %v794
    %v1545 = vunpack.c.l.b16 %v795
    %v1546 = vunpack.c.h.b16 %v795
    %v1547 = vunpack.c.l.b16 %v796
    %v1548 = vunpack.c.h.b16 %v796
    %v1549 = vunpack.c.l.b16 %v797
    %v1550 = vunpack.c.h.b16 %v797
    %v1551 = vunpack.c.l.b16 %v798
    %v1552 = vunpack.c.h.b16 %v798
    %v1553 = vunpack.c.l.b16 %v799
    %v1554 = vunpack.c.h.b16 %v799
    %v1555 = vunpack.c.l.b16 %v800
    %v1556 = vunpack.c.h.b16 %v800
    %v1557 = vunpack.c.l.b16 %v801
    %v1558 = vunpack.c.h.b16 %v801
    %v1559 = vunpack.c.l.b16 %v802
    %v1560 = vunpack.c.h.b16 %v802
    %v1561 = vunpack.c.l.b16 %v803
    %v1562 = vunpack.c.h.b16 %v803
    %v1563 = vunpack.c.l.b16 %v804
    %v1564 = vunpack.c.h.b16 %v804
    %v1565 = vunpack.c.l.b16 %v805
    %v1566 = vunpack.c.h.b16 %v805
    %v1567 = vunpack.c.l.b16 %v806
    %v1568 = vunpack.c.h.b16 %v806
    %v1569 = vunpack.c.l.b16 %v807
    %v1570 = vunpack.c.l.b16 %v808
    %v1571 = vunpack.c.h.b16 %v808
    %v1572 = vunpack.c.l.b16 %v809
    %v1573 = vunpack.c.h.b16 %v809
    %v1574 = vunpack.c.l.b16 %v810
    %v1575 = vunpack.c.h.b16 %v810
    %v1576 = vunpack.c.l.b16 %v811
    %v1577 = vunpack.c.h.b16 %v811
    %v1578 = vunpack.c.l.b16 %v812
    %v1579 = vunpack.c.h.b16 %v812
    %v1580 = vunpack.c.l.b16 %v813
    %v1581 = vunpack.c.h.b16 %v813
    %v1582 = vunpack.c.l.b16 %v814
    %v1583 = vunpack.c.h.b16 %v814
    %v1584 = vunpack.c.l.b16 %v815
    %v1585 = vunpack.c.h.b16 %v815
    %v1586 = vunpack.c.l.b16 %v816
    %v1587 = vunpack.c.h.b16 %v816
    %v1588 = vunpack.c.l.b16 %v817
    %v1589 = vunpack.c.h.b16 %v817
    %v1590 = vunpack.c.l.b16 %v818
    %v1591 = vunpack.c.h.b16 %v818
    %v1592 = vunpack.c.l.b16 %v819
    %v1593 = vunpack.c.h.b16 %v819
    %v1594 = vunpack.c.l.b16 %v820
    %v1595 = vunpack.c.h.b16 %v820
    %v1596 = vunpack.c.l.b16 %v821
    %v1597 = vunpack.c.h.b16 %v821
    %v1598 = vunpack.c.l.b16 %v822
    %v1599 = vunpack.c.h.b16 %v822
    %v1600 = vunpack.c.l.b16 %v823
    %v1601 = vunpack.c.h.b16 %v823
    %v1602 = vunpack.c.l.b16 %v824
    %v1603 = vunpack.c.h.b16 %v824
    %v1604 = vunpack.c.l.b16 %v825
    %v1605 = vunpack.c.h.b16 %v825
    %v1606 = vunpack.c.l.b16 %v826
    %v1607 = vunpack.c.h.b16 %v826
    %v1608 = vunpack.c.l.b16 %v827
    %v1609 = vunpack.c.h.b16 %v827
    %v1610 = vunpack.c.l.b16 %v828
    %v1611 = vunpack.c.h.b16 %v828
    %v1612 = vunpack.c.l.b16 %v829
    %v1613 = vunpack.c.h.b16 %v829
    %v1614 = vunpack.c.l.b16 %v830
    %v1615 = vunpack.c.h.b16 %v830
    %v1616 = vunpack.c.l.b16 %v831
    %v1617 = vunpack.c.h.b16 %v831
    %v1618 = vunpack.c.l.b16 %v832
    %v1619 = vunpack.c.h.b16 %v832
    %v1620 = vunpack.c.l.b16 %v833
    %v1621 = vunpack.c.h.b16 %v833
    %v1622 = vunpack.c.l.b16 %v834
    %v1623 = vunpack.c.h.b16 %v834
    %v1624 = vunpack.c.l.b16 %v835
    %v1625 = vunpack.c.h.b16 %v835
    %v1626 = vunpack.c.l.b16 %v836
    %v1627 = vunpack.c.h.b16 %v836
    %v1628 = vunpack.c.l.b16 %v837
    %v1629 = vunpack.c.h.b16 %v837
    %v1630 = vunpack.c.l.b16 %v838
    %v1631 = vunpack.c.h.b16 %v838
    %v1632 = vunpack.c.l.b16 %v839
    %v1633 = vunpack.c.h.b16 %v839
    %v1634 = vunpack.c.l.b16 %v840
    %v1635 = vunpack.c.h.b16 %v840
    %v1636 = vunpack.c.l.b16 %v841
    %v1637 = vunpack.c.h.b16 %v841
    %v1638 = vunpack.c.l.b16 %v842
    %v1639 = vunpack.c.h.b16 %v842
    %v1640 = vunpack.c.l.b16 %v843
    %v1641 = vunpack.c.h.b16 %v843
    %v1642 = vunpack.c.l.b16 %v844
    %v1643 = vunpack.c.h.b16 %v844
    %v1644 = vunpack.c.l.b16 %v845
    %v1645 = vunpack.c.h.b16 %v845
    %v1646 = vunpack.c.l.b16 %v846
    %v1647 = vunpack.c.h.b16 %v846
    %v1648 = vunpack.c.l.b16 %v847
    %v1649 = vunpack.c.l.b16 %v848
    %v1650 = vunpack.c.h.b16 %v848
    %v1651 = vunpack.c.l.b16 %v849
    %v1652 = vunpack.c.h.b16 %v849
    %v1653 = vunpack.c.l.b16 %v850
    %v1654 = vunpack.c.h.b16 %v850
    %v1655 = vunpack.c.l.b16 %v851
    %v1656 = vunpack.c.h.b16 %v851
    %v1657 = vunpack.c.l.b16 %v852
    %v1658 = vunpack.c.h.b16 %v852
    %v1659 = vunpack.c.l.b16 %v853
    %v1660 = vunpack.c.h.b16 %v853
    %v1661 = vunpack.c.l.b16 %v854
    %v1662 = vunpack.c.h.b16 %v854
    %v1663 = vunpack.c.l.b16 %v855
    %v1664 = vunpack.c.h.b16 %v855
    %v1665 = vunpack.c.l.b16 %v856
    %v1666 = vunpack.c.h.b16 %v856
    %v1667 = vunpack.c.l.b16 %v857
    %v1668 = vunpack.c.h.b16 %v857
    %v1669 = vunpack.c.l.b16 %v858
    %v1670 = vunpack.c.h.b16 %v858
    %v1671 = vunpack.c.l.b16 %v859
    %v1672 = vunpack.c.h.b16 %v859
    %v1673 = vunpack.c.l.b16 %v860
    %v1674 = vunpack.c.h.b16 %v860
    %v1675 = vunpack.c.l.b16 %v861
    %v1676 = vunpack.c.h.b16 %v861
    %v1677 = vunpack.c.l.b16 %v862
    %v1678 = vunpack.c.h.b16 %v862
    %v1679 = vunpack.c.l.b16 %v863
    %v1680 = vunpack.c.h.b16 %v863
    %v1681 = vunpack.c.l.b16 %v864
    %v1682 = vunpack.c.h.b16 %v864
    %v1683 = vunpack.c.l.b16 %v865
    %v1684 = vunpack.c.h.b16 %v865
    %v1685 = vunpack.c.l.b16 %v866
    %v1686 = vunpack.c.h.b16 %v866
    %v1687 = vunpack.c.l.b16 %v867
    %v1688 = vunpack.c.h.b16 %v867
    %v1689 = vunpack.c.l.b16 %v868
    %v1690 = vunpack.c.h.b16 %v868
    %v1691 = vunpack.c.l.b16 %v869
    %v1692 = vunpack.c.h.b16 %v869
    %v1693 = vunpack.c.l.b16 %v870
    %v1694 = vunpack.c.h.b16 %v870
    %v1695 = vunpack.c.l.b16 %v871
    %v1696 = vunpack.c.h.b16 %v871
    %v1697 = vunpack.c.l.b16 %v872
    %v1698 = vunpack.c.h.b16 %v872
    %v1699 = vunpack.c.l.b16 %v873
    %v1700 = vunpack.c.h.b16 %v873
    %v1701 = vunpack.c.l.b16 %v874
    %v1702 = vunpack.c.h.b16 %v874
    %v1703 = vunpack.c.l.b16 %v875
    %v1704 = vunpack.c.h.b16 %v875
    %v1705 = vunpack.c.l.b16 %v876
    %v1706 = vunpack.c.h.b16 %v876
    %v1707 = vunpack.c.l.b16 %v877
    %v1708 = vunpack.c.h.b16 %v877
    %v1709 = vunpack.c.l.b16 %v878
    %v1710 = vunpack.c.h.b16 %v878
    %v1711 = vunpack.c.l.b16 %v879
    %v1712 = vunpack.c.h.b16 %v879
    %v1713 = vunpack.c.l.b16 %v880
    %v1714 = vunpack.c.h.b16 %v880
    %v1715 = vunpack.c.l.b16 %v881
    %v1716 = vunpack.c.h.b16 %v881
    %v1717 = vunpack.c.l.b16 %v882
    %v1718 = vunpack.c.h.b16 %v882
    %v1719 = vunpack.c.l.b16 %v883
    %v1720 = vunpack.c.h.b16 %v883
    %v1721 = vunpack.c.l.b16 %v884
    %v1722 = vunpack.c.h.b16 %v884
    %v1723 = vunpack.c.l.b16 %v885
    %v1724 = vunpack.c.h.b16 %v885
    %v1725 = vunpack.c.l.b16 %v886
    %v1726 = vunpack.c.h.b16 %v886
    %v1727 = vunpack.c.l.b16 %v887
    %v1728 = vpack.c.b16 %v1254, %v1175
    %v1729 = vpack.c.b16 %v1255, %v1176
    %v1730 = vpack.c.b16 %v1256, %v1177
    %v1731 = vpack.c.b16 %v1257, %v1178
    %v1732 = vpack.c.b16 %v1258, %v1179
    %v1733 = vpack.c.b16 %v1259, %v1180
    %v1734 = vpack.c.b16 %v1260, %v1181
    %v1735 = vpack.c.b16 %v1261, %v1182
    %v1736 = vpack.c.b16 %v1262, %v1183
    %v1737 = vpack.c.b16 %v1263, %v1184
    %v1738 = vpack.c.b16 %v1264, %v1185
    %v1739 = vpack.c.b16 %v1265, %v1186
    %v1740 = vpack.c.b16 %v1266, %v1187
    %v1741 = vpack.c.b16 %v1267, %v1188
    %v1742 = vpack.c.b16 %v1268, %v1189
    %v1743 = vpack.c.b16 %v1269, %v1190
    %v1744 = vpack.c.b16 %v1270, %v1191
    %v1745 = vpack.c.b16 %v1271, %v1192
    %v1746 = vpack.c.b16 %v1272, %v1193
    %v1747 = vpack.c.b16 %v1273, %v1194
    %v1748 = vpack.c.b16 %v1274, %v1195
    %v1749 = vpack.c.b16 %v1275, %v1196
    %v1750 = vpack.c.b16 %v1276, %v1197
    %v1751 = vpack.c.b16 %v1277, %v1198
    %v1752 = vpack.c.b16 %v1278, %v1199
    %v1753 = vpack.c.b16 %v1279, %v1200
    %v1754 = vpack.c.b16 %v1280, %v1201
    %v1755 = vpack.c.b16 %v1281, %v1202
    %v1756 = vpack.c.b16 %v1282, %v1203
    %v1757 = vpack.c.b16 %v1283, %v1204
    %v1758 = vpack.c.b16 %v1284, %v1205
    %v1759 = vpack.c.b16 %v1285, %v1206
    %v1760 = vpack.c.b16 %v1286, %v1207
    %v1761 = vpack.c.b16 %v1287, %v1208
    %v1762 = vpack.c.b16 %v1288, %v1209
    %v1763 = vpack.c.b16 %v1289, %v1210
    %v1764 = vpack.c.b16 %v1290, %v1211
    %v1765 = vpack.c.b16 %v1291, %v1212
    %v1766 = vpack.c.b16 %v1292, %v1213
    %v1767 = vpack.c.b16 %v1293, %v1214
    %v1768 = vpack.c.b16 %v1294, %v1215
    %v1769 = vpack.c.b16 %v1295, %v1216
    %v1770 = vpack.c.b16 %v1296, %v1217
    %v1771 = vpack.c.b16 %v1297, %v1218
    %v1772 = vpack.c.b16 %v1298, %v1219
    %v1773 = vpack.c.b16 %v1299, %v1220
    %v1774 = vpack.c.b16 %v1300, %v1221
    %v1775 = vpack.c.b16 %v1301, %v1222
    %v1776 = vpack.c.b16 %v1302, %v1223
    %v1777 = vpack.c.b16 %v1303, %v1224
    %v1778 = vpack.c.b16 %v1304, %v1225
    %v1779 = vpack.c.b16 %v1305, %v1226
    %v1780 = vpack.c.b16 %v1306, %v1227
    %v1781 = vpack.c.b16 %v1307, %v1228
    %v1782 = vpack.c.b16 %v1308, %v1229
    %v1783 = vpack.c.b16 %v1309, %v1230
    %v1784 = vpack.c.b16 %v1310, %v1231
    %v1785 = vpack.c.b16 %v1311, %v1232
    %v1786 = vpack.c.b16 %v1312, %v1233
    %v1787 = vpack.c.b16 %v1313, %v1234
    %v1788 = vpack.c.b16 %v1314, %v1235
    %v1789 = vpack.c.b16 %v1315, %v1236
    %v1790 = vpack.c.b16 %v1316, %v1237
    %v1791 = vpack.c.b16 %v1317, %v1238
    %v1792 = vpack.c.b16 %v1318, %v1239
    %v1793 = vpack.c.b16 %v1319, %v1240
    %v1794 = vpack.c.b16 %v1320, %v1241
    %v1795 = vpack.c.b16 %v1321, %v1242
    %v1796 = vpack.c.b16 %v1322, %v1243
    %v1797 = vpack.c.b16 %v1323, %v1244
    %v1798 = vpack.c.b16 %v1324, %v1245
    %v1799 = vpack.c.b16 %v1325, %v1246
    %v1800 = vpack.c.b16 %v1326, %v1247
    %v1801 = vpack.c.b16 %v1327, %v1248
    %v1802 = vpack.c.b16 %v1328, %v1249
    %v1803 = vpack.c.b16 %v1329, %v1250
    %v1804 = vpack.c.b16 %v1330, %v1251
    %v1805 = vpack.c.b16 %v1331, %v1252
    %v1806 = vpack.c.b16 %v1332, %v1253
    %v1807 = vpack.c.b16 %v1412, %v1333
    %v1808 = vpack.c.b16 %v1413, %v1334
    %v1809 = vpack.c.b16 %v1414, %v1335
    %v1810 = vpack.c.b16 %v1415, %v1336
    %v1811 = vpack.c.b16 %v1416, %v1337
    %v1812 = vpack.c.b16 %v1417, %v1338
    %v1813 = vpack.c.b16 %v1418, %v1339
    %v1814 = vpack.c.b16 %v1419, %v1340
    %v1815 = vpack.c.b16 %v1420, %v1341
    %v1816 = vpack.c.b16 %v1421, %v1342
    %v1817 = vpack.c.b16 %v1422, %v1343
    %v1818 = vpack.c.b16 %v1423, %v1344
    %v1819 = vpack.c.b16 %v1424, %v1345
    %v1820 = vpack.c.b16 %v1425, %v1346
    %v1821 = vpack.c.b16 %v1426, %v1347
    %v1822 = vpack.c.b16 %v1427, %v1348
    %v1823 = vpack.c.b16 %v1428, %v1349
    %v1824 = vpack.c.b16 %v1429, %v1350
    %v1825 = vpack.c.b16 %v1430, %v1351
    %v1826 = vpack.c.b16 %v1431, %v1352
    %v1827 = vpack.c.b16 %v1432, %v1353
    %v1828 = vpack.c.b16 %v1433, %v1354
    %v1829 = vpack.c.b16 %v1434, %v1355
    %v1830 = vpack.c.b16 %v1435, %v1356
    %v1831 = vpack.c.b16 %v1436, %v1357
    %v1832 = vpack.c.b16 %v1437, %v1358
    %v1833 = vpack.c.b16 %v1438, %v1359
    %v1834 = vpack.c.b16 %v1439, %v1360
    %v1835 = vpack.c.b16 %v1440, %v1361
    %v1836 = vpack.c.b16 %v1441, %v1362
    %v1837 = vpack.c.b16 %v1442, %v1363
    %v1838 = vpack.c.b16 %v1443, %v1364
    %v1839 = vpack.c.b16 %v1444, %v1365
    %v1840 = vpack.c.b16 %v1445, %v1366
    %v1841 = vpack.c.b16 %v1446, %v1367
    %v1842 = vpack.c.b16 %v1447, %v1368
    %v1843 = vpack.c.b16 %v1448, %v1369
    %v1844 = vpack.c.b16 %v1449, %v1370
    %v1845 = vpack.c.b16 %v1450, %v1371
    %v1846 = vpack.c.b16 %v1451, %v1372
    %v1847 = vpack.c.b16 %v1452, %v1373
    %v1848 = vpack.c.b16 %v1453, %v1374
    %v1849 = vpack.c.b16 %v1454, %v1375
    %v1850 = vpack.c.b16 %v1455, %v1376
    %v1851 = vpack.c.b16 %v1456, %v1377
    %v1852 = vpack.c.b16 %v1457, %v1378
    %v1853 = vpack.c.b16 %v1458, %v1379
    %v1854 = vpack.c.b16 %v1459, %v1380
    %v1855 = vpack.c.b16 %v1460, %v1381
    %v1856 = vpack.c.b16 %v1461, %v1382
    %v1857 = vpack.c.b16 %v1462, %v1383
    %v1858 = vpack.c.b16 %v1463, %v1384
    %v1859 = vpack.c.b16 %v1464, %v1385
    %v1860 = vpack.c.b16 %v1465, %v1386
    %v1861 = vpack.c.b16 %v1466, %v1387
    %v1862 = vpack.c.b16 %v1467, %v1388
    %v1863 = vpack.c.b16 %v1468, %v1389
    %v1864 = vpack.c.b16 %v1469, %v1390
    %v1865 = vpack.c.b16 %v1470, %v1391
    %v1866 = vpack.c.b16 %v1471, %v1392
    %v1867 = vpack.c.b16 %v1472, %v1393
    %v1868 = vpack.c.b16 %v1473, %v1394
    %v1869 = vpack.c.b16 %v1474, %v1395
    %v1870 = vpack.c.b16 %v1475, %v1396
    %v1871 = vpack.c.b16 %v1476, %v1397
    %v1872 = vpack.c.b16 %v1477, %v1398
    %v1873 = vpack.c.b16 %v1478, %v1399
    %v1874 = vpack.c.b16 %v1479, %v1400
    %v1875 = vpack.c.b16 %v1480, %v1401
    %v1876 = vpack.c.b16 %v1481, %v1402
    %v1877 = vpack.c.b16 %v1482, %v1403
    %v1878 = vpack.c.b16 %v1483, %v1404
    %v1879 = vpack.c.b16 %v1484, %v1405
    %v1880 = vpack.c.b16 %v1485, %v1406
    %v1881 = vpack.c.b16 %v1486, %v1407
    %v1882 = vpack.c.b16 %v1487, %v1408
    %v1883 = vpack.c.b16 %v1488, %v1409
    %v1884 = vpack.c.b16 %v1489, %v1410
    %v1885 = vpack.c.b16 %v1490, %v1411
    %v1886 = vpack.c.b16 %v1570, %v1491
    %v1887 = vpack.c.b16 %v1571, %v1492
    %v1888 = vpack.c.b16 %v1572, %v1493
    %v1889 = vpack.c.b16 %v1573, %v1494
    %v1890 = vpack.c.b16 %v1574, %v1495
    %v1891 = vpack.c.b16 %v1575, %v1496
    %v1892 = vpack.c.b16 %v1576, %v1497
    %v1893 = vpack.c.b16 %v1577, %v1498
    %v1894 = vpack.c.b16 %v1578, %v1499
    %v1895 = vpack.c.b16 %v1579, %v1500
    %v1896 = vpack.c.b16 %v1580, %v1501
    %v1897 = vpack.c.b16 %v1581, %v1502
    %v1898 = vpack.c.b16 %v1582, %v1503
    %v1899 = vpack.c.b16 %v1583, %v1504
    %v1900 = vpack.c.b16 %v1584, %v1505
    %v1901 = vpack.c.b16 %v1585, %v1506
    %v1902 = vpack.c.b16 %v1586, %v1507
    %v1903 = vpack.c.b16 %v1587, %v1508
    %v1904 = vpack.c.b16 %v1588, %v1509
    %v1905 = vpack.c.b16 %v1589, %v1510
    %v1906 = vpack.c.b16 %v1590, %v1511
    %v1907 = vpack.c.b16 %v1591, %v1512
    %v1908 = vpack.c.b16 %v1592, %v1513
    %v1909 = vpack.c.b16 %v1593, %v1514
    %v1910 = vpack.c.b16 %v1594, %v1515
    %v1911 = vpack.c.b16 %v1595, %v1516
    %v1912 = vpack.c.b16 %v1596, %v1517
    %v1913 = vpack.c.b16 %v1597, %v1518
    %v1914 = vpack.c.b16 %v1598, %v1519
    %v1915 = vpack.c.b16 %v1599, %v1520
    %v1916 = vpack.c.b16 %v1600, %v1521
    %v1917 = vpack.c.b16 %v1601, %v1522
    %v1918 = vpack.c.b16 %v1602, %v1523
    %v1919 = vpack.c.b16 %v1603, %v1524
    %v1920 = vpack.c.b16 %v1604, %v1525
    %v1921 = vpack.c.b16 %v1605, %v1526
    %v1922 = vpack.c.b16 %v1606, %v1527
    %v1923 = vpack.c.b16 %v1607, %v1528
    %v1924 = vpack.c.b16 %v1608, %v1529
    %v1925 = vpack.c.b16 %v1609, %v1530
    %v1926 = vpack.c.b16 %v1610, %v1531
    %v1927 = vpack.c.b16 %v1611, %v1532
    %v1928 = vpack.c.b16 %v1612, %v1533
    %v1929 = vpack.c.b16 %v1613, %v1534
    %v1930 = vpack.c.b16 %v1614, %v1535
    %v1931 = vpack.c.b16 %v1615, %v1536
    %v1932 = vpack.c.b16 %v1616, %v1537
    %v1933 = vpack.c.b16 %v1617, %v1538
    %v1934 = vpack.c.b16 %v1618, %v1539
    %v1935 = vpack.c.b16 %v1619, %v1540
    %v1936 = vpack.c.b16 %v1620, %v1541
    %v1937 = vpack.c.b16 %v1621, %v1542
    %v1938 = vpack.c.b16 %v1622, %v1543
    %v1939 = vpack.c.b16 %v1623, %v1544
    %v1940 = vpack.c.b16 %v1624, %v1545
    %v1941 = vpack.c.b16 %v1625, %v1546
    %v1942 = vpack.c.b16 %v1626, %v1547
    %v1943 = vpack.c.b16 %v1627, %v1548
    %v1944 = vpack.c.b16 %v1628, %v1549
    %v1945 = vpack.c.b16 %v1629, %v1550
    %v1946 = vpack.c.b16 %v1630, %v1551
    %v1947 = vpack.c.b16 %v1631, %v1552
    %v1948 = vpack.c.b16 %v1632, %v1553
    %v1949 = vpack.c.b16 %v1633, %v1554
    %v1950 = vpack.c.b16 %v1634, %v1555
    %v1951 = vpack.c.b16 %v1635, %v1556
    %v1952 = vpack.c.b16 %v1636, %v1557
    %v1953 = vpack.c.b16 %v1637, %v1558
    %v1954 = vpack.c.b16 %v1638, %v1559
    %v1955 = vpack.c.b16 %v1639, %v1560
    %v1956 = vpack.c.b16 %v1640, %v1561
    %v1957 = vpack.c.b16 %v1641, %v1562
    %v1958 = vpack.c.b16 %v1642, %v1563
    %v1959 = vpack.c.b16 %v1643, %v1564
    %v1960 = vpack.c.b16 %v1644, %v1565
    %v1961 = vpack.c.b16 %v1645, %v1566
    %v1962 = vpack.c.b16 %v1646, %v1567
    %v1963 = vpack.c.b16 %v1647, %v1568
    %v1964 = vpack.c.b16 %v1648, %v1569
    %v1965 = vpack.c.b16 %v1649, %v1649
    %v1966 = vpack.c.b16 %v1650, %v1650
    %v1967 = vpack.c.b16 %v1651, %v1651
    %v1968 = vpack.c.b16 %v1652, %v1652
    %v1969 = vpack.c.b16 %v1653, %v1653
    %v1970 = vpack.c.b16 %v1654, %v1654
    %v1971 = vpack.c.b16 %v1655, %v1655
    %v1972 = vpack.c.b16 %v1656, %v1656
    %v1973 = vpack.c.b16 %v1657, %v1657
    %v1974 = vpack.c.b16 %v1658, %v1658
    %v1975 = vpack.c.b16 %v1659, %v1659
    %v1976 = vpack.c.b16 %v1660, %v1660
    %v1977 = vpack.c.b16 %v1661, %v1661
    %v1978 = vpack.c.b16 %v1662, %v1662
    %v1979 = vpack.c.b16 %v1663, %v1663
    %v1980 = vpack.c.b16 %v1664, %v1664
    %v1981 = vpack.c.b16 %v1665, %v1665
    %v1982 = vpack.c.b16 %v1666, %v1666
    %v1983 = vpack.c.b16 %v1667, %v1667
    %v1984 = vpack.c.b16 %v1668, %v1668
    %v1985 = vpack.c.b16 %v1669, %v1669
    %v1986 = vpack.c.b16 %v1670, %v1670
    %v1987 = vpack.c.b16 %v1671, %v1671
    %v1988 = vpack.c.b16 %v1672, %v1672
    %v1989 = vpack.c.b16 %v1673, %v1673
    %v1990 = vpack.c.b16 %v1674, %v1674
    %v1991 = vpack.c.b16 %v1675, %v1675
    %v1992 = vpack.c.b16 %v1676, %v1676
    %v1993 = vpack.c.b16 %v1677, %v1677
    %v1994 = vpack.c.b16 %v1678, %v1678
    %v1995 = vpack.c.b16 %v1679, %v1679
    %v1996 = vpack.c.b16 %v1680, %v1680
    %v1997 = vpack.c.b16 %v1681, %v1681
    %v1998 = vpack.c.b16 %v1682, %v1682
    %v1999 = vpack.c.b16 %v1683, %v1683
    %v2000 = vpack.c.b16 %v1684, %v1684
    %v2001 = vpack.c.b16 %v1685, %v1685
    %v2002 = vpack.c.b16 %v1686, %v1686
    %v2003 = vpack.c.b16 %v1687, %v1687
    %v2004 = vpack.c.b16 %v1688, %v1688
    %v2005 = vpack.c.b16 %v1689, %v1689
    %v2006 = vpack.c.b16 %v1690, %v1690
    %v2007 = vpack.c.b16 %v1691, %v1691
    %v2008 = vpack.c.b16 %v1692, %v1692
    %v2009 = vpack.c.b16 %v1693, %v1693
    %v2010 = vpack.c.b16 %v1694, %v1694
    %v2011 = vpack.c.b16 %v1695, %v1695
    %v2012 = vpack.c.b16 %v1696, %v1696
    %v2013 = vpack.c.b16 %v1697, %v1697
    %v2014 = vpack.c.b16 %v1698, %v1698
    %v2015 = vpack.c.b16 %v1699, %v1699
    %v2016 = vpack.c.b16 %v1700, %v1700
    %v2017 = vpack.c.b16 %v1701, %v1701
    %v2018 = vpack.c.b16 %v1702, %v1702
    %v2019 = vpack.c.b16 %v1703, %v1703
    %v2020 = vpack.c.b16 %v1704, %v1704
    %v2021 = vpack.c.b16 %v1705, %v1705
    %v2022 = vpack.c.b16 %v1706, %v1706
    %v2023 = vpack.c.b16 %v1707, %v1707
    %v2024 = vpack.c.b16 %v1708, %v1708
    %v2025 = vpack.c.b16 %v1709, %v1709
    %v2026 = vpack.c.b16 %v1710, %v1710
    %v2027 = vpack.c.b16 %v1711, %v1711
    %v2028 = vpack.c.b16 %v1712, %v1712
    %v2029 = vpack.c.b16 %v1713, %v1713
    %v2030 = vpack.c.b16 %v1714, %v1714
    %v2031 = vpack.c.b16 %v1715, %v1715
    %v2032 = vpack.c.b16 %v1716, %v1716
    %v2033 = vpack.c.b16 %v1717, %v1717
    %v2034 = vpack.c.b16 %v1718, %v1718
    %v2035 = vpack.c.b16 %v1719, %v1719
    %v2036 = vpack.c.b16 %v1720, %v1720
    %v2037 = vpack.c.b16 %v1721, %v1721
    %v2038 = vpack.c.b16 %v1722, %v1722
    %v2039 = vpack.c.b16 %v1723, %v1723
    %v2040 = vpack.c.b16 %v1724, %v1724
    %v2041 = vpack.c.b16 %v1725, %v1725
    %v2042 = vpack.c.b16 %v1726, %v1726
    %v2043 = vpack.c.b16 %v1727, %v1727
    %vm2356 = vcmask 130048
    %v2358 = vsel %vm2356, %v607, 0
    %v2361 = vsel %vm2356, %v1806, 0
    %v2364 = vsel %vm2356, %v1885, 0
    %v2367 = vsel %vm2356, %v1964, 0
    %v2370 = vsel %vm2356, %v2043, 0
    %2372 = vmatprep.subr.bf16.mxu0 %v1729
    %2373 = vmatpush1.bf16.xpose.msra.mxu0 %v1728
    %2374 = vmatprep.subr.bf16.mxu0 %v1808
    %2375 = vmatpush1.bf16.xpose.msra.mxu0 %v1807
    %2376 = vmatprep.subr.bf16.mxu0 %v1887
    %2377 = vmatpush1.bf16.xpose.msra.mxu0 %v1886
    %2378 = vmatprep.subr.bf16.mxu0 %v1966
    %2379 = vmatpush1.bf16.xpose.msra.mxu0 %v1965
    %2380 = vmatprep.subr.bf16.mxu0 0
    %2381 = vmatpush1.bf16.xpose.msra.mxu0 0
    %2382 = vmatprep.subr.bf16.mxu0 0
    %2383 = vmatpush1.bf16.xpose.msra.mxu0 0
    %2384 = vmatprep.subr.bf16.mxu0 0
    %2385 = vmatpush1.bf16.xpose.msra.mxu0 0
    %2386 = vmatprep.subr.bf16.mxu0 0
    %2387 = vmatpush1.bf16.xpose.msra.mxu0 0
    %2388 = vmatprep.subr.bf16.mxu0 0
    %2389 = vmatpush1.bf16.xpose.msra.mxu0 0
    %2390 = vmatprep.subr.bf16.mxu0 0
    %2391 = vmatpush1.bf16.xpose.msra.mxu0 0
    %2392 = vmatprep.subr.bf16.mxu0 0
    %2393 = vmatpush1.bf16.xpose.msra.mxu0 0
    %2394 = vmatprep.subr.bf16.mxu0 0
    %2395 = vmatpush1.bf16.xpose.msra.mxu0 0
    %2396 = vmatprep.subr.bf16.mxu0 0
    %2397 = vmatpush1.bf16.xpose.msra.mxu0 0
    %2398 = vmatprep.subr.bf16.mxu0 0
    %2399 = vmatpush1.bf16.xpose.msra.mxu0 0
    %2400 = vmatprep.subr.bf16.mxu0 0
    %2401 = vmatpush1.bf16.xpose.msra.mxu0 0
    %2402 = vmatprep.subr.bf16.mxu0 0
    %2403 = vmatpush1.bf16.xpose.msra.mxu0 0
    %2404 = vmatprep.mubr.bf16.mxu0 %v530
    %2405 = vmatmul.mubr.bf16.gmra.mrb[0].mxu0 %v529
    %v2406 = vpop.f32.mrb[0].mxu0
    %v2407 = vadd.f32 %v893, %v2406
    %v2408 = vpop.f32.mrb[0].mxu0
    %v2409 = vpop.f32.mrb[0].mxu0
    %v2410 = vpop.f32.mrb[0].mxu0
    %2411 = vdwg.mxu0
    %2412 = vmatprep.subr.bf16.mxu0 %v1731
    %2413 = vmatpush1.bf16.xpose.msra.mxu0 %v1730
    %2414 = vmatprep.subr.bf16.mxu0 %v1810
    %2415 = vmatpush1.bf16.xpose.msra.mxu0 %v1809
    %2416 = vmatprep.subr.bf16.mxu0 %v1889
    %2417 = vmatpush1.bf16.xpose.msra.mxu0 %v1888
    %2418 = vmatprep.subr.bf16.mxu0 %v1968
    %2419 = vmatpush1.bf16.xpose.msra.mxu0 %v1967
    %2420 = vmatprep.subr.bf16.mxu0 0
    %2421 = vmatpush1.bf16.xpose.msra.mxu0 0
    %2422 = vmatprep.subr.bf16.mxu0 0
    %2423 = vmatpush1.bf16.xpose.msra.mxu0 0
    %2424 = vmatprep.subr.bf16.mxu0 0
    %2425 = vmatpush1.bf16.xpose.msra.mxu0 0
    %2426 = vmatprep.subr.bf16.mxu0 0
    %2427 = vmatpush1.bf16.xpose.msra.mxu0 0
    %2428 = vmatprep.subr.bf16.mxu0 0
    %2429 = vmatpush1.bf16.xpose.msra.mxu0 0
    %2430 = vmatprep.subr.bf16.mxu0 0
    %2431 = vmatpush1.bf16.xpose.msra.mxu0 0
    %2432 = vmatprep.subr.bf16.mxu0 0
    %2433 = vmatpush1.bf16.xpose.msra.mxu0 0
    %2434 = vmatprep.subr.bf16.mxu0 0
    %2435 = vmatpush1.bf16.xpose.msra.mxu0 0
    %2436 = vmatprep.subr.bf16.mxu0 0
    %2437 = vmatpush1.bf16.xpose.msra.mxu0 0
    %2438 = vmatprep.subr.bf16.mxu0 0
    %2439 = vmatpush1.bf16.xpose.msra.mxu0 0
    %2440 = vmatprep.subr.bf16.mxu0 0
    %2441 = vmatpush1.bf16.xpose.msra.mxu0 0
    %2442 = vmatprep.subr.bf16.mxu0 0
    %2443 = vmatpush1.bf16.xpose.msra.mxu0 0
    %2444 = vmatprep.mubr.bf16.mxu0 %v532
    %2445 = vmatmul.mubr.bf16.gmra.mrb[0].mxu0 %v531
    %v2446 = vpop.f32.mrb[0].mxu0
    %v2447 = vadd.f32 %v2407, %v2446
    %v2448 = vpop.f32.mrb[0].mxu0
    %v2449 = vpop.f32.mrb[0].mxu0
    %v2450 = vpop.f32.mrb[0].mxu0
    %2451 = vdwg.mxu0
    %2452 = vmatprep.subr.bf16.mxu0 %v1733
    %2453 = vmatpush1.bf16.xpose.msra.mxu0 %v1732
    %2454 = vmatprep.subr.bf16.mxu0 %v1812
    %2455 = vmatpush1.bf16.xpose.msra.mxu0 %v1811
    %2456 = vmatprep.subr.bf16.mxu0 %v1891
    %2457 = vmatpush1.bf16.xpose.msra.mxu0 %v1890
    %2458 = vmatprep.subr.bf16.mxu0 %v1970
    %2459 = vmatpush1.bf16.xpose.msra.mxu0 %v1969
    %2460 = vmatprep.subr.bf16.mxu0 0
    %2461 = vmatpush1.bf16.xpose.msra.mxu0 0
    %2462 = vmatprep.subr.bf16.mxu0 0
    %2463 = vmatpush1.bf16.xpose.msra.mxu0 0
    %2464 = vmatprep.subr.bf16.mxu0 0
    %2465 = vmatpush1.bf16.xpose.msra.mxu0 0
    %2466 = vmatprep.subr.bf16.mxu0 0
    %2467 = vmatpush1.bf16.xpose.msra.mxu0 0
    %2468 = vmatprep.subr.bf16.mxu0 0
    %2469 = vmatpush1.bf16.xpose.msra.mxu0 0
    %2470 = vmatprep.subr.bf16.mxu0 0
    %2471 = vmatpush1.bf16.xpose.msra.mxu0 0
    %2472 = vmatprep.subr.bf16.mxu0 0
    %2473 = vmatpush1.bf16.xpose.msra.mxu0 0
    %2474 = vmatprep.subr.bf16.mxu0 0
    %2475 = vmatpush1.bf16.xpose.msra.mxu0 0
    %2476 = vmatprep.subr.bf16.mxu0 0
    %2477 = vmatpush1.bf16.xpose.msra.mxu0 0
    %2478 = vmatprep.subr.bf16.mxu0 0
    %2479 = vmatpush1.bf16.xpose.msra.mxu0 0
    %2480 = vmatprep.subr.bf16.mxu0 0
    %2481 = vmatpush1.bf16.xpose.msra.mxu0 0
    %2482 = vmatprep.subr.bf16.mxu0 0
    %2483 = vmatpush1.bf16.xpose.msra.mxu0 0
    %2484 = vmatprep.mubr.bf16.mxu0 %v534
    %2485 = vmatmul.mubr.bf16.gmra.mrb[0].mxu0 %v533
    %v2486 = vpop.f32.mrb[0].mxu0
    %v2487 = vadd.f32 %v2447, %v2486
    %v2488 = vpop.f32.mrb[0].mxu0
    %v2489 = vpop.f32.mrb[0].mxu0
    %v2490 = vpop.f32.mrb[0].mxu0
    %2491 = vdwg.mxu0
    %2492 = vmatprep.subr.bf16.mxu0 %v1735
    %2493 = vmatpush1.bf16.xpose.msra.mxu0 %v1734
    %2494 = vmatprep.subr.bf16.mxu0 %v1814
    %2495 = vmatpush1.bf16.xpose.msra.mxu0 %v1813
    %2496 = vmatprep.subr.bf16.mxu0 %v1893
    %2497 = vmatpush1.bf16.xpose.msra.mxu0 %v1892
    %2498 = vmatprep.subr.bf16.mxu0 %v1972
    %2499 = vmatpush1.bf16.xpose.msra.mxu0 %v1971
    %2500 = vmatprep.subr.bf16.mxu0 0
    %2501 = vmatpush1.bf16.xpose.msra.mxu0 0
    %2502 = vmatprep.subr.bf16.mxu0 0
    %2503 = vmatpush1.bf16.xpose.msra.mxu0 0
    %2504 = vmatprep.subr.bf16.mxu0 0
    %2505 = vmatpush1.bf16.xpose.msra.mxu0 0
    %2506 = vmatprep.subr.bf16.mxu0 0
    %2507 = vmatpush1.bf16.xpose.msra.mxu0 0
    %2508 = vmatprep.subr.bf16.mxu0 0
    %2509 = vmatpush1.bf16.xpose.msra.mxu0 0
    %2510 = vmatprep.subr.bf16.mxu0 0
    %2511 = vmatpush1.bf16.xpose.msra.mxu0 0
    %2512 = vmatprep.subr.bf16.mxu0 0
    %2513 = vmatpush1.bf16.xpose.msra.mxu0 0
    %2514 = vmatprep.subr.bf16.mxu0 0
    %2515 = vmatpush1.bf16.xpose.msra.mxu0 0
    %2516 = vmatprep.subr.bf16.mxu0 0
    %2517 = vmatpush1.bf16.xpose.msra.mxu0 0
    %2518 = vmatprep.subr.bf16.mxu0 0
    %2519 = vmatpush1.bf16.xpose.msra.mxu0 0
    %2520 = vmatprep.subr.bf16.mxu0 0
    %2521 = vmatpush1.bf16.xpose.msra.mxu0 0
    %2522 = vmatprep.subr.bf16.mxu0 0
    %2523 = vmatpush1.bf16.xpose.msra.mxu0 0
    %2524 = vmatprep.mubr.bf16.mxu0 %v536
    %2525 = vmatmul.mubr.bf16.gmra.mrb[0].mxu0 %v535
    %v2526 = vpop.f32.mrb[0].mxu0
    %v2527 = vadd.f32 %v2487, %v2526
    %v2528 = vpop.f32.mrb[0].mxu0
    %v2529 = vpop.f32.mrb[0].mxu0
    %v2530 = vpop.f32.mrb[0].mxu0
    %2531 = vdwg.mxu0
    %2532 = vmatprep.subr.bf16.mxu0 %v1737
    %2533 = vmatpush1.bf16.xpose.msra.mxu0 %v1736
    %2534 = vmatprep.subr.bf16.mxu0 %v1816
    %2535 = vmatpush1.bf16.xpose.msra.mxu0 %v1815
    %2536 = vmatprep.subr.bf16.mxu0 %v1895
    %2537 = vmatpush1.bf16.xpose.msra.mxu0 %v1894
    %2538 = vmatprep.subr.bf16.mxu0 %v1974
    %2539 = vmatpush1.bf16.xpose.msra.mxu0 %v1973
    %2540 = vmatprep.subr.bf16.mxu0 0
    %2541 = vmatpush1.bf16.xpose.msra.mxu0 0
    %2542 = vmatprep.subr.bf16.mxu0 0
    %2543 = vmatpush1.bf16.xpose.msra.mxu0 0
    %2544 = vmatprep.subr.bf16.mxu0 0
    %2545 = vmatpush1.bf16.xpose.msra.mxu0 0
    %2546 = vmatprep.subr.bf16.mxu0 0
    %2547 = vmatpush1.bf16.xpose.msra.mxu0 0
    %2548 = vmatprep.subr.bf16.mxu0 0
    %2549 = vmatpush1.bf16.xpose.msra.mxu0 0
    %2550 = vmatprep.subr.bf16.mxu0 0
    %2551 = vmatpush1.bf16.xpose.msra.mxu0 0
    %2552 = vmatprep.subr.bf16.mxu0 0
    %2553 = vmatpush1.bf16.xpose.msra.mxu0 0
    %2554 = vmatprep.subr.bf16.mxu0 0
    %2555 = vmatpush1.bf16.xpose.msra.mxu0 0
    %2556 = vmatprep.subr.bf16.mxu0 0
    %2557 = vmatpush1.bf16.xpose.msra.mxu0 0
    %2558 = vmatprep.subr.bf16.mxu0 0
    %2559 = vmatpush1.bf16.xpose.msra.mxu0 0
    %2560 = vmatprep.subr.bf16.mxu0 0
    %2561 = vmatpush1.bf16.xpose.msra.mxu0 0
    %2562 = vmatprep.subr.bf16.mxu0 0
    %2563 = vmatpush1.bf16.xpose.msra.mxu0 0
    %2564 = vmatprep.mubr.bf16.mxu0 %v538
    %2565 = vmatmul.mubr.bf16.gmra.mrb[0].mxu0 %v537
    %v2566 = vpop.f32.mrb[0].mxu0
    %v2567 = vadd.f32 %v2527, %v2566
    %v2568 = vpop.f32.mrb[0].mxu0
    %v2569 = vpop.f32.mrb[0].mxu0
    %v2570 = vpop.f32.mrb[0].mxu0
    %2571 = vdwg.mxu0
    %2572 = vmatprep.subr.bf16.mxu0 %v1739
    %2573 = vmatpush1.bf16.xpose.msra.mxu0 %v1738
    %2574 = vmatprep.subr.bf16.mxu0 %v1818
    %2575 = vmatpush1.bf16.xpose.msra.mxu0 %v1817
    %2576 = vmatprep.subr.bf16.mxu0 %v1897
    %2577 = vmatpush1.bf16.xpose.msra.mxu0 %v1896
    %2578 = vmatprep.subr.bf16.mxu0 %v1976
    %2579 = vmatpush1.bf16.xpose.msra.mxu0 %v1975
    %2580 = vmatprep.subr.bf16.mxu0 0
    %2581 = vmatpush1.bf16.xpose.msra.mxu0 0
    %2582 = vmatprep.subr.bf16.mxu0 0
    %2583 = vmatpush1.bf16.xpose.msra.mxu0 0
    %2584 = vmatprep.subr.bf16.mxu0 0
    %2585 = vmatpush1.bf16.xpose.msra.mxu0 0
    %2586 = vmatprep.subr.bf16.mxu0 0
    %2587 = vmatpush1.bf16.xpose.msra.mxu0 0
    %2588 = vmatprep.subr.bf16.mxu0 0
    %2589 = vmatpush1.bf16.xpose.msra.mxu0 0
    %2590 = vmatprep.subr.bf16.mxu0 0
    %2591 = vmatpush1.bf16.xpose.msra.mxu0 0
    %2592 = vmatprep.subr.bf16.mxu0 0
    %2593 = vmatpush1.bf16.xpose.msra.mxu0 0
    %2594 = vmatprep.subr.bf16.mxu0 0
    %2595 = vmatpush1.bf16.xpose.msra.mxu0 0
    %2596 = vmatprep.subr.bf16.mxu0 0
    %2597 = vmatpush1.bf16.xpose.msra.mxu0 0
    %2598 = vmatprep.subr.bf16.mxu0 0
    %2599 = vmatpush1.bf16.xpose.msra.mxu0 0
    %2600 = vmatprep.subr.bf16.mxu0 0
    %2601 = vmatpush1.bf16.xpose.msra.mxu0 0
    %2602 = vmatprep.subr.bf16.mxu0 0
    %2603 = vmatpush1.bf16.xpose.msra.mxu0 0
    %2604 = vmatprep.mubr.bf16.mxu0 %v540
    %2605 = vmatmul.mubr.bf16.gmra.mrb[0].mxu0 %v539
    %v2606 = vpop.f32.mrb[0].mxu0
    %v2607 = vadd.f32 %v2567, %v2606
    %v2608 = vpop.f32.mrb[0].mxu0
    %v2609 = vpop.f32.mrb[0].mxu0
    %v2610 = vpop.f32.mrb[0].mxu0
    %2611 = vdwg.mxu0
    %2612 = vmatprep.subr.bf16.mxu0 %v1741
    %2613 = vmatpush1.bf16.xpose.msra.mxu0 %v1740
    %2614 = vmatprep.subr.bf16.mxu0 %v1820
    %2615 = vmatpush1.bf16.xpose.msra.mxu0 %v1819
    %2616 = vmatprep.subr.bf16.mxu0 %v1899
    %2617 = vmatpush1.bf16.xpose.msra.mxu0 %v1898
    %2618 = vmatprep.subr.bf16.mxu0 %v1978
    %2619 = vmatpush1.bf16.xpose.msra.mxu0 %v1977
    %2620 = vmatprep.subr.bf16.mxu0 0
    %2621 = vmatpush1.bf16.xpose.msra.mxu0 0
    %2622 = vmatprep.subr.bf16.mxu0 0
    %2623 = vmatpush1.bf16.xpose.msra.mxu0 0
    %2624 = vmatprep.subr.bf16.mxu0 0
    %2625 = vmatpush1.bf16.xpose.msra.mxu0 0
    %2626 = vmatprep.subr.bf16.mxu0 0
    %2627 = vmatpush1.bf16.xpose.msra.mxu0 0
    %2628 = vmatprep.subr.bf16.mxu0 0
    %2629 = vmatpush1.bf16.xpose.msra.mxu0 0
    %2630 = vmatprep.subr.bf16.mxu0 0
    %2631 = vmatpush1.bf16.xpose.msra.mxu0 0
    %2632 = vmatprep.subr.bf16.mxu0 0
    %2633 = vmatpush1.bf16.xpose.msra.mxu0 0
    %2634 = vmatprep.subr.bf16.mxu0 0
    %2635 = vmatpush1.bf16.xpose.msra.mxu0 0
    %2636 = vmatprep.subr.bf16.mxu0 0
    %2637 = vmatpush1.bf16.xpose.msra.mxu0 0
    %2638 = vmatprep.subr.bf16.mxu0 0
    %2639 = vmatpush1.bf16.xpose.msra.mxu0 0
    %2640 = vmatprep.subr.bf16.mxu0 0
    %2641 = vmatpush1.bf16.xpose.msra.mxu0 0
    %2642 = vmatprep.subr.bf16.mxu0 0
    %2643 = vmatpush1.bf16.xpose.msra.mxu0 0
    %2644 = vmatprep.mubr.bf16.mxu0 %v542
    %2645 = vmatmul.mubr.bf16.gmra.mrb[0].mxu0 %v541
    %v2646 = vpop.f32.mrb[0].mxu0
    %v2647 = vadd.f32 %v2607, %v2646
    %v2648 = vpop.f32.mrb[0].mxu0
    %v2649 = vpop.f32.mrb[0].mxu0
    %v2650 = vpop.f32.mrb[0].mxu0
    %2651 = vdwg.mxu0
    %2652 = vmatprep.subr.bf16.mxu0 %v1743
    %2653 = vmatpush1.bf16.xpose.msra.mxu0 %v1742
    %2654 = vmatprep.subr.bf16.mxu0 %v1822
    %2655 = vmatpush1.bf16.xpose.msra.mxu0 %v1821
    %2656 = vmatprep.subr.bf16.mxu0 %v1901
    %2657 = vmatpush1.bf16.xpose.msra.mxu0 %v1900
    %2658 = vmatprep.subr.bf16.mxu0 %v1980
    %2659 = vmatpush1.bf16.xpose.msra.mxu0 %v1979
    %2660 = vmatprep.subr.bf16.mxu0 0
    %2661 = vmatpush1.bf16.xpose.msra.mxu0 0
    %2662 = vmatprep.subr.bf16.mxu0 0
    %2663 = vmatpush1.bf16.xpose.msra.mxu0 0
    %2664 = vmatprep.subr.bf16.mxu0 0
    %2665 = vmatpush1.bf16.xpose.msra.mxu0 0
    %2666 = vmatprep.subr.bf16.mxu0 0
    %2667 = vmatpush1.bf16.xpose.msra.mxu0 0
    %2668 = vmatprep.subr.bf16.mxu0 0
    %2669 = vmatpush1.bf16.xpose.msra.mxu0 0
    %2670 = vmatprep.subr.bf16.mxu0 0
    %2671 = vmatpush1.bf16.xpose.msra.mxu0 0
    %2672 = vmatprep.subr.bf16.mxu0 0
    %2673 = vmatpush1.bf16.xpose.msra.mxu0 0
    %2674 = vmatprep.subr.bf16.mxu0 0
    %2675 = vmatpush1.bf16.xpose.msra.mxu0 0
    %2676 = vmatprep.subr.bf16.mxu0 0
    %2677 = vmatpush1.bf16.xpose.msra.mxu0 0
    %2678 = vmatprep.subr.bf16.mxu0 0
    %2679 = vmatpush1.bf16.xpose.msra.mxu0 0
    %2680 = vmatprep.subr.bf16.mxu0 0
    %2681 = vmatpush1.bf16.xpose.msra.mxu0 0
    %2682 = vmatprep.subr.bf16.mxu0 0
    %2683 = vmatpush1.bf16.xpose.msra.mxu0 0
    %2684 = vmatprep.mubr.bf16.mxu0 %v544
    %2685 = vmatmul.mubr.bf16.gmra.mrb[0].mxu0 %v543
    %v2686 = vpop.f32.mrb[0].mxu0
    %v2687 = vadd.f32 %v2647, %v2686
    %v2688 = vpop.f32.mrb[0].mxu0
    %v2689 = vpop.f32.mrb[0].mxu0
    %v2690 = vpop.f32.mrb[0].mxu0
    %2691 = vdwg.mxu0
    %2692 = vmatprep.subr.bf16.mxu0 %v1745
    %2693 = vmatpush1.bf16.xpose.msra.mxu0 %v1744
    %2694 = vmatprep.subr.bf16.mxu0 %v1824
    %2695 = vmatpush1.bf16.xpose.msra.mxu0 %v1823
    %2696 = vmatprep.subr.bf16.mxu0 %v1903
    %2697 = vmatpush1.bf16.xpose.msra.mxu0 %v1902
    %2698 = vmatprep.subr.bf16.mxu0 %v1982
    %2699 = vmatpush1.bf16.xpose.msra.mxu0 %v1981
    %2700 = vmatprep.subr.bf16.mxu0 0
    %2701 = vmatpush1.bf16.xpose.msra.mxu0 0
    %2702 = vmatprep.subr.bf16.mxu0 0
    %2703 = vmatpush1.bf16.xpose.msra.mxu0 0
    %2704 = vmatprep.subr.bf16.mxu0 0
    %2705 = vmatpush1.bf16.xpose.msra.mxu0 0
    %2706 = vmatprep.subr.bf16.mxu0 0
    %2707 = vmatpush1.bf16.xpose.msra.mxu0 0
    %2708 = vmatprep.subr.bf16.mxu0 0
    %2709 = vmatpush1.bf16.xpose.msra.mxu0 0
    %2710 = vmatprep.subr.bf16.mxu0 0
    %2711 = vmatpush1.bf16.xpose.msra.mxu0 0
    %2712 = vmatprep.subr.bf16.mxu0 0
    %2713 = vmatpush1.bf16.xpose.msra.mxu0 0
    %2714 = vmatprep.subr.bf16.mxu0 0
    %2715 = vmatpush1.bf16.xpose.msra.mxu0 0
    %2716 = vmatprep.subr.bf16.mxu0 0
    %2717 = vmatpush1.bf16.xpose.msra.mxu0 0
    %2718 = vmatprep.subr.bf16.mxu0 0
    %2719 = vmatpush1.bf16.xpose.msra.mxu0 0
    %2720 = vmatprep.subr.bf16.mxu0 0
    %2721 = vmatpush1.bf16.xpose.msra.mxu0 0
    %2722 = vmatprep.subr.bf16.mxu0 0
    %2723 = vmatpush1.bf16.xpose.msra.mxu0 0
    %2724 = vmatprep.mubr.bf16.mxu0 %v546
    %2725 = vmatmul.mubr.bf16.gmra.mrb[0].mxu0 %v545
    %v2726 = vpop.f32.mrb[0].mxu0
    %v2727 = vadd.f32 %v2687, %v2726
    %v2728 = vpop.f32.mrb[0].mxu0
    %v2729 = vpop.f32.mrb[0].mxu0
    %v2730 = vpop.f32.mrb[0].mxu0
    %2731 = vdwg.mxu0
    %2732 = vmatprep.subr.bf16.mxu0 %v1747
    %2733 = vmatpush1.bf16.xpose.msra.mxu0 %v1746
    %2734 = vmatprep.subr.bf16.mxu0 %v1826
    %2735 = vmatpush1.bf16.xpose.msra.mxu0 %v1825
    %2736 = vmatprep.subr.bf16.mxu0 %v1905
    %2737 = vmatpush1.bf16.xpose.msra.mxu0 %v1904
    %2738 = vmatprep.subr.bf16.mxu0 %v1984
    %2739 = vmatpush1.bf16.xpose.msra.mxu0 %v1983
    %2740 = vmatprep.subr.bf16.mxu0 0
    %2741 = vmatpush1.bf16.xpose.msra.mxu0 0
    %2742 = vmatprep.subr.bf16.mxu0 0
    %2743 = vmatpush1.bf16.xpose.msra.mxu0 0
    %2744 = vmatprep.subr.bf16.mxu0 0
    %2745 = vmatpush1.bf16.xpose.msra.mxu0 0
    %2746 = vmatprep.subr.bf16.mxu0 0
    %2747 = vmatpush1.bf16.xpose.msra.mxu0 0
    %2748 = vmatprep.subr.bf16.mxu0 0
    %2749 = vmatpush1.bf16.xpose.msra.mxu0 0
    %2750 = vmatprep.subr.bf16.mxu0 0
    %2751 = vmatpush1.bf16.xpose.msra.mxu0 0
    %2752 = vmatprep.subr.bf16.mxu0 0
    %2753 = vmatpush1.bf16.xpose.msra.mxu0 0
    %2754 = vmatprep.subr.bf16.mxu0 0
    %2755 = vmatpush1.bf16.xpose.msra.mxu0 0
    %2756 = vmatprep.subr.bf16.mxu0 0
    %2757 = vmatpush1.bf16.xpose.msra.mxu0 0
    %2758 = vmatprep.subr.bf16.mxu0 0
    %2759 = vmatpush1.bf16.xpose.msra.mxu0 0
    %2760 = vmatprep.subr.bf16.mxu0 0
    %2761 = vmatpush1.bf16.xpose.msra.mxu0 0
    %2762 = vmatprep.subr.bf16.mxu0 0
    %2763 = vmatpush1.bf16.xpose.msra.mxu0 0
    %2764 = vmatprep.mubr.bf16.mxu0 %v548
    %2765 = vmatmul.mubr.bf16.gmra.mrb[0].mxu0 %v547
    %v2766 = vpop.f32.mrb[0].mxu0
    %v2767 = vadd.f32 %v2727, %v2766
    %v2768 = vpop.f32.mrb[0].mxu0
    %v2769 = vpop.f32.mrb[0].mxu0
    %v2770 = vpop.f32.mrb[0].mxu0
    %2771 = vdwg.mxu0
    %2772 = vmatprep.subr.bf16.mxu0 %v1749
    %2773 = vmatpush1.bf16.xpose.msra.mxu0 %v1748
    %2774 = vmatprep.subr.bf16.mxu0 %v1828
    %2775 = vmatpush1.bf16.xpose.msra.mxu0 %v1827
    %2776 = vmatprep.subr.bf16.mxu0 %v1907
    %2777 = vmatpush1.bf16.xpose.msra.mxu0 %v1906
    %2778 = vmatprep.subr.bf16.mxu0 %v1986
    %2779 = vmatpush1.bf16.xpose.msra.mxu0 %v1985
    %2780 = vmatprep.subr.bf16.mxu0 0
    %2781 = vmatpush1.bf16.xpose.msra.mxu0 0
    %2782 = vmatprep.subr.bf16.mxu0 0
    %2783 = vmatpush1.bf16.xpose.msra.mxu0 0
    %2784 = vmatprep.subr.bf16.mxu0 0
    %2785 = vmatpush1.bf16.xpose.msra.mxu0 0
    %2786 = vmatprep.subr.bf16.mxu0 0
    %2787 = vmatpush1.bf16.xpose.msra.mxu0 0
    %2788 = vmatprep.subr.bf16.mxu0 0
    %2789 = vmatpush1.bf16.xpose.msra.mxu0 0
    %2790 = vmatprep.subr.bf16.mxu0 0
    %2791 = vmatpush1.bf16.xpose.msra.mxu0 0
    %2792 = vmatprep.subr.bf16.mxu0 0
    %2793 = vmatpush1.bf16.xpose.msra.mxu0 0
    %2794 = vmatprep.subr.bf16.mxu0 0
    %2795 = vmatpush1.bf16.xpose.msra.mxu0 0
    %2796 = vmatprep.subr.bf16.mxu0 0
    %2797 = vmatpush1.bf16.xpose.msra.mxu0 0
    %2798 = vmatprep.subr.bf16.mxu0 0
    %2799 = vmatpush1.bf16.xpose.msra.mxu0 0
    %2800 = vmatprep.subr.bf16.mxu0 0
    %2801 = vmatpush1.bf16.xpose.msra.mxu0 0
    %2802 = vmatprep.subr.bf16.mxu0 0
    %2803 = vmatpush1.bf16.xpose.msra.mxu0 0
    %2804 = vmatprep.mubr.bf16.mxu0 %v550
    %2805 = vmatmul.mubr.bf16.gmra.mrb[0].mxu0 %v549
    %v2806 = vpop.f32.mrb[0].mxu0
    %v2807 = vadd.f32 %v2767, %v2806
    %v2808 = vpop.f32.mrb[0].mxu0
    %v2809 = vpop.f32.mrb[0].mxu0
    %v2810 = vpop.f32.mrb[0].mxu0
    %2811 = vdwg.mxu0
    %2812 = vmatprep.subr.bf16.mxu0 %v1751
    %2813 = vmatpush1.bf16.xpose.msra.mxu0 %v1750
    %2814 = vmatprep.subr.bf16.mxu0 %v1830
    %2815 = vmatpush1.bf16.xpose.msra.mxu0 %v1829
    %2816 = vmatprep.subr.bf16.mxu0 %v1909
    %2817 = vmatpush1.bf16.xpose.msra.mxu0 %v1908
    %2818 = vmatprep.subr.bf16.mxu0 %v1988
    %2819 = vmatpush1.bf16.xpose.msra.mxu0 %v1987
    %2820 = vmatprep.subr.bf16.mxu0 0
    %2821 = vmatpush1.bf16.xpose.msra.mxu0 0
    %2822 = vmatprep.subr.bf16.mxu0 0
    %2823 = vmatpush1.bf16.xpose.msra.mxu0 0
    %2824 = vmatprep.subr.bf16.mxu0 0
    %2825 = vmatpush1.bf16.xpose.msra.mxu0 0
    %2826 = vmatprep.subr.bf16.mxu0 0
    %2827 = vmatpush1.bf16.xpose.msra.mxu0 0
    %2828 = vmatprep.subr.bf16.mxu0 0
    %2829 = vmatpush1.bf16.xpose.msra.mxu0 0
    %2830 = vmatprep.subr.bf16.mxu0 0
    %2831 = vmatpush1.bf16.xpose.msra.mxu0 0
    %2832 = vmatprep.subr.bf16.mxu0 0
    %2833 = vmatpush1.bf16.xpose.msra.mxu0 0
    %2834 = vmatprep.subr.bf16.mxu0 0
    %2835 = vmatpush1.bf16.xpose.msra.mxu0 0
    %2836 = vmatprep.subr.bf16.mxu0 0
    %2837 = vmatpush1.bf16.xpose.msra.mxu0 0
    %2838 = vmatprep.subr.bf16.mxu0 0
    %2839 = vmatpush1.bf16.xpose.msra.mxu0 0
    %2840 = vmatprep.subr.bf16.mxu0 0
    %2841 = vmatpush1.bf16.xpose.msra.mxu0 0
    %2842 = vmatprep.subr.bf16.mxu0 0
    %2843 = vmatpush1.bf16.xpose.msra.mxu0 0
    %2844 = vmatprep.mubr.bf16.mxu0 %v552
    %2845 = vmatmul.mubr.bf16.gmra.mrb[0].mxu0 %v551
    %v2846 = vpop.f32.mrb[0].mxu0
    %v2847 = vadd.f32 %v2807, %v2846
    %v2848 = vpop.f32.mrb[0].mxu0
    %v2849 = vpop.f32.mrb[0].mxu0
    %v2850 = vpop.f32.mrb[0].mxu0
    %2851 = vdwg.mxu0
    %2852 = vmatprep.subr.bf16.mxu0 %v1753
    %2853 = vmatpush1.bf16.xpose.msra.mxu0 %v1752
    %2854 = vmatprep.subr.bf16.mxu0 %v1832
    %2855 = vmatpush1.bf16.xpose.msra.mxu0 %v1831
    %2856 = vmatprep.subr.bf16.mxu0 %v1911
    %2857 = vmatpush1.bf16.xpose.msra.mxu0 %v1910
    %2858 = vmatprep.subr.bf16.mxu0 %v1990
    %2859 = vmatpush1.bf16.xpose.msra.mxu0 %v1989
    %2860 = vmatprep.subr.bf16.mxu0 0
    %2861 = vmatpush1.bf16.xpose.msra.mxu0 0
    %2862 = vmatprep.subr.bf16.mxu0 0
    %2863 = vmatpush1.bf16.xpose.msra.mxu0 0
    %2864 = vmatprep.subr.bf16.mxu0 0
    %2865 = vmatpush1.bf16.xpose.msra.mxu0 0
    %2866 = vmatprep.subr.bf16.mxu0 0
    %2867 = vmatpush1.bf16.xpose.msra.mxu0 0
    %2868 = vmatprep.subr.bf16.mxu0 0
    %2869 = vmatpush1.bf16.xpose.msra.mxu0 0
    %2870 = vmatprep.subr.bf16.mxu0 0
    %2871 = vmatpush1.bf16.xpose.msra.mxu0 0
    %2872 = vmatprep.subr.bf16.mxu0 0
    %2873 = vmatpush1.bf16.xpose.msra.mxu0 0
    %2874 = vmatprep.subr.bf16.mxu0 0
    %2875 = vmatpush1.bf16.xpose.msra.mxu0 0
    %2876 = vmatprep.subr.bf16.mxu0 0
    %2877 = vmatpush1.bf16.xpose.msra.mxu0 0
    %2878 = vmatprep.subr.bf16.mxu0 0
    %2879 = vmatpush1.bf16.xpose.msra.mxu0 0
    %2880 = vmatprep.subr.bf16.mxu0 0
    %2881 = vmatpush1.bf16.xpose.msra.mxu0 0
    %2882 = vmatprep.subr.bf16.mxu0 0
    %2883 = vmatpush1.bf16.xpose.msra.mxu0 0
    %2884 = vmatprep.mubr.bf16.mxu0 %v554
    %2885 = vmatmul.mubr.bf16.gmra.mrb[0].mxu0 %v553
    %v2886 = vpop.f32.mrb[0].mxu0
    %v2887 = vadd.f32 %v2847, %v2886
    %v2888 = vpop.f32.mrb[0].mxu0
    %v2889 = vpop.f32.mrb[0].mxu0
    %v2890 = vpop.f32.mrb[0].mxu0
    %2891 = vdwg.mxu0
    %2892 = vmatprep.subr.bf16.mxu0 %v1755
    %2893 = vmatpush1.bf16.xpose.msra.mxu0 %v1754
    %2894 = vmatprep.subr.bf16.mxu0 %v1834
    %2895 = vmatpush1.bf16.xpose.msra.mxu0 %v1833
    %2896 = vmatprep.subr.bf16.mxu0 %v1913
    %2897 = vmatpush1.bf16.xpose.msra.mxu0 %v1912
    %2898 = vmatprep.subr.bf16.mxu0 %v1992
    %2899 = vmatpush1.bf16.xpose.msra.mxu0 %v1991
    %2900 = vmatprep.subr.bf16.mxu0 0
    %2901 = vmatpush1.bf16.xpose.msra.mxu0 0
    %2902 = vmatprep.subr.bf16.mxu0 0
    %2903 = vmatpush1.bf16.xpose.msra.mxu0 0
    %2904 = vmatprep.subr.bf16.mxu0 0
    %2905 = vmatpush1.bf16.xpose.msra.mxu0 0
    %2906 = vmatprep.subr.bf16.mxu0 0
    %2907 = vmatpush1.bf16.xpose.msra.mxu0 0
    %2908 = vmatprep.subr.bf16.mxu0 0
    %2909 = vmatpush1.bf16.xpose.msra.mxu0 0
    %2910 = vmatprep.subr.bf16.mxu0 0
    %2911 = vmatpush1.bf16.xpose.msra.mxu0 0
    %2912 = vmatprep.subr.bf16.mxu0 0
    %2913 = vmatpush1.bf16.xpose.msra.mxu0 0
    %2914 = vmatprep.subr.bf16.mxu0 0
    %2915 = vmatpush1.bf16.xpose.msra.mxu0 0
    %2916 = vmatprep.subr.bf16.mxu0 0
    %2917 = vmatpush1.bf16.xpose.msra.mxu0 0
    %2918 = vmatprep.subr.bf16.mxu0 0
    %2919 = vmatpush1.bf16.xpose.msra.mxu0 0
    %2920 = vmatprep.subr.bf16.mxu0 0
    %2921 = vmatpush1.bf16.xpose.msra.mxu0 0
    %2922 = vmatprep.subr.bf16.mxu0 0
    %2923 = vmatpush1.bf16.xpose.msra.mxu0 0
    %2924 = vmatprep.mubr.bf16.mxu0 %v556
    %2925 = vmatmul.mubr.bf16.gmra.mrb[0].mxu0 %v555
    %v2926 = vpop.f32.mrb[0].mxu0
    %v2927 = vadd.f32 %v2887, %v2926
    %v2928 = vpop.f32.mrb[0].mxu0
    %v2929 = vpop.f32.mrb[0].mxu0
    %v2930 = vpop.f32.mrb[0].mxu0
    %2931 = vdwg.mxu0
    %2932 = vmatprep.subr.bf16.mxu0 %v1757
    %2933 = vmatpush1.bf16.xpose.msra.mxu0 %v1756
    %2934 = vmatprep.subr.bf16.mxu0 %v1836
    %2935 = vmatpush1.bf16.xpose.msra.mxu0 %v1835
    %2936 = vmatprep.subr.bf16.mxu0 %v1915
    %2937 = vmatpush1.bf16.xpose.msra.mxu0 %v1914
    %2938 = vmatprep.subr.bf16.mxu0 %v1994
    %2939 = vmatpush1.bf16.xpose.msra.mxu0 %v1993
    %2940 = vmatprep.subr.bf16.mxu0 0
    %2941 = vmatpush1.bf16.xpose.msra.mxu0 0
    %2942 = vmatprep.subr.bf16.mxu0 0
    %2943 = vmatpush1.bf16.xpose.msra.mxu0 0
    %2944 = vmatprep.subr.bf16.mxu0 0
    %2945 = vmatpush1.bf16.xpose.msra.mxu0 0
    %2946 = vmatprep.subr.bf16.mxu0 0
    %2947 = vmatpush1.bf16.xpose.msra.mxu0 0
    %2948 = vmatprep.subr.bf16.mxu0 0
    %2949 = vmatpush1.bf16.xpose.msra.mxu0 0
    %2950 = vmatprep.subr.bf16.mxu0 0
    %2951 = vmatpush1.bf16.xpose.msra.mxu0 0
    %2952 = vmatprep.subr.bf16.mxu0 0
    %2953 = vmatpush1.bf16.xpose.msra.mxu0 0
    %2954 = vmatprep.subr.bf16.mxu0 0
    %2955 = vmatpush1.bf16.xpose.msra.mxu0 0
    %2956 = vmatprep.subr.bf16.mxu0 0
    %2957 = vmatpush1.bf16.xpose.msra.mxu0 0
    %2958 = vmatprep.subr.bf16.mxu0 0
    %2959 = vmatpush1.bf16.xpose.msra.mxu0 0
    %2960 = vmatprep.subr.bf16.mxu0 0
    %2961 = vmatpush1.bf16.xpose.msra.mxu0 0
    %2962 = vmatprep.subr.bf16.mxu0 0
    %2963 = vmatpush1.bf16.xpose.msra.mxu0 0
    %2964 = vmatprep.mubr.bf16.mxu0 %v558
    %2965 = vmatmul.mubr.bf16.gmra.mrb[0].mxu0 %v557
    %v2966 = vpop.f32.mrb[0].mxu0
    %v2967 = vadd.f32 %v2927, %v2966
    %v2968 = vpop.f32.mrb[0].mxu0
    %v2969 = vpop.f32.mrb[0].mxu0
    %v2970 = vpop.f32.mrb[0].mxu0
    %2971 = vdwg.mxu0
    %2972 = vmatprep.subr.bf16.mxu0 %v1759
    %2973 = vmatpush1.bf16.xpose.msra.mxu0 %v1758
    %2974 = vmatprep.subr.bf16.mxu0 %v1838
    %2975 = vmatpush1.bf16.xpose.msra.mxu0 %v1837
    %2976 = vmatprep.subr.bf16.mxu0 %v1917
    %2977 = vmatpush1.bf16.xpose.msra.mxu0 %v1916
    %2978 = vmatprep.subr.bf16.mxu0 %v1996
    %2979 = vmatpush1.bf16.xpose.msra.mxu0 %v1995
    %2980 = vmatprep.subr.bf16.mxu0 0
    %2981 = vmatpush1.bf16.xpose.msra.mxu0 0
    %2982 = vmatprep.subr.bf16.mxu0 0
    %2983 = vmatpush1.bf16.xpose.msra.mxu0 0
    %2984 = vmatprep.subr.bf16.mxu0 0
    %2985 = vmatpush1.bf16.xpose.msra.mxu0 0
    %2986 = vmatprep.subr.bf16.mxu0 0
    %2987 = vmatpush1.bf16.xpose.msra.mxu0 0
    %2988 = vmatprep.subr.bf16.mxu0 0
    %2989 = vmatpush1.bf16.xpose.msra.mxu0 0
    %2990 = vmatprep.subr.bf16.mxu0 0
    %2991 = vmatpush1.bf16.xpose.msra.mxu0 0
    %2992 = vmatprep.subr.bf16.mxu0 0
    %2993 = vmatpush1.bf16.xpose.msra.mxu0 0
    %2994 = vmatprep.subr.bf16.mxu0 0
    %2995 = vmatpush1.bf16.xpose.msra.mxu0 0
    %2996 = vmatprep.subr.bf16.mxu0 0
    %2997 = vmatpush1.bf16.xpose.msra.mxu0 0
    %2998 = vmatprep.subr.bf16.mxu0 0
    %2999 = vmatpush1.bf16.xpose.msra.mxu0 0
    %3000 = vmatprep.subr.bf16.mxu0 0
    %3001 = vmatpush1.bf16.xpose.msra.mxu0 0
    %3002 = vmatprep.subr.bf16.mxu0 0
    %3003 = vmatpush1.bf16.xpose.msra.mxu0 0
    %3004 = vmatprep.mubr.bf16.mxu0 %v560
    %3005 = vmatmul.mubr.bf16.gmra.mrb[0].mxu0 %v559
    %v3006 = vpop.f32.mrb[0].mxu0
    %v3007 = vadd.f32 %v2967, %v3006
    %v3008 = vpop.f32.mrb[0].mxu0
    %v3009 = vpop.f32.mrb[0].mxu0
    %v3010 = vpop.f32.mrb[0].mxu0
    %3011 = vdwg.mxu0
    %3012 = vmatprep.subr.bf16.mxu0 %v1761
    %3013 = vmatpush1.bf16.xpose.msra.mxu0 %v1760
    %3014 = vmatprep.subr.bf16.mxu0 %v1840
    %3015 = vmatpush1.bf16.xpose.msra.mxu0 %v1839
    %3016 = vmatprep.subr.bf16.mxu0 %v1919
    %3017 = vmatpush1.bf16.xpose.msra.mxu0 %v1918
    %3018 = vmatprep.subr.bf16.mxu0 %v1998
    %3019 = vmatpush1.bf16.xpose.msra.mxu0 %v1997
    %3020 = vmatprep.subr.bf16.mxu0 0
    %3021 = vmatpush1.bf16.xpose.msra.mxu0 0
    %3022 = vmatprep.subr.bf16.mxu0 0
    %3023 = vmatpush1.bf16.xpose.msra.mxu0 0
    %3024 = vmatprep.subr.bf16.mxu0 0
    %3025 = vmatpush1.bf16.xpose.msra.mxu0 0
    %3026 = vmatprep.subr.bf16.mxu0 0
    %3027 = vmatpush1.bf16.xpose.msra.mxu0 0
    %3028 = vmatprep.subr.bf16.mxu0 0
    %3029 = vmatpush1.bf16.xpose.msra.mxu0 0
    %3030 = vmatprep.subr.bf16.mxu0 0
    %3031 = vmatpush1.bf16.xpose.msra.mxu0 0
    %3032 = vmatprep.subr.bf16.mxu0 0
    %3033 = vmatpush1.bf16.xpose.msra.mxu0 0
    %3034 = vmatprep.subr.bf16.mxu0 0
    %3035 = vmatpush1.bf16.xpose.msra.mxu0 0
    %3036 = vmatprep.subr.bf16.mxu0 0
    %3037 = vmatpush1.bf16.xpose.msra.mxu0 0
    %3038 = vmatprep.subr.bf16.mxu0 0
    %3039 = vmatpush1.bf16.xpose.msra.mxu0 0
    %3040 = vmatprep.subr.bf16.mxu0 0
    %3041 = vmatpush1.bf16.xpose.msra.mxu0 0
    %3042 = vmatprep.subr.bf16.mxu0 0
    %3043 = vmatpush1.bf16.xpose.msra.mxu0 0
    %3044 = vmatprep.mubr.bf16.mxu0 %v562
    %3045 = vmatmul.mubr.bf16.gmra.mrb[0].mxu0 %v561
    %v3046 = vpop.f32.mrb[0].mxu0
    %v3047 = vadd.f32 %v3007, %v3046
    %v3048 = vpop.f32.mrb[0].mxu0
    %v3049 = vpop.f32.mrb[0].mxu0
    %v3050 = vpop.f32.mrb[0].mxu0
    %3051 = vdwg.mxu0
    %3052 = vmatprep.subr.bf16.mxu0 %v1763
    %3053 = vmatpush1.bf16.xpose.msra.mxu0 %v1762
    %3054 = vmatprep.subr.bf16.mxu0 %v1842
    %3055 = vmatpush1.bf16.xpose.msra.mxu0 %v1841
    %3056 = vmatprep.subr.bf16.mxu0 %v1921
    %3057 = vmatpush1.bf16.xpose.msra.mxu0 %v1920
    %3058 = vmatprep.subr.bf16.mxu0 %v2000
    %3059 = vmatpush1.bf16.xpose.msra.mxu0 %v1999
    %3060 = vmatprep.subr.bf16.mxu0 0
    %3061 = vmatpush1.bf16.xpose.msra.mxu0 0
    %3062 = vmatprep.subr.bf16.mxu0 0
    %3063 = vmatpush1.bf16.xpose.msra.mxu0 0
    %3064 = vmatprep.subr.bf16.mxu0 0
    %3065 = vmatpush1.bf16.xpose.msra.mxu0 0
    %3066 = vmatprep.subr.bf16.mxu0 0
    %3067 = vmatpush1.bf16.xpose.msra.mxu0 0
    %3068 = vmatprep.subr.bf16.mxu0 0
    %3069 = vmatpush1.bf16.xpose.msra.mxu0 0
    %3070 = vmatprep.subr.bf16.mxu0 0
    %3071 = vmatpush1.bf16.xpose.msra.mxu0 0
    %3072 = vmatprep.subr.bf16.mxu0 0
    %3073 = vmatpush1.bf16.xpose.msra.mxu0 0
    %3074 = vmatprep.subr.bf16.mxu0 0
    %3075 = vmatpush1.bf16.xpose.msra.mxu0 0
    %3076 = vmatprep.subr.bf16.mxu0 0
    %3077 = vmatpush1.bf16.xpose.msra.mxu0 0
    %3078 = vmatprep.subr.bf16.mxu0 0
    %3079 = vmatpush1.bf16.xpose.msra.mxu0 0
    %3080 = vmatprep.subr.bf16.mxu0 0
    %3081 = vmatpush1.bf16.xpose.msra.mxu0 0
    %3082 = vmatprep.subr.bf16.mxu0 0
    %3083 = vmatpush1.bf16.xpose.msra.mxu0 0
    %3084 = vmatprep.mubr.bf16.mxu0 %v564
    %3085 = vmatmul.mubr.bf16.gmra.mrb[0].mxu0 %v563
    %v3086 = vpop.f32.mrb[0].mxu0
    %v3087 = vadd.f32 %v3047, %v3086
    %v3088 = vpop.f32.mrb[0].mxu0
    %v3089 = vpop.f32.mrb[0].mxu0
    %v3090 = vpop.f32.mrb[0].mxu0
    %3091 = vdwg.mxu0
    %3092 = vmatprep.subr.bf16.mxu0 %v1765
    %3093 = vmatpush1.bf16.xpose.msra.mxu0 %v1764
    %3094 = vmatprep.subr.bf16.mxu0 %v1844
    %3095 = vmatpush1.bf16.xpose.msra.mxu0 %v1843
    %3096 = vmatprep.subr.bf16.mxu0 %v1923
    %3097 = vmatpush1.bf16.xpose.msra.mxu0 %v1922
    %3098 = vmatprep.subr.bf16.mxu0 %v2002
    %3099 = vmatpush1.bf16.xpose.msra.mxu0 %v2001
    %3100 = vmatprep.subr.bf16.mxu0 0
    %3101 = vmatpush1.bf16.xpose.msra.mxu0 0
    %3102 = vmatprep.subr.bf16.mxu0 0
    %3103 = vmatpush1.bf16.xpose.msra.mxu0 0
    %3104 = vmatprep.subr.bf16.mxu0 0
    %3105 = vmatpush1.bf16.xpose.msra.mxu0 0
    %3106 = vmatprep.subr.bf16.mxu0 0
    %3107 = vmatpush1.bf16.xpose.msra.mxu0 0
    %3108 = vmatprep.subr.bf16.mxu0 0
    %3109 = vmatpush1.bf16.xpose.msra.mxu0 0
    %3110 = vmatprep.subr.bf16.mxu0 0
    %3111 = vmatpush1.bf16.xpose.msra.mxu0 0
    %3112 = vmatprep.subr.bf16.mxu0 0
    %3113 = vmatpush1.bf16.xpose.msra.mxu0 0
    %3114 = vmatprep.subr.bf16.mxu0 0
    %3115 = vmatpush1.bf16.xpose.msra.mxu0 0
    %3116 = vmatprep.subr.bf16.mxu0 0
    %3117 = vmatpush1.bf16.xpose.msra.mxu0 0
    %3118 = vmatprep.subr.bf16.mxu0 0
    %3119 = vmatpush1.bf16.xpose.msra.mxu0 0
    %3120 = vmatprep.subr.bf16.mxu0 0
    %3121 = vmatpush1.bf16.xpose.msra.mxu0 0
    %3122 = vmatprep.subr.bf16.mxu0 0
    %3123 = vmatpush1.bf16.xpose.msra.mxu0 0
    %3124 = vmatprep.mubr.bf16.mxu0 %v566
    %3125 = vmatmul.mubr.bf16.gmra.mrb[0].mxu0 %v565
    %v3126 = vpop.f32.mrb[0].mxu0
    %v3127 = vadd.f32 %v3087, %v3126
    %v3128 = vpop.f32.mrb[0].mxu0
    %v3129 = vpop.f32.mrb[0].mxu0
    %v3130 = vpop.f32.mrb[0].mxu0
    %3131 = vdwg.mxu0
    %3132 = vmatprep.subr.bf16.mxu0 %v1767
    %3133 = vmatpush1.bf16.xpose.msra.mxu0 %v1766
    %3134 = vmatprep.subr.bf16.mxu0 %v1846
    %3135 = vmatpush1.bf16.xpose.msra.mxu0 %v1845
    %3136 = vmatprep.subr.bf16.mxu0 %v1925
    %3137 = vmatpush1.bf16.xpose.msra.mxu0 %v1924
    %3138 = vmatprep.subr.bf16.mxu0 %v2004
    %3139 = vmatpush1.bf16.xpose.msra.mxu0 %v2003
    %3140 = vmatprep.subr.bf16.mxu0 0
    %3141 = vmatpush1.bf16.xpose.msra.mxu0 0
    %3142 = vmatprep.subr.bf16.mxu0 0
    %3143 = vmatpush1.bf16.xpose.msra.mxu0 0
    %3144 = vmatprep.subr.bf16.mxu0 0
    %3145 = vmatpush1.bf16.xpose.msra.mxu0 0
    %3146 = vmatprep.subr.bf16.mxu0 0
    %3147 = vmatpush1.bf16.xpose.msra.mxu0 0
    %3148 = vmatprep.subr.bf16.mxu0 0
    %3149 = vmatpush1.bf16.xpose.msra.mxu0 0
    %3150 = vmatprep.subr.bf16.mxu0 0
    %3151 = vmatpush1.bf16.xpose.msra.mxu0 0
    %3152 = vmatprep.subr.bf16.mxu0 0
    %3153 = vmatpush1.bf16.xpose.msra.mxu0 0
    %3154 = vmatprep.subr.bf16.mxu0 0
    %3155 = vmatpush1.bf16.xpose.msra.mxu0 0
    %3156 = vmatprep.subr.bf16.mxu0 0
    %3157 = vmatpush1.bf16.xpose.msra.mxu0 0
    %3158 = vmatprep.subr.bf16.mxu0 0
    %3159 = vmatpush1.bf16.xpose.msra.mxu0 0
    %3160 = vmatprep.subr.bf16.mxu0 0
    %3161 = vmatpush1.bf16.xpose.msra.mxu0 0
    %3162 = vmatprep.subr.bf16.mxu0 0
    %3163 = vmatpush1.bf16.xpose.msra.mxu0 0
    %3164 = vmatprep.mubr.bf16.mxu0 %v568
    %3165 = vmatmul.mubr.bf16.gmra.mrb[0].mxu0 %v567
    %v3166 = vpop.f32.mrb[0].mxu0
    %v3167 = vadd.f32 %v3127, %v3166
    %v3168 = vpop.f32.mrb[0].mxu0
    %v3169 = vpop.f32.mrb[0].mxu0
    %v3170 = vpop.f32.mrb[0].mxu0
    %3171 = vdwg.mxu0
    %3172 = vmatprep.subr.bf16.mxu0 %v1769
    %3173 = vmatpush1.bf16.xpose.msra.mxu0 %v1768
    %3174 = vmatprep.subr.bf16.mxu0 %v1848
    %3175 = vmatpush1.bf16.xpose.msra.mxu0 %v1847
    %3176 = vmatprep.subr.bf16.mxu0 %v1927
    %3177 = vmatpush1.bf16.xpose.msra.mxu0 %v1926
    %3178 = vmatprep.subr.bf16.mxu0 %v2006
    %3179 = vmatpush1.bf16.xpose.msra.mxu0 %v2005
    %3180 = vmatprep.subr.bf16.mxu0 0
    %3181 = vmatpush1.bf16.xpose.msra.mxu0 0
    %3182 = vmatprep.subr.bf16.mxu0 0
    %3183 = vmatpush1.bf16.xpose.msra.mxu0 0
    %3184 = vmatprep.subr.bf16.mxu0 0
    %3185 = vmatpush1.bf16.xpose.msra.mxu0 0
    %3186 = vmatprep.subr.bf16.mxu0 0
    %3187 = vmatpush1.bf16.xpose.msra.mxu0 0
    %3188 = vmatprep.subr.bf16.mxu0 0
    %3189 = vmatpush1.bf16.xpose.msra.mxu0 0
    %3190 = vmatprep.subr.bf16.mxu0 0
    %3191 = vmatpush1.bf16.xpose.msra.mxu0 0
    %3192 = vmatprep.subr.bf16.mxu0 0
    %3193 = vmatpush1.bf16.xpose.msra.mxu0 0
    %3194 = vmatprep.subr.bf16.mxu0 0
    %3195 = vmatpush1.bf16.xpose.msra.mxu0 0
    %3196 = vmatprep.subr.bf16.mxu0 0
    %3197 = vmatpush1.bf16.xpose.msra.mxu0 0
    %3198 = vmatprep.subr.bf16.mxu0 0
    %3199 = vmatpush1.bf16.xpose.msra.mxu0 0
    %3200 = vmatprep.subr.bf16.mxu0 0
    %3201 = vmatpush1.bf16.xpose.msra.mxu0 0
    %3202 = vmatprep.subr.bf16.mxu0 0
    %3203 = vmatpush1.bf16.xpose.msra.mxu0 0
    %3204 = vmatprep.mubr.bf16.mxu0 %v570
    %3205 = vmatmul.mubr.bf16.gmra.mrb[0].mxu0 %v569
    %v3206 = vpop.f32.mrb[0].mxu0
    %v3207 = vadd.f32 %v3167, %v3206
    %v3208 = vpop.f32.mrb[0].mxu0
    %v3209 = vpop.f32.mrb[0].mxu0
    %v3210 = vpop.f32.mrb[0].mxu0
    %3211 = vdwg.mxu0
    %3212 = vmatprep.subr.bf16.mxu0 %v1771
    %3213 = vmatpush1.bf16.xpose.msra.mxu0 %v1770
    %3214 = vmatprep.subr.bf16.mxu0 %v1850
    %3215 = vmatpush1.bf16.xpose.msra.mxu0 %v1849
    %3216 = vmatprep.subr.bf16.mxu0 %v1929
    %3217 = vmatpush1.bf16.xpose.msra.mxu0 %v1928
    %3218 = vmatprep.subr.bf16.mxu0 %v2008
    %3219 = vmatpush1.bf16.xpose.msra.mxu0 %v2007
    %3220 = vmatprep.subr.bf16.mxu0 0
    %3221 = vmatpush1.bf16.xpose.msra.mxu0 0
    %3222 = vmatprep.subr.bf16.mxu0 0
    %3223 = vmatpush1.bf16.xpose.msra.mxu0 0
    %3224 = vmatprep.subr.bf16.mxu0 0
    %3225 = vmatpush1.bf16.xpose.msra.mxu0 0
    %3226 = vmatprep.subr.bf16.mxu0 0
    %3227 = vmatpush1.bf16.xpose.msra.mxu0 0
    %3228 = vmatprep.subr.bf16.mxu0 0
    %3229 = vmatpush1.bf16.xpose.msra.mxu0 0
    %3230 = vmatprep.subr.bf16.mxu0 0
    %3231 = vmatpush1.bf16.xpose.msra.mxu0 0
    %3232 = vmatprep.subr.bf16.mxu0 0
    %3233 = vmatpush1.bf16.xpose.msra.mxu0 0
    %3234 = vmatprep.subr.bf16.mxu0 0
    %3235 = vmatpush1.bf16.xpose.msra.mxu0 0
    %3236 = vmatprep.subr.bf16.mxu0 0
    %3237 = vmatpush1.bf16.xpose.msra.mxu0 0
    %3238 = vmatprep.subr.bf16.mxu0 0
    %3239 = vmatpush1.bf16.xpose.msra.mxu0 0
    %3240 = vmatprep.subr.bf16.mxu0 0
    %3241 = vmatpush1.bf16.xpose.msra.mxu0 0
    %3242 = vmatprep.subr.bf16.mxu0 0
    %3243 = vmatpush1.bf16.xpose.msra.mxu0 0
    %3244 = vmatprep.mubr.bf16.mxu0 %v572
    %3245 = vmatmul.mubr.bf16.gmra.mrb[0].mxu0 %v571
    %v3246 = vpop.f32.mrb[0].mxu0
    %v3247 = vadd.f32 %v3207, %v3246
    %v3248 = vpop.f32.mrb[0].mxu0
    %v3249 = vpop.f32.mrb[0].mxu0
    %v3250 = vpop.f32.mrb[0].mxu0
    %3251 = vdwg.mxu0
    %3252 = vmatprep.subr.bf16.mxu0 %v1773
    %3253 = vmatpush1.bf16.xpose.msra.mxu0 %v1772
    %3254 = vmatprep.subr.bf16.mxu0 %v1852
    %3255 = vmatpush1.bf16.xpose.msra.mxu0 %v1851
    %3256 = vmatprep.subr.bf16.mxu0 %v1931
    %3257 = vmatpush1.bf16.xpose.msra.mxu0 %v1930
    %3258 = vmatprep.subr.bf16.mxu0 %v2010
    %3259 = vmatpush1.bf16.xpose.msra.mxu0 %v2009
    %3260 = vmatprep.subr.bf16.mxu0 0
    %3261 = vmatpush1.bf16.xpose.msra.mxu0 0
    %3262 = vmatprep.subr.bf16.mxu0 0
    %3263 = vmatpush1.bf16.xpose.msra.mxu0 0
    %3264 = vmatprep.subr.bf16.mxu0 0
    %3265 = vmatpush1.bf16.xpose.msra.mxu0 0
    %3266 = vmatprep.subr.bf16.mxu0 0
    %3267 = vmatpush1.bf16.xpose.msra.mxu0 0
    %3268 = vmatprep.subr.bf16.mxu0 0
    %3269 = vmatpush1.bf16.xpose.msra.mxu0 0
    %3270 = vmatprep.subr.bf16.mxu0 0
    %3271 = vmatpush1.bf16.xpose.msra.mxu0 0
    %3272 = vmatprep.subr.bf16.mxu0 0
    %3273 = vmatpush1.bf16.xpose.msra.mxu0 0
    %3274 = vmatprep.subr.bf16.mxu0 0
    %3275 = vmatpush1.bf16.xpose.msra.mxu0 0
    %3276 = vmatprep.subr.bf16.mxu0 0
    %3277 = vmatpush1.bf16.xpose.msra.mxu0 0
    %3278 = vmatprep.subr.bf16.mxu0 0
    %3279 = vmatpush1.bf16.xpose.msra.mxu0 0
    %3280 = vmatprep.subr.bf16.mxu0 0
    %3281 = vmatpush1.bf16.xpose.msra.mxu0 0
    %3282 = vmatprep.subr.bf16.mxu0 0
    %3283 = vmatpush1.bf16.xpose.msra.mxu0 0
    %3284 = vmatprep.mubr.bf16.mxu0 %v574
    %3285 = vmatmul.mubr.bf16.gmra.mrb[0].mxu0 %v573
    %v3286 = vpop.f32.mrb[0].mxu0
    %v3287 = vadd.f32 %v3247, %v3286
    %v3288 = vpop.f32.mrb[0].mxu0
    %v3289 = vpop.f32.mrb[0].mxu0
    %v3290 = vpop.f32.mrb[0].mxu0
    %3291 = vdwg.mxu0
    %3292 = vmatprep.subr.bf16.mxu0 %v1775
    %3293 = vmatpush1.bf16.xpose.msra.mxu0 %v1774
    %3294 = vmatprep.subr.bf16.mxu0 %v1854
    %3295 = vmatpush1.bf16.xpose.msra.mxu0 %v1853
    %3296 = vmatprep.subr.bf16.mxu0 %v1933
    %3297 = vmatpush1.bf16.xpose.msra.mxu0 %v1932
    %3298 = vmatprep.subr.bf16.mxu0 %v2012
    %3299 = vmatpush1.bf16.xpose.msra.mxu0 %v2011
    %3300 = vmatprep.subr.bf16.mxu0 0
    %3301 = vmatpush1.bf16.xpose.msra.mxu0 0
    %3302 = vmatprep.subr.bf16.mxu0 0
    %3303 = vmatpush1.bf16.xpose.msra.mxu0 0
    %3304 = vmatprep.subr.bf16.mxu0 0
    %3305 = vmatpush1.bf16.xpose.msra.mxu0 0
    %3306 = vmatprep.subr.bf16.mxu0 0
    %3307 = vmatpush1.bf16.xpose.msra.mxu0 0
    %3308 = vmatprep.subr.bf16.mxu0 0
    %3309 = vmatpush1.bf16.xpose.msra.mxu0 0
    %3310 = vmatprep.subr.bf16.mxu0 0
    %3311 = vmatpush1.bf16.xpose.msra.mxu0 0
    %3312 = vmatprep.subr.bf16.mxu0 0
    %3313 = vmatpush1.bf16.xpose.msra.mxu0 0
    %3314 = vmatprep.subr.bf16.mxu0 0
    %3315 = vmatpush1.bf16.xpose.msra.mxu0 0
    %3316 = vmatprep.subr.bf16.mxu0 0
    %3317 = vmatpush1.bf16.xpose.msra.mxu0 0
    %3318 = vmatprep.subr.bf16.mxu0 0
    %3319 = vmatpush1.bf16.xpose.msra.mxu0 0
    %3320 = vmatprep.subr.bf16.mxu0 0
    %3321 = vmatpush1.bf16.xpose.msra.mxu0 0
    %3322 = vmatprep.subr.bf16.mxu0 0
    %3323 = vmatpush1.bf16.xpose.msra.mxu0 0
    %3324 = vmatprep.mubr.bf16.mxu0 %v576
    %3325 = vmatmul.mubr.bf16.gmra.mrb[0].mxu0 %v575
    %v3326 = vpop.f32.mrb[0].mxu0
    %v3327 = vadd.f32 %v3287, %v3326
    %v3328 = vpop.f32.mrb[0].mxu0
    %v3329 = vpop.f32.mrb[0].mxu0
    %v3330 = vpop.f32.mrb[0].mxu0
    %3331 = vdwg.mxu0
    %3332 = vmatprep.subr.bf16.mxu0 %v1777
    %3333 = vmatpush1.bf16.xpose.msra.mxu0 %v1776
    %3334 = vmatprep.subr.bf16.mxu0 %v1856
    %3335 = vmatpush1.bf16.xpose.msra.mxu0 %v1855
    %3336 = vmatprep.subr.bf16.mxu0 %v1935
    %3337 = vmatpush1.bf16.xpose.msra.mxu0 %v1934
    %3338 = vmatprep.subr.bf16.mxu0 %v2014
    %3339 = vmatpush1.bf16.xpose.msra.mxu0 %v2013
    %3340 = vmatprep.subr.bf16.mxu0 0
    %3341 = vmatpush1.bf16.xpose.msra.mxu0 0
    %3342 = vmatprep.subr.bf16.mxu0 0
    %3343 = vmatpush1.bf16.xpose.msra.mxu0 0
    %3344 = vmatprep.subr.bf16.mxu0 0
    %3345 = vmatpush1.bf16.xpose.msra.mxu0 0
    %3346 = vmatprep.subr.bf16.mxu0 0
    %3347 = vmatpush1.bf16.xpose.msra.mxu0 0
    %3348 = vmatprep.subr.bf16.mxu0 0
    %3349 = vmatpush1.bf16.xpose.msra.mxu0 0
    %3350 = vmatprep.subr.bf16.mxu0 0
    %3351 = vmatpush1.bf16.xpose.msra.mxu0 0
    %3352 = vmatprep.subr.bf16.mxu0 0
    %3353 = vmatpush1.bf16.xpose.msra.mxu0 0
    %3354 = vmatprep.subr.bf16.mxu0 0
    %3355 = vmatpush1.bf16.xpose.msra.mxu0 0
    %3356 = vmatprep.subr.bf16.mxu0 0
    %3357 = vmatpush1.bf16.xpose.msra.mxu0 0
    %3358 = vmatprep.subr.bf16.mxu0 0
    %3359 = vmatpush1.bf16.xpose.msra.mxu0 0
    %3360 = vmatprep.subr.bf16.mxu0 0
    %3361 = vmatpush1.bf16.xpose.msra.mxu0 0
    %3362 = vmatprep.subr.bf16.mxu0 0
    %3363 = vmatpush1.bf16.xpose.msra.mxu0 0
    %3364 = vmatprep.mubr.bf16.mxu0 %v578
    %3365 = vmatmul.mubr.bf16.gmra.mrb[0].mxu0 %v577
    %v3366 = vpop.f32.mrb[0].mxu0
    %v3367 = vadd.f32 %v3327, %v3366
    %v3368 = vpop.f32.mrb[0].mxu0
    %v3369 = vpop.f32.mrb[0].mxu0
    %v3370 = vpop.f32.mrb[0].mxu0
    %3371 = vdwg.mxu0
    %3372 = vmatprep.subr.bf16.mxu0 %v1779
    %3373 = vmatpush1.bf16.xpose.msra.mxu0 %v1778
    %3374 = vmatprep.subr.bf16.mxu0 %v1858
    %3375 = vmatpush1.bf16.xpose.msra.mxu0 %v1857
    %3376 = vmatprep.subr.bf16.mxu0 %v1937
    %3377 = vmatpush1.bf16.xpose.msra.mxu0 %v1936
    %3378 = vmatprep.subr.bf16.mxu0 %v2016
    %3379 = vmatpush1.bf16.xpose.msra.mxu0 %v2015
    %3380 = vmatprep.subr.bf16.mxu0 0
    %3381 = vmatpush1.bf16.xpose.msra.mxu0 0
    %3382 = vmatprep.subr.bf16.mxu0 0
    %3383 = vmatpush1.bf16.xpose.msra.mxu0 0
    %3384 = vmatprep.subr.bf16.mxu0 0
    %3385 = vmatpush1.bf16.xpose.msra.mxu0 0
    %3386 = vmatprep.subr.bf16.mxu0 0
    %3387 = vmatpush1.bf16.xpose.msra.mxu0 0
    %3388 = vmatprep.subr.bf16.mxu0 0
    %3389 = vmatpush1.bf16.xpose.msra.mxu0 0
    %3390 = vmatprep.subr.bf16.mxu0 0
    %3391 = vmatpush1.bf16.xpose.msra.mxu0 0
    %3392 = vmatprep.subr.bf16.mxu0 0
    %3393 = vmatpush1.bf16.xpose.msra.mxu0 0
    %3394 = vmatprep.subr.bf16.mxu0 0
    %3395 = vmatpush1.bf16.xpose.msra.mxu0 0
    %3396 = vmatprep.subr.bf16.mxu0 0
    %3397 = vmatpush1.bf16.xpose.msra.mxu0 0
    %3398 = vmatprep.subr.bf16.mxu0 0
    %3399 = vmatpush1.bf16.xpose.msra.mxu0 0
    %3400 = vmatprep.subr.bf16.mxu0 0
    %3401 = vmatpush1.bf16.xpose.msra.mxu0 0
    %3402 = vmatprep.subr.bf16.mxu0 0
    %3403 = vmatpush1.bf16.xpose.msra.mxu0 0
    %3404 = vmatprep.mubr.bf16.mxu0 %v580
    %3405 = vmatmul.mubr.bf16.gmra.mrb[0].mxu0 %v579
    %v3406 = vpop.f32.mrb[0].mxu0
    %v3407 = vadd.f32 %v3367, %v3406
    %v3408 = vpop.f32.mrb[0].mxu0
    %v3409 = vpop.f32.mrb[0].mxu0
    %v3410 = vpop.f32.mrb[0].mxu0
    %3411 = vdwg.mxu0
    %3412 = vmatprep.subr.bf16.mxu0 %v1781
    %3413 = vmatpush1.bf16.xpose.msra.mxu0 %v1780
    %3414 = vmatprep.subr.bf16.mxu0 %v1860
    %3415 = vmatpush1.bf16.xpose.msra.mxu0 %v1859
    %3416 = vmatprep.subr.bf16.mxu0 %v1939
    %3417 = vmatpush1.bf16.xpose.msra.mxu0 %v1938
    %3418 = vmatprep.subr.bf16.mxu0 %v2018
    %3419 = vmatpush1.bf16.xpose.msra.mxu0 %v2017
    %3420 = vmatprep.subr.bf16.mxu0 0
    %3421 = vmatpush1.bf16.xpose.msra.mxu0 0
    %3422 = vmatprep.subr.bf16.mxu0 0
    %3423 = vmatpush1.bf16.xpose.msra.mxu0 0
    %3424 = vmatprep.subr.bf16.mxu0 0
    %3425 = vmatpush1.bf16.xpose.msra.mxu0 0
    %3426 = vmatprep.subr.bf16.mxu0 0
    %3427 = vmatpush1.bf16.xpose.msra.mxu0 0
    %3428 = vmatprep.subr.bf16.mxu0 0
    %3429 = vmatpush1.bf16.xpose.msra.mxu0 0
    %3430 = vmatprep.subr.bf16.mxu0 0
    %3431 = vmatpush1.bf16.xpose.msra.mxu0 0
    %3432 = vmatprep.subr.bf16.mxu0 0
    %3433 = vmatpush1.bf16.xpose.msra.mxu0 0
    %3434 = vmatprep.subr.bf16.mxu0 0
    %3435 = vmatpush1.bf16.xpose.msra.mxu0 0
    %3436 = vmatprep.subr.bf16.mxu0 0
    %3437 = vmatpush1.bf16.xpose.msra.mxu0 0
    %3438 = vmatprep.subr.bf16.mxu0 0
    %3439 = vmatpush1.bf16.xpose.msra.mxu0 0
    %3440 = vmatprep.subr.bf16.mxu0 0
    %3441 = vmatpush1.bf16.xpose.msra.mxu0 0
    %3442 = vmatprep.subr.bf16.mxu0 0
    %3443 = vmatpush1.bf16.xpose.msra.mxu0 0
    %3444 = vmatprep.mubr.bf16.mxu0 %v582
    %3445 = vmatmul.mubr.bf16.gmra.mrb[0].mxu0 %v581
    %v3446 = vpop.f32.mrb[0].mxu0
    %v3447 = vadd.f32 %v3407, %v3446
    %v3448 = vpop.f32.mrb[0].mxu0
    %v3449 = vpop.f32.mrb[0].mxu0
    %v3450 = vpop.f32.mrb[0].mxu0
    %3451 = vdwg.mxu0
    %3452 = vmatprep.subr.bf16.mxu0 %v1783
    %3453 = vmatpush1.bf16.xpose.msra.mxu0 %v1782
    %3454 = vmatprep.subr.bf16.mxu0 %v1862
    %3455 = vmatpush1.bf16.xpose.msra.mxu0 %v1861
    %3456 = vmatprep.subr.bf16.mxu0 %v1941
    %3457 = vmatpush1.bf16.xpose.msra.mxu0 %v1940
    %3458 = vmatprep.subr.bf16.mxu0 %v2020
    %3459 = vmatpush1.bf16.xpose.msra.mxu0 %v2019
    %3460 = vmatprep.subr.bf16.mxu0 0
    %3461 = vmatpush1.bf16.xpose.msra.mxu0 0
    %3462 = vmatprep.subr.bf16.mxu0 0
    %3463 = vmatpush1.bf16.xpose.msra.mxu0 0
    %3464 = vmatprep.subr.bf16.mxu0 0
    %3465 = vmatpush1.bf16.xpose.msra.mxu0 0
    %3466 = vmatprep.subr.bf16.mxu0 0
    %3467 = vmatpush1.bf16.xpose.msra.mxu0 0
    %3468 = vmatprep.subr.bf16.mxu0 0
    %3469 = vmatpush1.bf16.xpose.msra.mxu0 0
    %3470 = vmatprep.subr.bf16.mxu0 0
    %3471 = vmatpush1.bf16.xpose.msra.mxu0 0
    %3472 = vmatprep.subr.bf16.mxu0 0
    %3473 = vmatpush1.bf16.xpose.msra.mxu0 0
    %3474 = vmatprep.subr.bf16.mxu0 0
    %3475 = vmatpush1.bf16.xpose.msra.mxu0 0
    %3476 = vmatprep.subr.bf16.mxu0 0
    %3477 = vmatpush1.bf16.xpose.msra.mxu0 0
    %3478 = vmatprep.subr.bf16.mxu0 0
    %3479 = vmatpush1.bf16.xpose.msra.mxu0 0
    %3480 = vmatprep.subr.bf16.mxu0 0
    %3481 = vmatpush1.bf16.xpose.msra.mxu0 0
    %3482 = vmatprep.subr.bf16.mxu0 0
    %3483 = vmatpush1.bf16.xpose.msra.mxu0 0
    %3484 = vmatprep.mubr.bf16.mxu0 %v584
    %3485 = vmatmul.mubr.bf16.gmra.mrb[0].mxu0 %v583
    %v3486 = vpop.f32.mrb[0].mxu0
    %v3487 = vadd.f32 %v3447, %v3486
    %v3488 = vpop.f32.mrb[0].mxu0
    %v3489 = vpop.f32.mrb[0].mxu0
    %v3490 = vpop.f32.mrb[0].mxu0
    %3491 = vdwg.mxu0
    %3492 = vmatprep.subr.bf16.mxu0 %v1785
    %3493 = vmatpush1.bf16.xpose.msra.mxu0 %v1784
    %3494 = vmatprep.subr.bf16.mxu0 %v1864
    %3495 = vmatpush1.bf16.xpose.msra.mxu0 %v1863
    %3496 = vmatprep.subr.bf16.mxu0 %v1943
    %3497 = vmatpush1.bf16.xpose.msra.mxu0 %v1942
    %3498 = vmatprep.subr.bf16.mxu0 %v2022
    %3499 = vmatpush1.bf16.xpose.msra.mxu0 %v2021
    %3500 = vmatprep.subr.bf16.mxu0 0
    %3501 = vmatpush1.bf16.xpose.msra.mxu0 0
    %3502 = vmatprep.subr.bf16.mxu0 0
    %3503 = vmatpush1.bf16.xpose.msra.mxu0 0
    %3504 = vmatprep.subr.bf16.mxu0 0
    %3505 = vmatpush1.bf16.xpose.msra.mxu0 0
    %3506 = vmatprep.subr.bf16.mxu0 0
    %3507 = vmatpush1.bf16.xpose.msra.mxu0 0
    %3508 = vmatprep.subr.bf16.mxu0 0
    %3509 = vmatpush1.bf16.xpose.msra.mxu0 0
    %3510 = vmatprep.subr.bf16.mxu0 0
    %3511 = vmatpush1.bf16.xpose.msra.mxu0 0
    %3512 = vmatprep.subr.bf16.mxu0 0
    %3513 = vmatpush1.bf16.xpose.msra.mxu0 0
    %3514 = vmatprep.subr.bf16.mxu0 0
    %3515 = vmatpush1.bf16.xpose.msra.mxu0 0
    %3516 = vmatprep.subr.bf16.mxu0 0
    %3517 = vmatpush1.bf16.xpose.msra.mxu0 0
    %3518 = vmatprep.subr.bf16.mxu0 0
    %3519 = vmatpush1.bf16.xpose.msra.mxu0 0
    %3520 = vmatprep.subr.bf16.mxu0 0
    %3521 = vmatpush1.bf16.xpose.msra.mxu0 0
    %3522 = vmatprep.subr.bf16.mxu0 0
    %3523 = vmatpush1.bf16.xpose.msra.mxu0 0
    %3524 = vmatprep.mubr.bf16.mxu0 %v586
    %3525 = vmatmul.mubr.bf16.gmra.mrb[0].mxu0 %v585
    %v3526 = vpop.f32.mrb[0].mxu0
    %v3527 = vadd.f32 %v3487, %v3526
    %v3528 = vpop.f32.mrb[0].mxu0
    %v3529 = vpop.f32.mrb[0].mxu0
    %v3530 = vpop.f32.mrb[0].mxu0
    %3531 = vdwg.mxu0
    %3532 = vmatprep.subr.bf16.mxu0 %v1787
    %3533 = vmatpush1.bf16.xpose.msra.mxu0 %v1786
    %3534 = vmatprep.subr.bf16.mxu0 %v1866
    %3535 = vmatpush1.bf16.xpose.msra.mxu0 %v1865
    %3536 = vmatprep.subr.bf16.mxu0 %v1945
    %3537 = vmatpush1.bf16.xpose.msra.mxu0 %v1944
    %3538 = vmatprep.subr.bf16.mxu0 %v2024
    %3539 = vmatpush1.bf16.xpose.msra.mxu0 %v2023
    %3540 = vmatprep.subr.bf16.mxu0 0
    %3541 = vmatpush1.bf16.xpose.msra.mxu0 0
    %3542 = vmatprep.subr.bf16.mxu0 0
    %3543 = vmatpush1.bf16.xpose.msra.mxu0 0
    %3544 = vmatprep.subr.bf16.mxu0 0
    %3545 = vmatpush1.bf16.xpose.msra.mxu0 0
    %3546 = vmatprep.subr.bf16.mxu0 0
    %3547 = vmatpush1.bf16.xpose.msra.mxu0 0
    %3548 = vmatprep.subr.bf16.mxu0 0
    %3549 = vmatpush1.bf16.xpose.msra.mxu0 0
    %3550 = vmatprep.subr.bf16.mxu0 0
    %3551 = vmatpush1.bf16.xpose.msra.mxu0 0
    %3552 = vmatprep.subr.bf16.mxu0 0
    %3553 = vmatpush1.bf16.xpose.msra.mxu0 0
    %3554 = vmatprep.subr.bf16.mxu0 0
    %3555 = vmatpush1.bf16.xpose.msra.mxu0 0
    %3556 = vmatprep.subr.bf16.mxu0 0
    %3557 = vmatpush1.bf16.xpose.msra.mxu0 0
    %3558 = vmatprep.subr.bf16.mxu0 0
    %3559 = vmatpush1.bf16.xpose.msra.mxu0 0
    %3560 = vmatprep.subr.bf16.mxu0 0
    %3561 = vmatpush1.bf16.xpose.msra.mxu0 0
    %3562 = vmatprep.subr.bf16.mxu0 0
    %3563 = vmatpush1.bf16.xpose.msra.mxu0 0
    %3564 = vmatprep.mubr.bf16.mxu0 %v588
    %3565 = vmatmul.mubr.bf16.gmra.mrb[0].mxu0 %v587
    %v3566 = vpop.f32.mrb[0].mxu0
    %v3567 = vadd.f32 %v3527, %v3566
    %v3568 = vpop.f32.mrb[0].mxu0
    %v3569 = vpop.f32.mrb[0].mxu0
    %v3570 = vpop.f32.mrb[0].mxu0
    %3571 = vdwg.mxu0
    %3572 = vmatprep.subr.bf16.mxu0 %v1789
    %3573 = vmatpush1.bf16.xpose.msra.mxu0 %v1788
    %3574 = vmatprep.subr.bf16.mxu0 %v1868
    %3575 = vmatpush1.bf16.xpose.msra.mxu0 %v1867
    %3576 = vmatprep.subr.bf16.mxu0 %v1947
    %3577 = vmatpush1.bf16.xpose.msra.mxu0 %v1946
    %3578 = vmatprep.subr.bf16.mxu0 %v2026
    %3579 = vmatpush1.bf16.xpose.msra.mxu0 %v2025
    %3580 = vmatprep.subr.bf16.mxu0 0
    %3581 = vmatpush1.bf16.xpose.msra.mxu0 0
    %3582 = vmatprep.subr.bf16.mxu0 0
    %3583 = vmatpush1.bf16.xpose.msra.mxu0 0
    %3584 = vmatprep.subr.bf16.mxu0 0
    %3585 = vmatpush1.bf16.xpose.msra.mxu0 0
    %3586 = vmatprep.subr.bf16.mxu0 0
    %3587 = vmatpush1.bf16.xpose.msra.mxu0 0
    %3588 = vmatprep.subr.bf16.mxu0 0
    %3589 = vmatpush1.bf16.xpose.msra.mxu0 0
    %3590 = vmatprep.subr.bf16.mxu0 0
    %3591 = vmatpush1.bf16.xpose.msra.mxu0 0
    %3592 = vmatprep.subr.bf16.mxu0 0
    %3593 = vmatpush1.bf16.xpose.msra.mxu0 0
    %3594 = vmatprep.subr.bf16.mxu0 0
    %3595 = vmatpush1.bf16.xpose.msra.mxu0 0
    %3596 = vmatprep.subr.bf16.mxu0 0
    %3597 = vmatpush1.bf16.xpose.msra.mxu0 0
    %3598 = vmatprep.subr.bf16.mxu0 0
    %3599 = vmatpush1.bf16.xpose.msra.mxu0 0
    %3600 = vmatprep.subr.bf16.mxu0 0
    %3601 = vmatpush1.bf16.xpose.msra.mxu0 0
    %3602 = vmatprep.subr.bf16.mxu0 0
    %3603 = vmatpush1.bf16.xpose.msra.mxu0 0
    %3604 = vmatprep.mubr.bf16.mxu0 %v590
    %3605 = vmatmul.mubr.bf16.gmra.mrb[0].mxu0 %v589
    %v3606 = vpop.f32.mrb[0].mxu0
    %v3607 = vadd.f32 %v3567, %v3606
    %v3608 = vpop.f32.mrb[0].mxu0
    %v3609 = vpop.f32.mrb[0].mxu0
    %v3610 = vpop.f32.mrb[0].mxu0
    %3611 = vdwg.mxu0
    %3612 = vmatprep.subr.bf16.mxu0 %v1791
    %3613 = vmatpush1.bf16.xpose.msra.mxu0 %v1790
    %3614 = vmatprep.subr.bf16.mxu0 %v1870
    %3615 = vmatpush1.bf16.xpose.msra.mxu0 %v1869
    %3616 = vmatprep.subr.bf16.mxu0 %v1949
    %3617 = vmatpush1.bf16.xpose.msra.mxu0 %v1948
    %3618 = vmatprep.subr.bf16.mxu0 %v2028
    %3619 = vmatpush1.bf16.xpose.msra.mxu0 %v2027
    %3620 = vmatprep.subr.bf16.mxu0 0
    %3621 = vmatpush1.bf16.xpose.msra.mxu0 0
    %3622 = vmatprep.subr.bf16.mxu0 0
    %3623 = vmatpush1.bf16.xpose.msra.mxu0 0
    %3624 = vmatprep.subr.bf16.mxu0 0
    %3625 = vmatpush1.bf16.xpose.msra.mxu0 0
    %3626 = vmatprep.subr.bf16.mxu0 0
    %3627 = vmatpush1.bf16.xpose.msra.mxu0 0
    %3628 = vmatprep.subr.bf16.mxu0 0
    %3629 = vmatpush1.bf16.xpose.msra.mxu0 0
    %3630 = vmatprep.subr.bf16.mxu0 0
    %3631 = vmatpush1.bf16.xpose.msra.mxu0 0
    %3632 = vmatprep.subr.bf16.mxu0 0
    %3633 = vmatpush1.bf16.xpose.msra.mxu0 0
    %3634 = vmatprep.subr.bf16.mxu0 0
    %3635 = vmatpush1.bf16.xpose.msra.mxu0 0
    %3636 = vmatprep.subr.bf16.mxu0 0
    %3637 = vmatpush1.bf16.xpose.msra.mxu0 0
    %3638 = vmatprep.subr.bf16.mxu0 0
    %3639 = vmatpush1.bf16.xpose.msra.mxu0 0
    %3640 = vmatprep.subr.bf16.mxu0 0
    %3641 = vmatpush1.bf16.xpose.msra.mxu0 0
    %3642 = vmatprep.subr.bf16.mxu0 0
    %3643 = vmatpush1.bf16.xpose.msra.mxu0 0
    %3644 = vmatprep.mubr.bf16.mxu0 %v592
    %3645 = vmatmul.mubr.bf16.gmra.mrb[0].mxu0 %v591
    %v3646 = vpop.f32.mrb[0].mxu0
    %v3647 = vadd.f32 %v3607, %v3646
    %v3648 = vpop.f32.mrb[0].mxu0
    %v3649 = vpop.f32.mrb[0].mxu0
    %v3650 = vpop.f32.mrb[0].mxu0
    %3651 = vdwg.mxu0
    %3652 = vmatprep.subr.bf16.mxu0 %v1793
    %3653 = vmatpush1.bf16.xpose.msra.mxu0 %v1792
    %3654 = vmatprep.subr.bf16.mxu0 %v1872
    %3655 = vmatpush1.bf16.xpose.msra.mxu0 %v1871
    %3656 = vmatprep.subr.bf16.mxu0 %v1951
    %3657 = vmatpush1.bf16.xpose.msra.mxu0 %v1950
    %3658 = vmatprep.subr.bf16.mxu0 %v2030
    %3659 = vmatpush1.bf16.xpose.msra.mxu0 %v2029
    %3660 = vmatprep.subr.bf16.mxu0 0
    %3661 = vmatpush1.bf16.xpose.msra.mxu0 0
    %3662 = vmatprep.subr.bf16.mxu0 0
    %3663 = vmatpush1.bf16.xpose.msra.mxu0 0
    %3664 = vmatprep.subr.bf16.mxu0 0
    %3665 = vmatpush1.bf16.xpose.msra.mxu0 0
    %3666 = vmatprep.subr.bf16.mxu0 0
    %3667 = vmatpush1.bf16.xpose.msra.mxu0 0
    %3668 = vmatprep.subr.bf16.mxu0 0
    %3669 = vmatpush1.bf16.xpose.msra.mxu0 0
    %3670 = vmatprep.subr.bf16.mxu0 0
    %3671 = vmatpush1.bf16.xpose.msra.mxu0 0
    %3672 = vmatprep.subr.bf16.mxu0 0
    %3673 = vmatpush1.bf16.xpose.msra.mxu0 0
    %3674 = vmatprep.subr.bf16.mxu0 0
    %3675 = vmatpush1.bf16.xpose.msra.mxu0 0
    %3676 = vmatprep.subr.bf16.mxu0 0
    %3677 = vmatpush1.bf16.xpose.msra.mxu0 0
    %3678 = vmatprep.subr.bf16.mxu0 0
    %3679 = vmatpush1.bf16.xpose.msra.mxu0 0
    %3680 = vmatprep.subr.bf16.mxu0 0
    %3681 = vmatpush1.bf16.xpose.msra.mxu0 0
    %3682 = vmatprep.subr.bf16.mxu0 0
    %3683 = vmatpush1.bf16.xpose.msra.mxu0 0
    %3684 = vmatprep.mubr.bf16.mxu0 %v594
    %3685 = vmatmul.mubr.bf16.gmra.mrb[0].mxu0 %v593
    %v3686 = vpop.f32.mrb[0].mxu0
    %v3687 = vadd.f32 %v3647, %v3686
    %v3688 = vpop.f32.mrb[0].mxu0
    %v3689 = vpop.f32.mrb[0].mxu0
    %v3690 = vpop.f32.mrb[0].mxu0
    %3691 = vdwg.mxu0
    %3692 = vmatprep.subr.bf16.mxu0 %v1795
    %3693 = vmatpush1.bf16.xpose.msra.mxu0 %v1794
    %3694 = vmatprep.subr.bf16.mxu0 %v1874
    %3695 = vmatpush1.bf16.xpose.msra.mxu0 %v1873
    %3696 = vmatprep.subr.bf16.mxu0 %v1953
    %3697 = vmatpush1.bf16.xpose.msra.mxu0 %v1952
    %3698 = vmatprep.subr.bf16.mxu0 %v2032
    %3699 = vmatpush1.bf16.xpose.msra.mxu0 %v2031
    %3700 = vmatprep.subr.bf16.mxu0 0
    %3701 = vmatpush1.bf16.xpose.msra.mxu0 0
    %3702 = vmatprep.subr.bf16.mxu0 0
    %3703 = vmatpush1.bf16.xpose.msra.mxu0 0
    %3704 = vmatprep.subr.bf16.mxu0 0
    %3705 = vmatpush1.bf16.xpose.msra.mxu0 0
    %3706 = vmatprep.subr.bf16.mxu0 0
    %3707 = vmatpush1.bf16.xpose.msra.mxu0 0
    %3708 = vmatprep.subr.bf16.mxu0 0
    %3709 = vmatpush1.bf16.xpose.msra.mxu0 0
    %3710 = vmatprep.subr.bf16.mxu0 0
    %3711 = vmatpush1.bf16.xpose.msra.mxu0 0
    %3712 = vmatprep.subr.bf16.mxu0 0
    %3713 = vmatpush1.bf16.xpose.msra.mxu0 0
    %3714 = vmatprep.subr.bf16.mxu0 0
    %3715 = vmatpush1.bf16.xpose.msra.mxu0 0
    %3716 = vmatprep.subr.bf16.mxu0 0
    %3717 = vmatpush1.bf16.xpose.msra.mxu0 0
    %3718 = vmatprep.subr.bf16.mxu0 0
    %3719 = vmatpush1.bf16.xpose.msra.mxu0 0
    %3720 = vmatprep.subr.bf16.mxu0 0
    %3721 = vmatpush1.bf16.xpose.msra.mxu0 0
    %3722 = vmatprep.subr.bf16.mxu0 0
    %3723 = vmatpush1.bf16.xpose.msra.mxu0 0
    %3724 = vmatprep.mubr.bf16.mxu0 %v596
    %3725 = vmatmul.mubr.bf16.gmra.mrb[0].mxu0 %v595
    %v3726 = vpop.f32.mrb[0].mxu0
    %v3727 = vadd.f32 %v3687, %v3726
    %v3728 = vpop.f32.mrb[0].mxu0
    %v3729 = vpop.f32.mrb[0].mxu0
    %v3730 = vpop.f32.mrb[0].mxu0
    %3731 = vdwg.mxu0
    %3732 = vmatprep.subr.bf16.mxu0 %v1797
    %3733 = vmatpush1.bf16.xpose.msra.mxu0 %v1796
    %3734 = vmatprep.subr.bf16.mxu0 %v1876
    %3735 = vmatpush1.bf16.xpose.msra.mxu0 %v1875
    %3736 = vmatprep.subr.bf16.mxu0 %v1955
    %3737 = vmatpush1.bf16.xpose.msra.mxu0 %v1954
    %3738 = vmatprep.subr.bf16.mxu0 %v2034
    %3739 = vmatpush1.bf16.xpose.msra.mxu0 %v2033
    %3740 = vmatprep.subr.bf16.mxu0 0
    %3741 = vmatpush1.bf16.xpose.msra.mxu0 0
    %3742 = vmatprep.subr.bf16.mxu0 0
    %3743 = vmatpush1.bf16.xpose.msra.mxu0 0
    %3744 = vmatprep.subr.bf16.mxu0 0
    %3745 = vmatpush1.bf16.xpose.msra.mxu0 0
    %3746 = vmatprep.subr.bf16.mxu0 0
    %3747 = vmatpush1.bf16.xpose.msra.mxu0 0
    %3748 = vmatprep.subr.bf16.mxu0 0
    %3749 = vmatpush1.bf16.xpose.msra.mxu0 0
    %3750 = vmatprep.subr.bf16.mxu0 0
    %3751 = vmatpush1.bf16.xpose.msra.mxu0 0
    %3752 = vmatprep.subr.bf16.mxu0 0
    %3753 = vmatpush1.bf16.xpose.msra.mxu0 0
    %3754 = vmatprep.subr.bf16.mxu0 0
    %3755 = vmatpush1.bf16.xpose.msra.mxu0 0
    %3756 = vmatprep.subr.bf16.mxu0 0
    %3757 = vmatpush1.bf16.xpose.msra.mxu0 0
    %3758 = vmatprep.subr.bf16.mxu0 0
    %3759 = vmatpush1.bf16.xpose.msra.mxu0 0
    %3760 = vmatprep.subr.bf16.mxu0 0
    %3761 = vmatpush1.bf16.xpose.msra.mxu0 0
    %3762 = vmatprep.subr.bf16.mxu0 0
    %3763 = vmatpush1.bf16.xpose.msra.mxu0 0
    %3764 = vmatprep.mubr.bf16.mxu0 %v598
    %3765 = vmatmul.mubr.bf16.gmra.mrb[0].mxu0 %v597
    %v3766 = vpop.f32.mrb[0].mxu0
    %v3767 = vadd.f32 %v3727, %v3766
    %v3768 = vpop.f32.mrb[0].mxu0
    %v3769 = vpop.f32.mrb[0].mxu0
    %v3770 = vpop.f32.mrb[0].mxu0
    %3771 = vdwg.mxu0
    %3772 = vmatprep.subr.bf16.mxu0 %v1799
    %3773 = vmatpush1.bf16.xpose.msra.mxu0 %v1798
    %3774 = vmatprep.subr.bf16.mxu0 %v1878
    %3775 = vmatpush1.bf16.xpose.msra.mxu0 %v1877
    %3776 = vmatprep.subr.bf16.mxu0 %v1957
    %3777 = vmatpush1.bf16.xpose.msra.mxu0 %v1956
    %3778 = vmatprep.subr.bf16.mxu0 %v2036
    %3779 = vmatpush1.bf16.xpose.msra.mxu0 %v2035
    %3780 = vmatprep.subr.bf16.mxu0 0
    %3781 = vmatpush1.bf16.xpose.msra.mxu0 0
    %3782 = vmatprep.subr.bf16.mxu0 0
    %3783 = vmatpush1.bf16.xpose.msra.mxu0 0
    %3784 = vmatprep.subr.bf16.mxu0 0
    %3785 = vmatpush1.bf16.xpose.msra.mxu0 0
    %3786 = vmatprep.subr.bf16.mxu0 0
    %3787 = vmatpush1.bf16.xpose.msra.mxu0 0
    %3788 = vmatprep.subr.bf16.mxu0 0
    %3789 = vmatpush1.bf16.xpose.msra.mxu0 0
    %3790 = vmatprep.subr.bf16.mxu0 0
    %3791 = vmatpush1.bf16.xpose.msra.mxu0 0
    %3792 = vmatprep.subr.bf16.mxu0 0
    %3793 = vmatpush1.bf16.xpose.msra.mxu0 0
    %3794 = vmatprep.subr.bf16.mxu0 0
    %3795 = vmatpush1.bf16.xpose.msra.mxu0 0
    %3796 = vmatprep.subr.bf16.mxu0 0
    %3797 = vmatpush1.bf16.xpose.msra.mxu0 0
    %3798 = vmatprep.subr.bf16.mxu0 0
    %3799 = vmatpush1.bf16.xpose.msra.mxu0 0
    %3800 = vmatprep.subr.bf16.mxu0 0
    %3801 = vmatpush1.bf16.xpose.msra.mxu0 0
    %3802 = vmatprep.subr.bf16.mxu0 0
    %3803 = vmatpush1.bf16.xpose.msra.mxu0 0
    %3804 = vmatprep.mubr.bf16.mxu0 %v600
    %3805 = vmatmul.mubr.bf16.gmra.mrb[0].mxu0 %v599
    %v3806 = vpop.f32.mrb[0].mxu0
    %v3807 = vadd.f32 %v3767, %v3806
    %v3808 = vpop.f32.mrb[0].mxu0
    %v3809 = vpop.f32.mrb[0].mxu0
    %v3810 = vpop.f32.mrb[0].mxu0
    %3811 = vdwg.mxu0
    %3812 = vmatprep.subr.bf16.mxu0 %v1801
    %3813 = vmatpush1.bf16.xpose.msra.mxu0 %v1800
    %3814 = vmatprep.subr.bf16.mxu0 %v1880
    %3815 = vmatpush1.bf16.xpose.msra.mxu0 %v1879
    %3816 = vmatprep.subr.bf16.mxu0 %v1959
    %3817 = vmatpush1.bf16.xpose.msra.mxu0 %v1958
    %3818 = vmatprep.subr.bf16.mxu0 %v2038
    %3819 = vmatpush1.bf16.xpose.msra.mxu0 %v2037
    %3820 = vmatprep.subr.bf16.mxu0 0
    %3821 = vmatpush1.bf16.xpose.msra.mxu0 0
    %3822 = vmatprep.subr.bf16.mxu0 0
    %3823 = vmatpush1.bf16.xpose.msra.mxu0 0
    %3824 = vmatprep.subr.bf16.mxu0 0
    %3825 = vmatpush1.bf16.xpose.msra.mxu0 0
    %3826 = vmatprep.subr.bf16.mxu0 0
    %3827 = vmatpush1.bf16.xpose.msra.mxu0 0
    %3828 = vmatprep.subr.bf16.mxu0 0
    %3829 = vmatpush1.bf16.xpose.msra.mxu0 0
    %3830 = vmatprep.subr.bf16.mxu0 0
    %3831 = vmatpush1.bf16.xpose.msra.mxu0 0
    %3832 = vmatprep.subr.bf16.mxu0 0
    %3833 = vmatpush1.bf16.xpose.msra.mxu0 0
    %3834 = vmatprep.subr.bf16.mxu0 0
    %3835 = vmatpush1.bf16.xpose.msra.mxu0 0
    %3836 = vmatprep.subr.bf16.mxu0 0
    %3837 = vmatpush1.bf16.xpose.msra.mxu0 0
    %3838 = vmatprep.subr.bf16.mxu0 0
    %3839 = vmatpush1.bf16.xpose.msra.mxu0 0
    %3840 = vmatprep.subr.bf16.mxu0 0
    %3841 = vmatpush1.bf16.xpose.msra.mxu0 0
    %3842 = vmatprep.subr.bf16.mxu0 0
    %3843 = vmatpush1.bf16.xpose.msra.mxu0 0
    %3844 = vmatprep.mubr.bf16.mxu0 %v602
    %3845 = vmatmul.mubr.bf16.gmra.mrb[0].mxu0 %v601
    %v3846 = vpop.f32.mrb[0].mxu0
    %v3847 = vadd.f32 %v3807, %v3846
    %v3848 = vpop.f32.mrb[0].mxu0
    %v3849 = vpop.f32.mrb[0].mxu0
    %v3850 = vpop.f32.mrb[0].mxu0
    %3851 = vdwg.mxu0
    %3852 = vmatprep.subr.bf16.mxu0 %v1803
    %3853 = vmatpush1.bf16.xpose.msra.mxu0 %v1802
    %3854 = vmatprep.subr.bf16.mxu0 %v1882
    %3855 = vmatpush1.bf16.xpose.msra.mxu0 %v1881
    %3856 = vmatprep.subr.bf16.mxu0 %v1961
    %3857 = vmatpush1.bf16.xpose.msra.mxu0 %v1960
    %3858 = vmatprep.subr.bf16.mxu0 %v2040
    %3859 = vmatpush1.bf16.xpose.msra.mxu0 %v2039
    %3860 = vmatprep.subr.bf16.mxu0 0
    %3861 = vmatpush1.bf16.xpose.msra.mxu0 0
    %3862 = vmatprep.subr.bf16.mxu0 0
    %3863 = vmatpush1.bf16.xpose.msra.mxu0 0
    %3864 = vmatprep.subr.bf16.mxu0 0
    %3865 = vmatpush1.bf16.xpose.msra.mxu0 0
    %3866 = vmatprep.subr.bf16.mxu0 0
    %3867 = vmatpush1.bf16.xpose.msra.mxu0 0
    %3868 = vmatprep.subr.bf16.mxu0 0
    %3869 = vmatpush1.bf16.xpose.msra.mxu0 0
    %3870 = vmatprep.subr.bf16.mxu0 0
    %3871 = vmatpush1.bf16.xpose.msra.mxu0 0
    %3872 = vmatprep.subr.bf16.mxu0 0
    %3873 = vmatpush1.bf16.xpose.msra.mxu0 0
    %3874 = vmatprep.subr.bf16.mxu0 0
    %3875 = vmatpush1.bf16.xpose.msra.mxu0 0
    %3876 = vmatprep.subr.bf16.mxu0 0
    %3877 = vmatpush1.bf16.xpose.msra.mxu0 0
    %3878 = vmatprep.subr.bf16.mxu0 0
    %3879 = vmatpush1.bf16.xpose.msra.mxu0 0
    %3880 = vmatprep.subr.bf16.mxu0 0
    %3881 = vmatpush1.bf16.xpose.msra.mxu0 0
    %3882 = vmatprep.subr.bf16.mxu0 0
    %3883 = vmatpush1.bf16.xpose.msra.mxu0 0
    %3884 = vmatprep.mubr.bf16.mxu0 %v604
    %3885 = vmatmul.mubr.bf16.gmra.mrb[0].mxu0 %v603
    %v3886 = vpop.f32.mrb[0].mxu0
    %v3887 = vadd.f32 %v3847, %v3886
    %v3888 = vpop.f32.mrb[0].mxu0
    %v3889 = vpop.f32.mrb[0].mxu0
    %v3890 = vpop.f32.mrb[0].mxu0
    %3891 = vdwg.mxu0
    %3892 = vmatprep.subr.bf16.mxu0 %v1805
    %3893 = vmatpush1.bf16.xpose.msra.mxu0 %v1804
    %3894 = vmatprep.subr.bf16.mxu0 %v1884
    %3895 = vmatpush1.bf16.xpose.msra.mxu0 %v1883
    %3896 = vmatprep.subr.bf16.mxu0 %v1963
    %3897 = vmatpush1.bf16.xpose.msra.mxu0 %v1962
    %3898 = vmatprep.subr.bf16.mxu0 %v2042
    %3899 = vmatpush1.bf16.xpose.msra.mxu0 %v2041
    %3900 = vmatprep.subr.bf16.mxu0 0
    %3901 = vmatpush1.bf16.xpose.msra.mxu0 0
    %3902 = vmatprep.subr.bf16.mxu0 0
    %3903 = vmatpush1.bf16.xpose.msra.mxu0 0
    %3904 = vmatprep.subr.bf16.mxu0 0
    %3905 = vmatpush1.bf16.xpose.msra.mxu0 0
    %3906 = vmatprep.subr.bf16.mxu0 0
    %3907 = vmatpush1.bf16.xpose.msra.mxu0 0
    %3908 = vmatprep.subr.bf16.mxu0 0
    %3909 = vmatpush1.bf16.xpose.msra.mxu0 0
    %3910 = vmatprep.subr.bf16.mxu0 0
    %3911 = vmatpush1.bf16.xpose.msra.mxu0 0
    %3912 = vmatprep.subr.bf16.mxu0 0
    %3913 = vmatpush1.bf16.xpose.msra.mxu0 0
    %3914 = vmatprep.subr.bf16.mxu0 0
    %3915 = vmatpush1.bf16.xpose.msra.mxu0 0
    %3916 = vmatprep.subr.bf16.mxu0 0
    %3917 = vmatpush1.bf16.xpose.msra.mxu0 0
    %3918 = vmatprep.subr.bf16.mxu0 0
    %3919 = vmatpush1.bf16.xpose.msra.mxu0 0
    %3920 = vmatprep.subr.bf16.mxu0 0
    %3921 = vmatpush1.bf16.xpose.msra.mxu0 0
    %3922 = vmatprep.subr.bf16.mxu0 0
    %3923 = vmatpush1.bf16.xpose.msra.mxu0 0
    %3924 = vmatprep.mubr.bf16.mxu0 %v606
    %3925 = vmatmul.mubr.bf16.gmra.mrb[0].mxu0 %v605
    %v3926 = vpop.f32.mrb[0].mxu0
    %v3927 = vadd.f32 %v3887, %v3926
    %v3928 = vpop.f32.mrb[0].mxu0
    %v3929 = vpop.f32.mrb[0].mxu0
    %v3930 = vpop.f32.mrb[0].mxu0
    %3931 = vdwg.mxu0
    %3932 = vmatprep.subr.bf16.mxu0 0
    %3933 = vmatpush1.bf16.xpose.msra.mxu0 %v2361
    %3934 = vmatprep.subr.bf16.mxu0 0
    %3935 = vmatpush1.bf16.xpose.msra.mxu0 %v2364
    %3936 = vmatprep.subr.bf16.mxu0 0
    %3937 = vmatpush1.bf16.xpose.msra.mxu0 %v2367
    %3938 = vmatprep.subr.bf16.mxu0 0
    %3939 = vmatpush1.bf16.xpose.msra.mxu0 %v2370
    %3940 = vmatprep.subr.bf16.mxu0 0
    %3941 = vmatpush1.bf16.xpose.msra.mxu0 0
    %3942 = vmatprep.subr.bf16.mxu0 0
    %3943 = vmatpush1.bf16.xpose.msra.mxu0 0
    %3944 = vmatprep.subr.bf16.mxu0 0
    %3945 = vmatpush1.bf16.xpose.msra.mxu0 0
    %3946 = vmatprep.subr.bf16.mxu0 0
    %3947 = vmatpush1.bf16.xpose.msra.mxu0 0
    %3948 = vmatprep.subr.bf16.mxu0 0
    %3949 = vmatpush1.bf16.xpose.msra.mxu0 0
    %3950 = vmatprep.subr.bf16.mxu0 0
    %3951 = vmatpush1.bf16.xpose.msra.mxu0 0
    %3952 = vmatprep.subr.bf16.mxu0 0
    %3953 = vmatpush1.bf16.xpose.msra.mxu0 0
    %3954 = vmatprep.subr.bf16.mxu0 0
    %3955 = vmatpush1.bf16.xpose.msra.mxu0 0
    %3956 = vmatprep.subr.bf16.mxu0 0
    %3957 = vmatpush1.bf16.xpose.msra.mxu0 0
    %3958 = vmatprep.subr.bf16.mxu0 0
    %3959 = vmatpush1.bf16.xpose.msra.mxu0 0
    %3960 = vmatprep.subr.bf16.mxu0 0
    %3961 = vmatpush1.bf16.xpose.msra.mxu0 0
    %3962 = vmatprep.subr.bf16.mxu0 0
    %3963 = vmatpush1.bf16.xpose.msra.mxu0 0
    %3964 = vmatprep.mubr.bf16.mxu0 0
    %3965 = vmatmul.mubr.bf16.gmra.mrb[0].mxu0 %v2358
    %v3966 = vpop.f32.mrb[0].mxu0
    %v3967 = vadd.f32 %v3927, %v3966
    %v3968 = vpop.f32.mrb[0].mxu0
    %v3969 = vpop.f32.mrb[0].mxu0
    %v3970 = vpop.f32.mrb[0].mxu0
    %3971 = vdwg.mxu0
    %v3972 = vmax.f32 %v3967, 0.0
    %v3973 = vld [vmem:[%s3] sm:$0xff]
    %v3974 = vld [vmem:[%s3 + $0x8] sm:$0xff]
    %v3975 = vld [vmem:[%s3 + $0x10] sm:$0xff]
    %v3976 = vld [vmem:[%s3 + $0x18] sm:$0xff]
    %v3977 = vld [vmem:[%s3 + $0x20] sm:$0xff]
    %v3978 = vld [vmem:[%s3 + $0x28] sm:$0xff]
    %v3979 = vld [vmem:[%s3 + $0x30] sm:$0x3]
    %v3980 = vld [vmem:[#allocation8] sm:$0x1]
    %v3982 = vlaneseq
    %v3983 = vshrl.u32 %v3982, 7
    %v3984 = vsub.s32 0, %v3983
    %v3985 = vrot.slane %v3980, %v3984
    %vm3987 = vcmask 408576
    %v3989 = vsel %vm3987, %v3972, 0
    %vm3991 = vcmask 1041408
    %v3993 = vsel %vm3991, %v3979, 0
    %3995 = vmatprep.subr.mxu0 0.0
    %3996 = vmatpush1.msra.mxu0 %v3973
    %3997 = vmatprep.subr.mxu0 0.0
    %3998 = vmatpush1.msra.mxu0 %v3974
    %3999 = vmatprep.subr.mxu0 0.0
    %4000 = vmatpush1.msra.mxu0 %v3975
    %4001 = vmatprep.subr.mxu0 0.0
    %4002 = vmatpush1.msra.mxu0 %v3976
    %4003 = vmatprep.subr.mxu0 0.0
    %4004 = vmatpush1.msra.mxu0 %v3977
    %4005 = vmatprep.subr.mxu0 0.0
    %4006 = vmatpush1.msra.mxu0 %v3978
    %4007 = vmatprep.subr.mxu0 0.0
    %4008 = vmatpush1.msra.mxu0 %v3993
    %4009 = vmatprep.subr.mxu0 0.0
    %4010 = vmatpush1.msra.mxu0 0.0
    %4011 = vmatprep.subr.mxu0 0.0
    %4012 = vmatpush1.msra.mxu0 0.0
    %4013 = vmatprep.subr.mxu0 0.0
    %4014 = vmatpush1.msra.mxu0 0.0
    %4015 = vmatprep.subr.mxu0 0.0
    %4016 = vmatpush1.msra.mxu0 0.0
    %4017 = vmatprep.subr.mxu0 0.0
    %4018 = vmatpush1.msra.mxu0 0.0
    %4019 = vmatprep.subr.mxu0 0.0
    %4020 = vmatpush1.msra.mxu0 0.0
    %4021 = vmatprep.subr.mxu0 0.0
    %4022 = vmatpush1.msra.mxu0 0.0
    %4023 = vmatprep.subr.mxu0 0.0
    %4024 = vmatpush1.msra.mxu0 0.0
    %4025 = vmatprep.subr.mxu0 0.0
    %4026 = vmatpush1.msra.mxu0 0.0
    %4027 = vmatprep.subr.mxu0 0.0
    %4028 = vmatpush1.msra.mxu0 0.0
    %4029 = vmatprep.subr.mxu0 0.0
    %4030 = vmatpush1.msra.mxu0 0.0
    %4031 = vmatprep.subr.mxu0 0.0
    %4032 = vmatpush1.msra.mxu0 0.0
    %4033 = vmatprep.subr.mxu0 0.0
    %4034 = vmatpush1.msra.mxu0 0.0
    %4035 = vmatprep.subr.mxu0 0.0
    %4036 = vmatpush1.msra.mxu0 0.0
    %4037 = vmatprep.subr.mxu0 0.0
    %4038 = vmatpush1.msra.mxu0 0.0
    %4039 = vmatprep.subr.mxu0 0.0
    %4040 = vmatpush1.msra.mxu0 0.0
    %4041 = vmatprep.subr.mxu0 0.0
    %4042 = vmatpush1.msra.mxu0 0.0
    %4043 = vmatprep.subr.mxu0 0.0
    %4044 = vmatpush1.msra.mxu0 0.0
    %4045 = vmatprep.subr.mxu0 0.0
    %4046 = vmatpush1.msra.mxu0 0.0
    %4047 = vmatprep.subr.mxu0 0.0
    %4048 = vmatpush1.msra.mxu0 0.0
    %4049 = vmatprep.subr.mxu0 0.0
    %4050 = vmatpush1.msra.mxu0 0.0
    %4051 = vmatprep.subr.mxu0 0.0
    %4052 = vmatpush1.msra.mxu0 0.0
    %4053 = vmatprep.subr.mxu0 0.0
    %4054 = vmatpush1.msra.mxu0 0.0
    %4055 = vmatprep.subr.mxu0 0.0
    %4056 = vmatpush1.msra.mxu0 0.0
    %4057 = vmatprep.subr.mxu0 0.0
    %4058 = vmatpush1.msra.mxu0 0.0
    %4059 = vmatprep.mubr.f32.mxu0 0.0
    %4060 = vmatmul.mubr.f32.gmra.mrb[0].mxu0 %v3989
    %v4061 = vpop.f32.mrb[0].mxu0
    %v4062 = vadd.f32 %v3985, %v4061
    %v4063 = vpop.f32.mrb[0].mxu0
    %4064 = vdwg.mxu0
    %vm4065 = vcmask 33792
    %4066 = vst.msk [vmem:[#allocation10] sm:$0x3] %vm4065, %v4062
    // Predicated region
    $region38: #{tpu_custom_call.1} parent=1 // pred_check
      _
    $region39: #{tpu_custom_call.1} parent=1 // pred_check_branch
      %4068 = sbr.rel (0) target = $region41
    $region40: #{tpu_custom_call.1} parent=1 // pred_region
      %s4070 = ssub.s32 32, 32
      %4071 = vsyncadd [#allocation4], %s4070
      %s4073 = sshll.u32 [#allocation10], 4
      %s4074 = int_to_ptr.vmem [resolvable:$true] %s4073
      %4076 = dma.vmem_to_hbm [thread:$0]  %s4074, 32, %s5, [#allocation4]
    $region41: #{tpu_custom_call.1} parent=1 // pred_fallthru
      _
    // Predicated region
    $region42: #{tpu_custom_call.1} parent=1 // pred_check
      _
    $region43: #{tpu_custom_call.1} parent=1 // pred_check_branch
      %4078 = sbr.rel (0) target = $region45
    $region44: #{tpu_custom_call.1} parent=1 // pred_region
      %4079 = dma.done [#allocation4], 32
    $region45: #{tpu_custom_call.1} parent=1 // pred_fallthru
      _
    %4080 = vsyncpa [#allocation3], 1
    %4081 = vsyncpa [#allocation6], 1
    %4082 = vsyncpa [#allocation9], 1
    %4083 = vsyncpa [#allocation4], 1

</llo_original>
